<compile_context>
chip_gen: v7x
topology: tpu7x:2x2x1
jax: 0.10.0
libtpu: 0.0.40
codegen_flags: <defaults>
</compile_context>

<pallas_src>
import functools

import jax
import jax.numpy as jnp
from jax.experimental import pallas as pl
from jax.experimental.pallas import tpu as pltpu

# Above the 16 MiB (v5e) / 32 MiB (v6e, v7x) scoped defaults, below v7x's
# 64 MiB physical VMEM.
_VMEM_LIMIT_BYTES = 48 * 1024 * 1024


def _round_up(x, m):
    return (x + m - 1) // m * m


def _pad_last(a, target):
    pad = target - a.shape[-1]
    if pad == 0:
        return a
    widths = [(0, 0)] * (a.ndim - 1) + [(0, pad)]
    return jnp.pad(a, widths)


# ----------------------------------------------------------------------------
# Kernel
# ----------------------------------------------------------------------------
def _conv3x3(x_ref, w_ref, stride, hq, hout, wk):
    """3x3 conv as per-dy MXU matmuls with f32 accumulation.

    `x_ref` holds the spatially padded input; for strided convs it is parity-
    decomposed along axis 1 (stride*stride sub-images of `hq` rows each) so
    every tap is a static unit-stride slice.  When the tap channel count is
    128-aligned the three dx taps are concatenated along channels and fed as
    one matmul with K = 3*Cin (3 MXU pushes instead of 9).
    """
    b = x_ref.shape[0]
    ctap = x_ref.shape[-1]
    m = b * hout * wk
    fuse = (ctap % 128) == 0
    acc = None
    for dy in range(3):
        wdy = w_ref[dy]                                    # (3*ctap, cout_p)
        taps = []
        for dx in range(3):
            p = (dy % stride) * stride + (dx % stride)     # parity sub-image
            r0 = p * hq + dy // stride
            c0 = dx // stride
            taps.append(x_ref[:, r0:r0 + hout, c0:c0 + wk, :])
        if fuse:
            xcat = jnp.concatenate(taps, axis=-1).reshape(m, 3 * ctap)
            r = jnp.dot(xcat, wdy, preferred_element_type=jnp.float32)
            acc = r if acc is None else acc + r
        else:
            # TODO(synk): fuse sub-128-channel taps too (needs lane-offset
            # concat); 9 small-K matmuls only occur for conv1 of stage 1.
            for dx in range(3):
                r = jnp.dot(taps[dx].reshape(m, ctap),
                            wdy[dx * ctap:(dx + 1) * ctap, :],
                            preferred_element_type=jnp.float32)
                acc = r if acc is None else acc + r
    return acc


def _fused_block_kernel(xq_ref, w1_ref, s1_ref, b1_ref, w2_ref, s2_ref,
                        b2_ref, wsc_ref, ssc_ref, bsc_ref, out_ref, mid_ref,
                        *, stride, wout):
    b, hout, wk, cout_p = out_ref.shape
    cin = xq_ref.shape[-1]
    cmid_p = w1_ref.shape[-1]
    m = b * hout * wk
    hq = hout + 2 // stride          # rows per parity sub-image (= floor(2/s))

    # --- conv1 (3x3, stride) + bn1 + relu ------------------------------------
    acc1 = _conv3x3(xq_ref, w1_ref, stride, hq, hout, wk)
    mid = jnp.maximum(acc1 * s1_ref[...] + b1_ref[...], 0.0)
    mid = mid.astype(mid_ref.dtype).reshape(b, hout, wk, cmid_p)

    # --- stage mid in VMEM with a zero halo ----------------------------------
    # Single lane/sublane-aligned full-tile store (halo rows/cols are part of
    # the stored value); `mid` never goes back to HBM.
    wscr = mid_ref.shape[2]
    zrow = jnp.zeros((b, 1, wscr, cmid_p), mid_ref.dtype)
    zc_l = jnp.zeros((b, hout, 1, cmid_p), mid_ref.dtype)
    zc_r = jnp.zeros((b, hout, wscr - 1 - wout, cmid_p), mid_ref.dtype)
    interior = jnp.concatenate([zc_l, mid[:, :, :wout, :], zc_r], axis=2)
    mid_ref[...] = jnp.concatenate([zrow, interior, zrow], axis=1)

    # --- conv2 (3x3, stride 1) + bn2 -----------------------------------------
    acc2 = _conv3x3(mid_ref, w2_ref, 1, hout + 2, hout, wk)
    out = acc2 * s2_ref[...] + b2_ref[...]

    # --- shortcut: 1x1 conv on the centre tap of the resident conv1 input ----
    # (projection: real 1x1 conv weights; identity: [I | 0] embedding, so no
    #  extra HBM input stream is needed in either case)
    pc = (1 % stride) * stride + (1 % stride)
    r0 = pc * hq + 1 // stride
    c0 = 1 // stride
    scx = xq_ref[:, r0:r0 + hout, c0:c0 + wk, :].reshape(m, cin)
    sc = jnp.dot(scx, wsc_ref[...], preferred_element_type=jnp.float32)
    sc = sc * ssc_ref[...] + bsc_ref[...]

    out_ref[...] = jnp.maximum(out + sc, 0.0).reshape(
        b, hout, wk, cout_p).astype(out_ref.dtype)


# ----------------------------------------------------------------------------
# pallas_call wrapper (grid over batch blocks)
# ----------------------------------------------------------------------------
def _const_index_map(nd):
    def index_map(n):
        return (0,) * nd
    return index_map


def _fused_block_call(xq, w1k, s1k, b1k, w2k, s2k, b2k, wsck, ssck, bsck, *,
                      stride, hout, wout, wk, block_n, out_dtype):
    N = xq.shape[0]
    cmid_p = w1k.shape[-1]
    cout_p = w2k.shape[-1]

    def img_spec(shape):
        return pl.BlockSpec((block_n,) + tuple(shape[1:]),
                            lambda n: (n, 0, 0, 0))

    def const_spec(shape):
        return pl.BlockSpec(tuple(shape), _const_index_map(len(shape)))

    kernel = functools.partial(_fused_block_kernel, stride=stride, wout=wout)

    return pl.pallas_call(
        kernel,
        out_shape=jax.ShapeDtypeStruct((N, hout, wk, cout_p), out_dtype),
        grid=(N // block_n,),
        in_specs=[img_spec(xq.shape),
                  const_spec(w1k.shape), const_spec(s1k.shape),
                  const_spec(b1k.shape), const_spec(w2k.shape),
                  const_spec(s2k.shape), const_spec(b2k.shape),
                  const_spec(wsck.shape), const_spec(ssck.shape),
                  const_spec(bsck.shape)],
        out_specs=pl.BlockSpec((block_n, hout, wk, cout_p),
                               lambda n: (n, 0, 0, 0)),
        scratch_shapes=[pltpu.VMEM((block_n, hout + 2, wk + 8, cmid_p),
                                   jnp.bfloat16)],
        compiler_params=pltpu.CompilerParams(
            dimension_semantics=("parallel",),
            vmem_limit_bytes=_VMEM_LIMIT_BYTES),
    )(xq, w1k, s1k, b1k, w2k, s2k, b2k, wsck, ssck, bsck)


# ----------------------------------------------------------------------------
# JAX glue: layout plumbing + parameter setup
# ----------------------------------------------------------------------------
def _parity_decompose(xp, stride, hq, wq):
    """Split the spatially padded NHWC image into stride x stride parity
    sub-images (each cropped / zero-padded to (hq, wq)) stacked along H, so
    strided 3x3 taps become unit-stride slices inside the kernel."""
    parts = []
    for py in range(stride):
        for px in range(stride):
            sub = xp[:, py::stride, px::stride, :][:, :hq, :wq, :]
            ph, pw = hq - sub.shape[1], wq - sub.shape[2]
            if ph or pw:
                sub = jnp.pad(sub, ((0, 0), (0, ph), (0, pw), (0, 0)))
            parts.append(sub)
    return jnp.concatenate(parts, axis=1)          # (N, s*s*hq, wq, C)


def _choose_block_n(N, hw, per_image_bytes, *, target_rows=512,
                    vmem_budget=20 * 1024 * 1024):
    """Images per grid step: grow until the matmul M dim reaches ~2x the MXU
    height, keep >= 2 grid steps when N >= 2 (v7x has two TensorCores) and
    stay within a per-step VMEM budget."""
    best = 1
    if hw >= target_rows:
        return best
    for bn in range(2, N + 1):
        if N % bn:
            continue
        if N >= 2 and N // bn < 2:
            break
        if bn * per_image_bytes > vmem_budget:
            break
        best = bn
        if bn * hw >= target_rows:
            break
    return best


def _fold_bn(gamma, beta, mean, var, eps=1e-5):
    scale = gamma / jnp.sqrt(var + eps)
    shift = beta - mean * scale
    return scale, shift


def init_params(key, in_planes, planes, stride):
    expansion = 1
    out_planes = expansion * planes
    has_projection = (stride != 1) or (in_planes != out_planes)
    ks = jax.random.split(key, 15)

    def conv_w(k, o, i, kh, kw):
        return jax.random.normal(k, (o, i, kh, kw), jnp.float32) * 0.1

    def bn_p(k0, k1, k2, k3, c):
        gamma = jax.random.uniform(k0, (c,), jnp.float32, 0.5, 1.5)
        beta = jax.random.normal(k1, (c,), jnp.float32) * 0.1
        mean = jax.random.normal(k2, (c,), jnp.float32) * 0.1
        var = jax.random.uniform(k3, (c,), jnp.float32, 0.5, 1.5)
        return gamma, beta, mean, var

    w1 = conv_w(ks[0], planes, in_planes, 3, 3)                     # OIHW
    w2 = conv_w(ks[1], planes, planes, 3, 3)                        # OIHW
    s1, b1 = _fold_bn(*bn_p(ks[2], ks[3], ks[4], ks[5], planes))
    s2, b2 = _fold_bn(*bn_p(ks[6], ks[7], ks[8], ks[9], planes))

    cmid_p = _round_up(planes, 128)
    cout_p = _round_up(out_planes, 128)

    # conv1 weights: (3, 3*Cin, Cmid_p) bf16, K-block order dx = 0,1,2.
    w1k = _pad_last(
        jnp.transpose(w1, (2, 3, 1, 0)).reshape(3, 3 * in_planes, planes),
        cmid_p).astype(jnp.bfloat16)
    # conv2 weights: (3, 3*Cmid_p, Cout_p) bf16 — per-tap input channels are
    # padded to Cmid_p so they line up with the lane-padded mid activation.
    w2t = jnp.pad(jnp.transpose(w2, (2, 3, 1, 0)),
                  ((0, 0), (0, 0), (0, cmid_p - planes), (0, 0)))
    w2k = _pad_last(w2t.reshape(3, 3 * cmid_p, planes),
                    cout_p).astype(jnp.bfloat16)

    p = {
        "has_projection": has_projection, "out_planes": out_planes,
        "cmid_p": cmid_p, "cout_p": cout_p,
        # raw params (for the pure-JAX reference)
        "w1": w1, "w2": w2, "s1": s1, "b1": b1, "s2": s2, "b2": b2,
        # kernel layouts
        "w1k": w1k, "w2k": w2k,
        "s1k": _pad_last(s1[None, :], cmid_p),
        "b1k": _pad_last(b1[None, :], cmid_p),
        "s2k": _pad_last(s2[None, :], cout_p),
        "b2k": _pad_last(b2[None, :], cout_p),
    }
    if has_projection:
        wsc = conv_w(ks[10], out_planes, in_planes, 1, 1)           # OIHW
        ssc, bsc = _fold_bn(*bn_p(ks[11], ks[12], ks[13], ks[14], out_planes))
        p.update({
            "wsc": wsc, "ssc": ssc, "bsc": bsc,
            "wsck": _pad_last(wsc[:, :, 0, 0].T, cout_p).astype(jnp.bfloat16),
            "ssck": _pad_last(ssc[None, :], cout_p),
            "bsck": _pad_last(bsc[None, :], cout_p),
        })
    else:
        # Identity shortcut expressed as a 1x1 conv with an [I | 0] embedding
        # weight: single kernel code path, no extra HBM activation stream.
        p.update({
            "wsck": _pad_last(jnp.eye(in_planes, dtype=jnp.float32),
                              cout_p).astype(jnp.bfloat16),
            "ssck": jnp.ones((1, cout_p), jnp.float32),
            "bsck": jnp.zeros((1, cout_p), jnp.float32),
        })
    return p


def basic_block_forward(x_nchw, p, stride, out_dtype=jnp.bfloat16):
    """Fused Pallas forward.  Input in PyTorch NCHW f32, output NCHW bf16."""
    assert stride in (1, 2), "BasicBlock only uses stride 1 or 2"
    x = jnp.transpose(x_nchw, (0, 2, 3, 1)).astype(jnp.float32)     # NHWC
    N, H, W, _ = x.shape
    hout = (H - 1) // stride + 1
    wout = (W - 1) // stride + 1
    wk = _round_up(wout, 8)              # sublane-aligned kernel width
    hq = hout + 2 // stride              # = hout + floor((3-1)/stride)
    wq = wk + 2 // stride
    out_planes = p["out_planes"]

    xp = jnp.pad(x, ((0, 0), (1, 1), (1, 1), (0, 0)))
    xq = _parity_decompose(xp, stride, hq, wq).astype(jnp.bfloat16)

    osize = jnp.dtype(out_dtype).itemsize
    per_img = (2 * (xq.shape[1] * xq.shape[2] * xq.shape[3] * 2
                    + hout * wk * p["cout_p"] * osize)
               + (hout + 2) * (wk + 8) * p["cmid_p"] * 2)
    block_n = _choose_block_n(N, hout * wk, per_img)

    out = _fused_block_call(
        xq, p["w1k"], p["s1k"], p["b1k"], p["w2k"], p["s2k"], p["b2k"],
        p["wsck"], p["ssck"], p["bsck"],
        stride=stride, hout=hout, wout=wout, wk=wk, block_n=block_n,
        out_dtype=out_dtype)

    out = out[:, :, :wout, :out_planes]            # drop W / lane padding
    return jnp.transpose(out, (0, 3, 1, 2))        # back to NCHW


# ----------------------------------------------------------------------------
# Pure-JAX reference (verification only)
# ----------------------------------------------------------------------------
def ref_forward(x, p, stride):
    hp = jax.lax.Precision.HIGHEST

    def conv(x, w, s, pad):
        return jax.lax.conv_general_dilated(
            x, w, (s, s), ((pad, pad), (pad, pad)),
            dimension_numbers=("NCHW", "OIHW", "NCHW"), precision=hp)

    def affine(x, scale, shift):
        return x * scale.reshape(1, -1, 1, 1) + shift.reshape(1, -1, 1, 1)

    out = jax.nn.relu(affine(conv(x, p["w1"], stride, 1), p["s1"], p["b1"]))
    out = affine(conv(out, p["w2"], 1, 1), p["s2"], p["b2"])
    if p["has_projection"]:
        sc = affine(conv(x, p["wsc"], stride, 0), p["ssc"], p["bsc"])
    else:
        sc = x
    return jax.nn.relu(out + sc)


# ----------------------------------------------------------------------------
if __name__ == "__main__":
    key = jax.random.PRNGKey(0)
    kx1, kx2, kx3, kp1, kp2, kp3 = jax.random.split(key, 6)

    def check(x, params, stride, expect_shape):
        y = jax.block_until_ready(basic_block_forward(x, params, stride))
        r = ref_forward(x, params, stride)
        assert y.shape == expect_shape, (y.shape, expect_shape)
        err = float(jnp.max(jnp.abs(y.astype(jnp.float32) - r)))
        # bf16 activations / weights / mid / output: intentional precision trade
        assert jnp.allclose(y.astype(jnp.float32), r, atol=1e-1, rtol=5e-2), err

    # 1) projection shortcut, stride 2 (batch-blocked grid: block_n = 2)
    x1 = jax.random.normal(kx1, (4, 4, 16, 16), jnp.float32)
    p1 = init_params(kp1, in_planes=4, planes=8, stride=2)
    check(x1, p1, 2, (4, 8, 8, 8))

    # 2) identity shortcut, stride 1, width not a multiple of 8 (wk > wout)
    x2 = jax.random.normal(kx2, (2, 8, 14, 14), jnp.float32)
    p2 = init_params(kp2, in_planes=8, planes=8, stride=1)
    check(x2, p2, 1, (2, 8, 14, 14))

    # 3) projection shortcut, stride 2, odd spatial size
    x3 = jax.random.normal(kx3, (2, 4, 13, 13), jnp.float32)
    p3 = init_params(kp3, in_planes=4, planes=8, stride=2)
    check(x3, p3, 2, (2, 8, 7, 7))

    print("KERNEL_OK")
</pallas_src>

<mosaic_0001>
module attributes {stable_mosaic.version = 11 : i64} {
  func.func @_fused_block_kernel(%arg0: i32, %arg1: memref<2x36x9x4xbf16, #tpu.memory_space<vmem>>, %arg2: memref<3x12x128xbf16, #tpu.memory_space<vmem>>, %arg3: memref<1x128xf32, #tpu.memory_space<vmem>>, %arg4: memref<1x128xf32, #tpu.memory_space<vmem>>, %arg5: memref<3x384x128xbf16, #tpu.memory_space<vmem>>, %arg6: memref<1x128xf32, #tpu.memory_space<vmem>>, %arg7: memref<1x128xf32, #tpu.memory_space<vmem>>, %arg8: memref<4x128xbf16, #tpu.memory_space<vmem>>, %arg9: memref<1x128xf32, #tpu.memory_space<vmem>>, %arg10: memref<1x128xf32, #tpu.memory_space<vmem>>, %arg11: memref<2x8x8x128xbf16, #tpu.memory_space<vmem>>, %arg12: memref<2x10x16x128xbf16, #tpu.memory_space<vmem>>) attributes {dimension_semantics = [#tpu.dimension_semantics<parallel>], iteration_bounds = array<i64: 2>, scalar_prefetch = 0 : i64, scratch_operands = 1 : i64, tpu.core_type = #tpu.core_type<tc>, window_params = [{transform_indices = @transform_0, window_bounds = array<i64: 2, 36, 9, 4>}, {pipeline_mode = #tpu.pipeline_mode<synchronous>, transform_indices = @transform_1, window_bounds = array<i64: 3, 12, 128>}, {pipeline_mode = #tpu.pipeline_mode<synchronous>, transform_indices = @transform_2, window_bounds = array<i64: 1, 128>}, {pipeline_mode = #tpu.pipeline_mode<synchronous>, transform_indices = @transform_3, window_bounds = array<i64: 1, 128>}, {pipeline_mode = #tpu.pipeline_mode<synchronous>, transform_indices = @transform_4, window_bounds = array<i64: 3, 384, 128>}, {pipeline_mode = #tpu.pipeline_mode<synchronous>, transform_indices = @transform_5, window_bounds = array<i64: 1, 128>}, {pipeline_mode = #tpu.pipeline_mode<synchronous>, transform_indices = @transform_6, window_bounds = array<i64: 1, 128>}, {pipeline_mode = #tpu.pipeline_mode<synchronous>, transform_indices = @transform_7, window_bounds = array<i64: 4, 128>}, {pipeline_mode = #tpu.pipeline_mode<synchronous>, transform_indices = @transform_8, window_bounds = array<i64: 1, 128>}, {pipeline_mode = #tpu.pipeline_mode<synchronous>, transform_indices = @transform_9, window_bounds = array<i64: 1, 128>}, {transform_indices = @transform_10, window_bounds = array<i64: 2, 8, 8, 128>}]} {
    %c0 = arith.constant 0 : index
    %c0_0 = arith.constant 0 : index
    %c0_1 = arith.constant 0 : index
    %0 = vector.load %arg2[%c0, %c0_0, %c0_1] : memref<3x12x128xbf16, #tpu.memory_space<vmem>>, vector<1x12x128xbf16>
    %1 = vector.shape_cast %0 : vector<1x12x128xbf16> to vector<12x128xbf16>
    %c0_2 = arith.constant 0 : index
    %c0_3 = arith.constant 0 : index
    %c0_4 = arith.constant 0 : index
    %c0_5 = arith.constant 0 : index
    %2 = vector.load %arg1[%c0_2, %c0_3, %c0_4, %c0_5] : memref<2x36x9x4xbf16, #tpu.memory_space<vmem>>, vector<2x8x8x4xbf16>
    %c0_6 = arith.constant 0 : index
    %c9 = arith.constant 9 : index
    %c0_7 = arith.constant 0 : index
    %c0_8 = arith.constant 0 : index
    %3 = vector.load %arg1[%c0_6, %c9, %c0_7, %c0_8] : memref<2x36x9x4xbf16, #tpu.memory_space<vmem>>, vector<2x8x8x4xbf16>
    %c0_9 = arith.constant 0 : index
    %c0_10 = arith.constant 0 : index
    %c1 = arith.constant 1 : index
    %c0_11 = arith.constant 0 : index
    %4 = vector.load %arg1[%c0_9, %c0_10, %c1, %c0_11] : memref<2x36x9x4xbf16, #tpu.memory_space<vmem>>, vector<2x8x8x4xbf16>
    %5 = vector.shape_cast %2 : vector<2x8x8x4xbf16> to vector<128x4xbf16>
    %6 = vector.extract_strided_slice %1 {offsets = [0, 0], sizes = [4, 128], strides = [1, 1]} : vector<12x128xbf16> to vector<4x128xbf16>
    %cst = arith.constant dense<0.000000e+00> : vector<128x128xf32>
    %7 = tpu.matmul %5, %6, %cst {dimension_numbers = #tpu.dot_dimension_numbers<[1], [0], [0], [1], [0, 0, 1, 1], [], []>} : vector<128x4xbf16>, vector<4x128xbf16>, vector<128x128xf32> -> vector<128x128xf32>
    %8 = vector.shape_cast %3 : vector<2x8x8x4xbf16> to vector<128x4xbf16>
    %9 = vector.extract_strided_slice %1 {offsets = [4, 0], sizes = [4, 128], strides = [1, 1]} : vector<12x128xbf16> to vector<4x128xbf16>
    %cst_12 = arith.constant dense<0.000000e+00> : vector<128x128xf32>
    %10 = tpu.matmul %8, %9, %cst_12 {dimension_numbers = #tpu.dot_dimension_numbers<[1], [0], [0], [1], [0, 0, 1, 1], [], []>} : vector<128x4xbf16>, vector<4x128xbf16>, vector<128x128xf32> -> vector<128x128xf32>
    %11 = arith.addf %7, %10 : vector<128x128xf32>
    %12 = vector.shape_cast %4 : vector<2x8x8x4xbf16> to vector<128x4xbf16>
    %13 = vector.extract_strided_slice %1 {offsets = [8, 0], sizes = [4, 128], strides = [1, 1]} : vector<12x128xbf16> to vector<4x128xbf16>
    %cst_13 = arith.constant dense<0.000000e+00> : vector<128x128xf32>
    %14 = tpu.matmul %12, %13, %cst_13 {dimension_numbers = #tpu.dot_dimension_numbers<[1], [0], [0], [1], [0, 0, 1, 1], [], []>} : vector<128x4xbf16>, vector<4x128xbf16>, vector<128x128xf32> -> vector<128x128xf32>
    %15 = arith.addf %11, %14 : vector<128x128xf32>
    %c1_14 = arith.constant 1 : index
    %c0_15 = arith.constant 0 : index
    %c0_16 = arith.constant 0 : index
    %16 = vector.load %arg2[%c1_14, %c0_15, %c0_16] : memref<3x12x128xbf16, #tpu.memory_space<vmem>>, vector<1x12x128xbf16>
    %17 = vector.shape_cast %16 : vector<1x12x128xbf16> to vector<12x128xbf16>
    %c0_17 = arith.constant 0 : index
    %c18 = arith.constant 18 : index
    %c0_18 = arith.constant 0 : index
    %c0_19 = arith.constant 0 : index
    %18 = vector.load %arg1[%c0_17, %c18, %c0_18, %c0_19] : memref<2x36x9x4xbf16, #tpu.memory_space<vmem>>, vector<2x8x8x4xbf16>
    %c0_20 = arith.constant 0 : index
    %c27 = arith.constant 27 : index
    %c0_21 = arith.constant 0 : index
    %c0_22 = arith.constant 0 : index
    %19 = vector.load %arg1[%c0_20, %c27, %c0_21, %c0_22] : memref<2x36x9x4xbf16, #tpu.memory_space<vmem>>, vector<2x8x8x4xbf16>
    %c0_23 = arith.constant 0 : index
    %c18_24 = arith.constant 18 : index
    %c1_25 = arith.constant 1 : index
    %c0_26 = arith.constant 0 : index
    %20 = vector.load %arg1[%c0_23, %c18_24, %c1_25, %c0_26] : memref<2x36x9x4xbf16, #tpu.memory_space<vmem>>, vector<2x8x8x4xbf16>
    %21 = vector.shape_cast %18 : vector<2x8x8x4xbf16> to vector<128x4xbf16>
    %22 = vector.extract_strided_slice %17 {offsets = [0, 0], sizes = [4, 128], strides = [1, 1]} : vector<12x128xbf16> to vector<4x128xbf16>
    %cst_27 = arith.constant dense<0.000000e+00> : vector<128x128xf32>
    %23 = tpu.matmul %21, %22, %cst_27 {dimension_numbers = #tpu.dot_dimension_numbers<[1], [0], [0], [1], [0, 0, 1, 1], [], []>} : vector<128x4xbf16>, vector<4x128xbf16>, vector<128x128xf32> -> vector<128x128xf32>
    %24 = arith.addf %15, %23 : vector<128x128xf32>
    %25 = vector.shape_cast %19 : vector<2x8x8x4xbf16> to vector<128x4xbf16>
    %26 = vector.extract_strided_slice %17 {offsets = [4, 0], sizes = [4, 128], strides = [1, 1]} : vector<12x128xbf16> to vector<4x128xbf16>
    %cst_28 = arith.constant dense<0.000000e+00> : vector<128x128xf32>
    %27 = tpu.matmul %25, %26, %cst_28 {dimension_numbers = #tpu.dot_dimension_numbers<[1], [0], [0], [1], [0, 0, 1, 1], [], []>} : vector<128x4xbf16>, vector<4x128xbf16>, vector<128x128xf32> -> vector<128x128xf32>
    %28 = arith.addf %24, %27 : vector<128x128xf32>
    %29 = vector.shape_cast %20 : vector<2x8x8x4xbf16> to vector<128x4xbf16>
    %30 = vector.extract_strided_slice %17 {offsets = [8, 0], sizes = [4, 128], strides = [1, 1]} : vector<12x128xbf16> to vector<4x128xbf16>
    %cst_29 = arith.constant dense<0.000000e+00> : vector<128x128xf32>
    %31 = tpu.matmul %29, %30, %cst_29 {dimension_numbers = #tpu.dot_dimension_numbers<[1], [0], [0], [1], [0, 0, 1, 1], [], []>} : vector<128x4xbf16>, vector<4x128xbf16>, vector<128x128xf32> -> vector<128x128xf32>
    %32 = arith.addf %28, %31 : vector<128x128xf32>
    %c2 = arith.constant 2 : index
    %c0_30 = arith.constant 0 : index
    %c0_31 = arith.constant 0 : index
    %33 = vector.load %arg2[%c2, %c0_30, %c0_31] : memref<3x12x128xbf16, #tpu.memory_space<vmem>>, vector<1x12x128xbf16>
    %34 = vector.shape_cast %33 : vector<1x12x128xbf16> to vector<12x128xbf16>
    %c0_32 = arith.constant 0 : index
    %c1_33 = arith.constant 1 : index
    %c0_34 = arith.constant 0 : index
    %c0_35 = arith.constant 0 : index
    %35 = vector.load %arg1[%c0_32, %c1_33, %c0_34, %c0_35] : memref<2x36x9x4xbf16, #tpu.memory_space<vmem>>, vector<2x8x8x4xbf16>
    %c0_36 = arith.constant 0 : index
    %c10 = arith.constant 10 : index
    %c0_37 = arith.constant 0 : index
    %c0_38 = arith.constant 0 : index
    %36 = vector.load %arg1[%c0_36, %c10, %c0_37, %c0_38] : memref<2x36x9x4xbf16, #tpu.memory_space<vmem>>, vector<2x8x8x4xbf16>
    %c0_39 = arith.constant 0 : index
    %c1_40 = arith.constant 1 : index
    %c1_41 = arith.constant 1 : index
    %c0_42 = arith.constant 0 : index
    %37 = vector.load %arg1[%c0_39, %c1_40, %c1_41, %c0_42] : memref<2x36x9x4xbf16, #tpu.memory_space<vmem>>, vector<2x8x8x4xbf16>
    %38 = vector.shape_cast %35 : vector<2x8x8x4xbf16> to vector<128x4xbf16>
    %39 = vector.extract_strided_slice %34 {offsets = [0, 0], sizes = [4, 128], strides = [1, 1]} : vector<12x128xbf16> to vector<4x128xbf16>
    %cst_43 = arith.constant dense<0.000000e+00> : vector<128x128xf32>
    %40 = tpu.matmul %38, %39, %cst_43 {dimension_numbers = #tpu.dot_dimension_numbers<[1], [0], [0], [1], [0, 0, 1, 1], [], []>} : vector<128x4xbf16>, vector<4x128xbf16>, vector<128x128xf32> -> vector<128x128xf32>
    %41 = arith.addf %32, %40 : vector<128x128xf32>
    %42 = vector.shape_cast %36 : vector<2x8x8x4xbf16> to vector<128x4xbf16>
    %43 = vector.extract_strided_slice %34 {offsets = [4, 0], sizes = [4, 128], strides = [1, 1]} : vector<12x128xbf16> to vector<4x128xbf16>
    %cst_44 = arith.constant dense<0.000000e+00> : vector<128x128xf32>
    %44 = tpu.matmul %42, %43, %cst_44 {dimension_numbers = #tpu.dot_dimension_numbers<[1], [0], [0], [1], [0, 0, 1, 1], [], []>} : vector<128x4xbf16>, vector<4x128xbf16>, vector<128x128xf32> -> vector<128x128xf32>
    %45 = arith.addf %41, %44 : vector<128x128xf32>
    %46 = vector.shape_cast %37 : vector<2x8x8x4xbf16> to vector<128x4xbf16>
    %47 = vector.extract_strided_slice %34 {offsets = [8, 0], sizes = [4, 128], strides = [1, 1]} : vector<12x128xbf16> to vector<4x128xbf16>
    %cst_45 = arith.constant dense<0.000000e+00> : vector<128x128xf32>
    %48 = tpu.matmul %46, %47, %cst_45 {dimension_numbers = #tpu.dot_dimension_numbers<[1], [0], [0], [1], [0, 0, 1, 1], [], []>} : vector<128x4xbf16>, vector<4x128xbf16>, vector<128x128xf32> -> vector<128x128xf32>
    %49 = arith.addf %45, %48 : vector<128x128xf32>
    %c0_46 = arith.constant 0 : index
    %c0_47 = arith.constant 0 : index
    %50 = vector.load %arg3[%c0_46, %c0_47] : memref<1x128xf32, #tpu.memory_space<vmem>>, vector<1x128xf32>
    %51 = vector.broadcast %50 : vector<1x128xf32> to vector<128x128xf32>
    %52 = arith.mulf %49, %51 : vector<128x128xf32>
    %c0_48 = arith.constant 0 : index
    %c0_49 = arith.constant 0 : index
    %53 = vector.load %arg4[%c0_48, %c0_49] : memref<1x128xf32, #tpu.memory_space<vmem>>, vector<1x128xf32>
    %54 = vector.broadcast %53 : vector<1x128xf32> to vector<128x128xf32>
    %55 = arith.addf %52, %54 : vector<128x128xf32>
    %cst_50 = arith.constant 0.000000e+00 : f32
    %56 = vector.broadcast %cst_50 : f32 to vector<128x128xf32>
    %57 = arith.maximumf %55, %56 : vector<128x128xf32>
    %58 = arith.truncf %57 : vector<128x128xf32> to vector<128x128xbf16>
    %59 = vector.shape_cast %58 : vector<128x128xbf16> to vector<2x8x8x128xbf16>
    %cst_51 = arith.constant 0.000000e+00 : bf16
    %60 = vector.broadcast %cst_51 : bf16 to vector<2x1x16x128xbf16>
    %cst_52 = arith.constant 0.000000e+00 : bf16
    %61 = vector.broadcast %cst_52 : bf16 to vector<2x8x1x128xbf16>
    %cst_53 = arith.constant 0.000000e+00 : bf16
    %62 = vector.broadcast %cst_53 : bf16 to vector<2x8x7x128xbf16>
    %63 = tpu.concatenate %61, %59, %62 in 2 : vector<2x8x1x128xbf16>, vector<2x8x8x128xbf16>, vector<2x8x7x128xbf16> -> vector<2x8x16x128xbf16>
    %64 = tpu.concatenate %60, %63, %60 in 1 : vector<2x1x16x128xbf16>, vector<2x8x16x128xbf16>, vector<2x1x16x128xbf16> -> vector<2x10x16x128xbf16>
    %c0_54 = arith.constant 0 : index
    %c0_55 = arith.constant 0 : index
    %c0_56 = arith.constant 0 : index
    %c0_57 = arith.constant 0 : index
    %65 = vector.load %arg12[%c0_54, %c0_55, %c0_56, %c0_57] : memref<2x10x16x128xbf16, #tpu.memory_space<vmem>>, vector<2x10x16x128xbf16>
    tpu.vector_store %arg12[%c0_54, %c0_55, %c0_56, %c0_57], %64 {strides = array<i32>} : memref<2x10x16x128xbf16, #tpu.memory_space<vmem>>, vector<2x10x16x128xbf16>,
    %c0_58 = arith.constant 0 : index
    %c0_59 = arith.constant 0 : index
    %c0_60 = arith.constant 0 : index
    %66 = vector.load %arg5[%c0_58, %c0_59, %c0_60] : memref<3x384x128xbf16, #tpu.memory_space<vmem>>, vector<1x384x128xbf16>
    %67 = vector.shape_cast %66 : vector<1x384x128xbf16> to vector<384x128xbf16>
    %c0_61 = arith.constant 0 : index
    %c0_62 = arith.constant 0 : index
    %c0_63 = arith.constant 0 : index
    %c0_64 = arith.constant 0 : index
    %68 = vector.load %arg12[%c0_61, %c0_62, %c0_63, %c0_64] : memref<2x10x16x128xbf16, #tpu.memory_space<vmem>>, vector<2x8x8x128xbf16>
    %c0_65 = arith.constant 0 : index
    %c0_66 = arith.constant 0 : index
    %c1_67 = arith.constant 1 : index
    %c0_68 = arith.constant 0 : index
    %69 = vector.load %arg12[%c0_65, %c0_66, %c1_67, %c0_68] : memref<2x10x16x128xbf16, #tpu.memory_space<vmem>>, vector<2x8x8x128xbf16>
    %c0_69 = arith.constant 0 : index
    %c0_70 = arith.constant 0 : index
    %c2_71 = arith.constant 2 : index
    %c0_72 = arith.constant 0 : index
    %70 = vector.load %arg12[%c0_69, %c0_70, %c2_71, %c0_72] : memref<2x10x16x128xbf16, #tpu.memory_space<vmem>>, vector<2x8x8x128xbf16>
    %71 = tpu.concatenate %68, %69, %70 in 3 : vector<2x8x8x128xbf16>, vector<2x8x8x128xbf16>, vector<2x8x8x128xbf16> -> vector<2x8x8x384xbf16>
    %72 = vector.shape_cast %71 : vector<2x8x8x384xbf16> to vector<128x384xbf16>
    %cst_73 = arith.constant dense<0.000000e+00> : vector<128x128xf32>
    %73 = tpu.matmul %72, %67, %cst_73 {dimension_numbers = #tpu.dot_dimension_numbers<[1], [0], [0], [1], [0, 0, 1, 1], [], []>} : vector<128x384xbf16>, vector<384x128xbf16>, vector<128x128xf32> -> vector<128x128xf32>
    %c1_74 = arith.constant 1 : index
    %c0_75 = arith.constant 0 : index
    %c0_76 = arith.constant 0 : index
    %74 = vector.load %arg5[%c1_74, %c0_75, %c0_76] : memref<3x384x128xbf16, #tpu.memory_space<vmem>>, vector<1x384x128xbf16>
    %75 = vector.shape_cast %74 : vector<1x384x128xbf16> to vector<384x128xbf16>
    %c0_77 = arith.constant 0 : index
    %c1_78 = arith.constant 1 : index
    %c0_79 = arith.constant 0 : index
    %c0_80 = arith.constant 0 : index
    %76 = vector.load %arg12[%c0_77, %c1_78, %c0_79, %c0_80] : memref<2x10x16x128xbf16, #tpu.memory_space<vmem>>, vector<2x8x8x128xbf16>
    %c0_81 = arith.constant 0 : index
    %c1_82 = arith.constant 1 : index
    %c1_83 = arith.constant 1 : index
    %c0_84 = arith.constant 0 : index
    %77 = vector.load %arg12[%c0_81, %c1_82, %c1_83, %c0_84] : memref<2x10x16x128xbf16, #tpu.memory_space<vmem>>, vector<2x8x8x128xbf16>
    %c0_85 = arith.constant 0 : index
    %c1_86 = arith.constant 1 : index
    %c2_87 = arith.constant 2 : index
    %c0_88 = arith.constant 0 : index
    %78 = vector.load %arg12[%c0_85, %c1_86, %c2_87, %c0_88] : memref<2x10x16x128xbf16, #tpu.memory_space<vmem>>, vector<2x8x8x128xbf16>
    %79 = tpu.concatenate %76, %77, %78 in 3 : vector<2x8x8x128xbf16>, vector<2x8x8x128xbf16>, vector<2x8x8x128xbf16> -> vector<2x8x8x384xbf16>
    %80 = vector.shape_cast %79 : vector<2x8x8x384xbf16> to vector<128x384xbf16>
    %cst_89 = arith.constant dense<0.000000e+00> : vector<128x128xf32>
    %81 = tpu.matmul %80, %75, %cst_89 {dimension_numbers = #tpu.dot_dimension_numbers<[1], [0], [0], [1], [0, 0, 1, 1], [], []>} : vector<128x384xbf16>, vector<384x128xbf16>, vector<128x128xf32> -> vector<128x128xf32>
    %82 = arith.addf %73, %81 : vector<128x128xf32>
    %c2_90 = arith.constant 2 : index
    %c0_91 = arith.constant 0 : index
    %c0_92 = arith.constant 0 : index
    %83 = vector.load %arg5[%c2_90, %c0_91, %c0_92] : memref<3x384x128xbf16, #tpu.memory_space<vmem>>, vector<1x384x128xbf16>
    %84 = vector.shape_cast %83 : vector<1x384x128xbf16> to vector<384x128xbf16>
    %c0_93 = arith.constant 0 : index
    %c2_94 = arith.constant 2 : index
    %c0_95 = arith.constant 0 : index
    %c0_96 = arith.constant 0 : index
    %85 = vector.load %arg12[%c0_93, %c2_94, %c0_95, %c0_96] : memref<2x10x16x128xbf16, #tpu.memory_space<vmem>>, vector<2x8x8x128xbf16>
    %c0_97 = arith.constant 0 : index
    %c2_98 = arith.constant 2 : index
    %c1_99 = arith.constant 1 : index
    %c0_100 = arith.constant 0 : index
    %86 = vector.load %arg12[%c0_97, %c2_98, %c1_99, %c0_100] : memref<2x10x16x128xbf16, #tpu.memory_space<vmem>>, vector<2x8x8x128xbf16>
    %c0_101 = arith.constant 0 : index
    %c2_102 = arith.constant 2 : index
    %c2_103 = arith.constant 2 : index
    %c0_104 = arith.constant 0 : index
    %87 = vector.load %arg12[%c0_101, %c2_102, %c2_103, %c0_104] : memref<2x10x16x128xbf16, #tpu.memory_space<vmem>>, vector<2x8x8x128xbf16>
    %88 = tpu.concatenate %85, %86, %87 in 3 : vector<2x8x8x128xbf16>, vector<2x8x8x128xbf16>, vector<2x8x8x128xbf16> -> vector<2x8x8x384xbf16>
    %89 = vector.shape_cast %88 : vector<2x8x8x384xbf16> to vector<128x384xbf16>
    %cst_105 = arith.constant dense<0.000000e+00> : vector<128x128xf32>
    %90 = tpu.matmul %89, %84, %cst_105 {dimension_numbers = #tpu.dot_dimension_numbers<[1], [0], [0], [1], [0, 0, 1, 1], [], []>} : vector<128x384xbf16>, vector<384x128xbf16>, vector<128x128xf32> -> vector<128x128xf32>
    %91 = arith.addf %82, %90 : vector<128x128xf32>
    %c0_106 = arith.constant 0 : index
    %c0_107 = arith.constant 0 : index
    %92 = vector.load %arg6[%c0_106, %c0_107] : memref<1x128xf32, #tpu.memory_space<vmem>>, vector<1x128xf32>
    %93 = vector.broadcast %92 : vector<1x128xf32> to vector<128x128xf32>
    %94 = arith.mulf %91, %93 : vector<128x128xf32>
    %c0_108 = arith.constant 0 : index
    %c0_109 = arith.constant 0 : index
    %95 = vector.load %arg7[%c0_108, %c0_109] : memref<1x128xf32, #tpu.memory_space<vmem>>, vector<1x128xf32>
    %96 = vector.broadcast %95 : vector<1x128xf32> to vector<128x128xf32>
    %97 = arith.addf %94, %96 : vector<128x128xf32>
    %c0_110 = arith.constant 0 : index
    %c27_111 = arith.constant 27 : index
    %c0_112 = arith.constant 0 : index
    %c0_113 = arith.constant 0 : index
    %98 = vector.load %arg1[%c0_110, %c27_111, %c0_112, %c0_113] : memref<2x36x9x4xbf16, #tpu.memory_space<vmem>>, vector<2x8x8x4xbf16>
    %99 = vector.shape_cast %98 : vector<2x8x8x4xbf16> to vector<128x4xbf16>
    %c0_114 = arith.constant 0 : index
    %c0_115 = arith.constant 0 : index
    %100 = vector.load %arg8[%c0_114, %c0_115] : memref<4x128xbf16, #tpu.memory_space<vmem>>, vector<4x128xbf16>
    %cst_116 = arith.constant dense<0.000000e+00> : vector<128x128xf32>
    %101 = tpu.matmul %99, %100, %cst_116 {dimension_numbers = #tpu.dot_dimension_numbers<[1], [0], [0], [1], [0, 0, 1, 1], [], []>} : vector<128x4xbf16>, vector<4x128xbf16>, vector<128x128xf32> -> vector<128x128xf32>
    %c0_117 = arith.constant 0 : index
    %c0_118 = arith.constant 0 : index
    %102 = vector.load %arg9[%c0_117, %c0_118] : memref<1x128xf32, #tpu.memory_space<vmem>>, vector<1x128xf32>
    %103 = vector.broadcast %102 : vector<1x128xf32> to vector<128x128xf32>
    %104 = arith.mulf %101, %103 : vector<128x128xf32>
    %c0_119 = arith.constant 0 : index
    %c0_120 = arith.constant 0 : index
    %105 = vector.load %arg10[%c0_119, %c0_120] : memref<1x128xf32, #tpu.memory_space<vmem>>, vector<1x128xf32>
    %106 = vector.broadcast %105 : vector<1x128xf32> to vector<128x128xf32>
    %107 = arith.addf %104, %106 : vector<128x128xf32>
    %108 = arith.addf %97, %107 : vector<128x128xf32>
    %cst_121 = arith.constant 0.000000e+00 : f32
    %109 = vector.broadcast %cst_121 : f32 to vector<128x128xf32>
    %110 = arith.maximumf %108, %109 : vector<128x128xf32>
    %111 = vector.shape_cast %110 : vector<128x128xf32> to vector<2x8x8x128xf32>
    %112 = arith.truncf %111 : vector<2x8x8x128xf32> to vector<2x8x8x128xbf16>
    %c0_122 = arith.constant 0 : index
    %c0_123 = arith.constant 0 : index
    %c0_124 = arith.constant 0 : index
    %c0_125 = arith.constant 0 : index
    %113 = vector.load %arg11[%c0_122, %c0_123, %c0_124, %c0_125] : memref<2x8x8x128xbf16, #tpu.memory_space<vmem>>, vector<2x8x8x128xbf16>
    tpu.vector_store %arg11[%c0_122, %c0_123, %c0_124, %c0_125], %112 {strides = array<i32>} : memref<2x8x8x128xbf16, #tpu.memory_space<vmem>>, vector<2x8x8x128xbf16>,
    return
  }
  func.func @transform_0(%arg0: i32) -> (i32, i32, i32, i32) {
    %c0_i32 = arith.constant 0 : i32
    %c0_i32_0 = arith.constant 0 : i32
    %c0_i32_1 = arith.constant 0 : i32
    %c0_i32_2 = arith.constant 0 : i32
    return %arg0, %c0_i32, %c0_i32_0, %c0_i32_1 : i32, i32, i32, i32
  }
  func.func @transform_1(%arg0: i32) -> (i32, i32, i32) {
    %c0_i32 = arith.constant 0 : i32
    %c0_i32_0 = arith.constant 0 : i32
    %c0_i32_1 = arith.constant 0 : i32
    %c0_i32_2 = arith.constant 0 : i32
    return %c0_i32, %c0_i32_0, %c0_i32_1 : i32, i32, i32
  }
  func.func @transform_2(%arg0: i32) -> (i32, i32) {
    %c0_i32 = arith.constant 0 : i32
    %c0_i32_0 = arith.constant 0 : i32
    %c0_i32_1 = arith.constant 0 : i32
    return %c0_i32, %c0_i32_0 : i32, i32
  }
  func.func @transform_3(%arg0: i32) -> (i32, i32) {
    %c0_i32 = arith.constant 0 : i32
    %c0_i32_0 = arith.constant 0 : i32
    %c0_i32_1 = arith.constant 0 : i32
    return %c0_i32, %c0_i32_0 : i32, i32
  }
  func.func @transform_4(%arg0: i32) -> (i32, i32, i32) {
    %c0_i32 = arith.constant 0 : i32
    %c0_i32_0 = arith.constant 0 : i32
    %c0_i32_1 = arith.constant 0 : i32
    %c0_i32_2 = arith.constant 0 : i32
    return %c0_i32, %c0_i32_0, %c0_i32_1 : i32, i32, i32
  }
  func.func @transform_5(%arg0: i32) -> (i32, i32) {
    %c0_i32 = arith.constant 0 : i32
    %c0_i32_0 = arith.constant 0 : i32
    %c0_i32_1 = arith.constant 0 : i32
    return %c0_i32, %c0_i32_0 : i32, i32
  }
  func.func @transform_6(%arg0: i32) -> (i32, i32) {
    %c0_i32 = arith.constant 0 : i32
    %c0_i32_0 = arith.constant 0 : i32
    %c0_i32_1 = arith.constant 0 : i32
    return %c0_i32, %c0_i32_0 : i32, i32
  }
  func.func @transform_7(%arg0: i32) -> (i32, i32) {
    %c0_i32 = arith.constant 0 : i32
    %c0_i32_0 = arith.constant 0 : i32
    %c0_i32_1 = arith.constant 0 : i32
    return %c0_i32, %c0_i32_0 : i32, i32
  }
  func.func @transform_8(%arg0: i32) -> (i32, i32) {
    %c0_i32 = arith.constant 0 : i32
    %c0_i32_0 = arith.constant 0 : i32
    %c0_i32_1 = arith.constant 0 : i32
    return %c0_i32, %c0_i32_0 : i32, i32
  }
  func.func @transform_9(%arg0: i32) -> (i32, i32) {
    %c0_i32 = arith.constant 0 : i32
    %c0_i32_0 = arith.constant 0 : i32
    %c0_i32_1 = arith.constant 0 : i32
    return %c0_i32, %c0_i32_0 : i32, i32
  }
  func.func @transform_10(%arg0: i32) -> (i32, i32, i32, i32) {
    %c0_i32 = arith.constant 0 : i32
    %c0_i32_0 = arith.constant 0 : i32
    %c0_i32_1 = arith.constant 0 : i32
    %c0_i32_2 = arith.constant 0 : i32
    return %arg0, %c0_i32, %c0_i32_0, %c0_i32_1 : i32, i32, i32, i32
  }
}

</mosaic_0001>

<llo_original>
// kernel: tpu_custom_call.1
$region0: #{tpu_custom_call.1}
  #allocation0 [shape = 'u32[]', space=smem, size = 0x4, offset = 0x4, fixed_abs, tag = 'smem constant byte address 0x4 - core index']
  #allocation1 [shape = 'u32[144,128]{1,0:T(1,128)}', space=vmem, size = 0x12000, scoped, tag = 'internal scratch']
  #allocation2 [shape = 'bf16[2,10,16,128]{3,2,1,0:T(16,128)(2,1)}', space=vmem, size = 0x14000, scoped, tag = 'scratch operand']
  %s0 = inlined_call_operand.vmem [shape: bf16[4,36,9,4], index: 0, kind: input, shape index: {}]
  %s1 = inlined_call_operand.vmem [shape: bf16[3,12,128], index: 1, kind: input, shape index: {}]
  %s2 = inlined_call_operand.vmem [shape: f32[1,128], index: 2, kind: input, shape index: {}]
  %s3 = inlined_call_operand.vmem [shape: f32[1,128], index: 3, kind: input, shape index: {}]
  %s4 = inlined_call_operand.vmem [shape: bf16[3,384,128], index: 4, kind: input, shape index: {}]
  %s5 = inlined_call_operand.vmem [shape: f32[1,128], index: 5, kind: input, shape index: {}]
  %s6 = inlined_call_operand.vmem [shape: f32[1,128], index: 6, kind: input, shape index: {}]
  %s7 = inlined_call_operand.vmem [shape: bf16[4,128], index: 7, kind: input, shape index: {}]
  %s8 = inlined_call_operand.vmem [shape: f32[1,128], index: 8, kind: input, shape index: {}]
  %s9 = inlined_call_operand.vmem [shape: f32[1,128], index: 9, kind: input, shape index: {}]
  %s10 = inlined_call_operand.hbm [shape: bf16[4,8,8,128], index: 10, kind: output, shape index: {}]
  %s11 = sld [smem:[#allocation0]]
  $region73: #{tpu_custom_call.1} parent=0
    _
  %s13 = ssub.s32 1, %s11
  %s14 = scalar_select 0, %s13, %s11
  $region1: #{tpu_custom_call.1} parent=0
    #allocation3 [shape = 'u8[65536]{0}', space=vmem, size = 0x10000, scoped, tag = 'output window, operand 0']
    #allocation4 [shape = 's32[2]{0}', space=sflag, size = 0x8, scoped, tag = 'scoped memory for tpu_custom_call.1']
    %15 = vsyncpa [#allocation4], 0
    %s16 = scalar_lea.sflag [#allocation4], 1
    %17 = vsyncpa %s16, 0
    loop: start=0, step=1, limit=4
    $region2: #{tpu_custom_call.1} parent=1 // loop_pre_header
      _
    $region3: #{tpu_custom_call.1} parent=1 // loop_header
      %s19 = sphi 0, %s23
      %p20 = scmp.ge.s32.totalorder %s19, 4
      %s29 = sphi 0, %s31
      %s32 = sphi 0, %s29
      %s33 = sphi 0, %s32
      %s49 = sphi 0, %s33
      %s53 = sphi 0, %s53
      %s55 = sphi 0, %s53
      %s56 = sphi 0, %s55
      %s70 = sphi 0, %s56
      %s74 = sphi 0, %s74
      %s76 = sphi 0, %s74
      %s77 = sphi 0, %s76
      %s91 = sphi 0, %s77
      %s95 = sphi 0, %s95
      %s97 = sphi 0, %s95
      %s98 = sphi 0, %s97
      %s112 = sphi 0, %s98
      %s116 = sphi 0, %s116
      %s118 = sphi 0, %s116
      %s119 = sphi 0, %s118
      %s133 = sphi 0, %s119
      %s137 = sphi 0, %s137
      %s139 = sphi 0, %s137
      %s140 = sphi 0, %s139
      %s154 = sphi 0, %s140
      %s158 = sphi 0, %s158
      %s160 = sphi 0, %s158
      %s161 = sphi 0, %s160
      %s175 = sphi 0, %s161
      %s179 = sphi 0, %s179
      %s181 = sphi 0, %s179
      %s182 = sphi 0, %s181
      %s196 = sphi 0, %s182
      %s200 = sphi 0, %s200
      %s202 = sphi 0, %s200
      %s203 = sphi 0, %s202
      %s217 = sphi 0, %s203
      %s221 = sphi 0, %s221
      %s223 = sphi 0, %s221
      %s224 = sphi 0, %s223
      %s238 = sphi 0, %s224
      %s244 = sphi 0, %s246
      %s247 = sphi 0, %s244
      %s248 = sphi 0, %s247
      %s264 = sphi 0, %s248
    $region4: #{tpu_custom_call.1} parent=1 // loop_header_branch
      %22 = sbr.rel (%p20) target = $region8
    $region5: #{tpu_custom_call.1} parent=1 // loop_body
      %s24 = ssub.s32 %s19, 1
      %s25 = ssub.s32 %s19, 2
      %s26 = sadd.s32 %s19, 1
      %s27 = ssub.s32 %s19, %s26
      %p28 = scmp.eq.s32.totalorder %s27, 0
      %s30 = sadd.s32 %s29, 1
      %s31 = scalar_select %p28, %s29, %s30
      %p34 = pneg %p28
      %p35 = scmp.eq.s32.totalorder %s19, 1
      %p36 = por %p34, %p35
      %p37 = scmp.ne.s32.totalorder %s29, %s32
      %p38 = scmp.eq.s32.totalorder %s19, 0
      %p39 = por %p37, %p38
      %p40 = scmp.ne.s32.totalorder %s29, %s32
      %p41 = scmp.eq.s32.totalorder %s24, 1
      %p42 = por %p40, %p41
      %p43 = scmp.ne.s32.totalorder %s32, %s33
      %p44 = scmp.eq.s32.totalorder %s24, 0
      %p45 = por %p43, %p44
      %p46 = scmp.ne.s32.totalorder %s32, %s33
      %p47 = scmp.eq.s32.totalorder %s25, 1
      %p48 = por %p46, %p47
      %p50 = scmp.ne.s32.totalorder %s33, %s49
      %p51 = scmp.eq.s32.totalorder %s25, 0
      %p52 = por %p50, %p51
      %s54 = sadd.s32 %s53, 1
      %p57 = scmp.eq.s32.totalorder %s19, 1
      %p58 = scmp.ne.s32.totalorder %s53, %s55
      %p59 = scmp.eq.s32.totalorder %s19, 0
      %p60 = por %p58, %p59
      %p61 = scmp.ne.s32.totalorder %s53, %s55
      %p62 = scmp.eq.s32.totalorder %s24, 1
      %p63 = por %p61, %p62
      %p64 = scmp.ne.s32.totalorder %s55, %s56
      %p65 = scmp.eq.s32.totalorder %s24, 0
      %p66 = por %p64, %p65
      %p67 = scmp.ne.s32.totalorder %s55, %s56
      %p68 = scmp.eq.s32.totalorder %s25, 1
      %p69 = por %p67, %p68
      %p71 = scmp.ne.s32.totalorder %s56, %s70
      %p72 = scmp.eq.s32.totalorder %s25, 0
      %p73 = por %p71, %p72
      %s75 = sadd.s32 %s74, 1
      %p78 = scmp.eq.s32.totalorder %s19, 1
      %p79 = scmp.ne.s32.totalorder %s74, %s76
      %p80 = scmp.eq.s32.totalorder %s19, 0
      %p81 = por %p79, %p80
      %p82 = scmp.ne.s32.totalorder %s74, %s76
      %p83 = scmp.eq.s32.totalorder %s24, 1
      %p84 = por %p82, %p83
      %p85 = scmp.ne.s32.totalorder %s76, %s77
      %p86 = scmp.eq.s32.totalorder %s24, 0
      %p87 = por %p85, %p86
      %p88 = scmp.ne.s32.totalorder %s76, %s77
      %p89 = scmp.eq.s32.totalorder %s25, 1
      %p90 = por %p88, %p89
      %p92 = scmp.ne.s32.totalorder %s77, %s91
      %p93 = scmp.eq.s32.totalorder %s25, 0
      %p94 = por %p92, %p93
      %s96 = sadd.s32 %s95, 1
      %p99 = scmp.eq.s32.totalorder %s19, 1
      %p100 = scmp.ne.s32.totalorder %s95, %s97
      %p101 = scmp.eq.s32.totalorder %s19, 0
      %p102 = por %p100, %p101
      %p103 = scmp.ne.s32.totalorder %s95, %s97
      %p104 = scmp.eq.s32.totalorder %s24, 1
      %p105 = por %p103, %p104
      %p106 = scmp.ne.s32.totalorder %s97, %s98
      %p107 = scmp.eq.s32.totalorder %s24, 0
      %p108 = por %p106, %p107
      %p109 = scmp.ne.s32.totalorder %s97, %s98
      %p110 = scmp.eq.s32.totalorder %s25, 1
      %p111 = por %p109, %p110
      %p113 = scmp.ne.s32.totalorder %s98, %s112
      %p114 = scmp.eq.s32.totalorder %s25, 0
      %p115 = por %p113, %p114
      %s117 = sadd.s32 %s116, 1
      %p120 = scmp.eq.s32.totalorder %s19, 1
      %p121 = scmp.ne.s32.totalorder %s116, %s118
      %p122 = scmp.eq.s32.totalorder %s19, 0
      %p123 = por %p121, %p122
      %p124 = scmp.ne.s32.totalorder %s116, %s118
      %p125 = scmp.eq.s32.totalorder %s24, 1
      %p126 = por %p124, %p125
      %p127 = scmp.ne.s32.totalorder %s118, %s119
      %p128 = scmp.eq.s32.totalorder %s24, 0
      %p129 = por %p127, %p128
      %p130 = scmp.ne.s32.totalorder %s118, %s119
      %p131 = scmp.eq.s32.totalorder %s25, 1
      %p132 = por %p130, %p131
      %p134 = scmp.ne.s32.totalorder %s119, %s133
      %p135 = scmp.eq.s32.totalorder %s25, 0
      %p136 = por %p134, %p135
      %s138 = sadd.s32 %s137, 1
      %p141 = scmp.eq.s32.totalorder %s19, 1
      %p142 = scmp.ne.s32.totalorder %s137, %s139
      %p143 = scmp.eq.s32.totalorder %s19, 0
      %p144 = por %p142, %p143
      %p145 = scmp.ne.s32.totalorder %s137, %s139
      %p146 = scmp.eq.s32.totalorder %s24, 1
      %p147 = por %p145, %p146
      %p148 = scmp.ne.s32.totalorder %s139, %s140
      %p149 = scmp.eq.s32.totalorder %s24, 0
      %p150 = por %p148, %p149
      %p151 = scmp.ne.s32.totalorder %s139, %s140
      %p152 = scmp.eq.s32.totalorder %s25, 1
      %p153 = por %p151, %p152
      %p155 = scmp.ne.s32.totalorder %s140, %s154
      %p156 = scmp.eq.s32.totalorder %s25, 0
      %p157 = por %p155, %p156
      %s159 = sadd.s32 %s158, 1
      %p162 = scmp.eq.s32.totalorder %s19, 1
      %p163 = scmp.ne.s32.totalorder %s158, %s160
      %p164 = scmp.eq.s32.totalorder %s19, 0
      %p165 = por %p163, %p164
      %p166 = scmp.ne.s32.totalorder %s158, %s160
      %p167 = scmp.eq.s32.totalorder %s24, 1
      %p168 = por %p166, %p167
      %p169 = scmp.ne.s32.totalorder %s160, %s161
      %p170 = scmp.eq.s32.totalorder %s24, 0
      %p171 = por %p169, %p170
      %p172 = scmp.ne.s32.totalorder %s160, %s161
      %p173 = scmp.eq.s32.totalorder %s25, 1
      %p174 = por %p172, %p173
      %p176 = scmp.ne.s32.totalorder %s161, %s175
      %p177 = scmp.eq.s32.totalorder %s25, 0
      %p178 = por %p176, %p177
      %s180 = sadd.s32 %s179, 1
      %p183 = scmp.eq.s32.totalorder %s19, 1
      %p184 = scmp.ne.s32.totalorder %s179, %s181
      %p185 = scmp.eq.s32.totalorder %s19, 0
      %p186 = por %p184, %p185
      %p187 = scmp.ne.s32.totalorder %s179, %s181
      %p188 = scmp.eq.s32.totalorder %s24, 1
      %p189 = por %p187, %p188
      %p190 = scmp.ne.s32.totalorder %s181, %s182
      %p191 = scmp.eq.s32.totalorder %s24, 0
      %p192 = por %p190, %p191
      %p193 = scmp.ne.s32.totalorder %s181, %s182
      %p194 = scmp.eq.s32.totalorder %s25, 1
      %p195 = por %p193, %p194
      %p197 = scmp.ne.s32.totalorder %s182, %s196
      %p198 = scmp.eq.s32.totalorder %s25, 0
      %p199 = por %p197, %p198
      %s201 = sadd.s32 %s200, 1
      %p204 = scmp.eq.s32.totalorder %s19, 1
      %p205 = scmp.ne.s32.totalorder %s200, %s202
      %p206 = scmp.eq.s32.totalorder %s19, 0
      %p207 = por %p205, %p206
      %p208 = scmp.ne.s32.totalorder %s200, %s202
      %p209 = scmp.eq.s32.totalorder %s24, 1
      %p210 = por %p208, %p209
      %p211 = scmp.ne.s32.totalorder %s202, %s203
      %p212 = scmp.eq.s32.totalorder %s24, 0
      %p213 = por %p211, %p212
      %p214 = scmp.ne.s32.totalorder %s202, %s203
      %p215 = scmp.eq.s32.totalorder %s25, 1
      %p216 = por %p214, %p215
      %p218 = scmp.ne.s32.totalorder %s203, %s217
      %p219 = scmp.eq.s32.totalorder %s25, 0
      %p220 = por %p218, %p219
      %s222 = sadd.s32 %s221, 1
      %p225 = scmp.eq.s32.totalorder %s19, 1
      %p226 = scmp.ne.s32.totalorder %s221, %s223
      %p227 = scmp.eq.s32.totalorder %s19, 0
      %p228 = por %p226, %p227
      %p229 = scmp.ne.s32.totalorder %s221, %s223
      %p230 = scmp.eq.s32.totalorder %s24, 1
      %p231 = por %p229, %p230
      %p232 = scmp.ne.s32.totalorder %s223, %s224
      %p233 = scmp.eq.s32.totalorder %s24, 0
      %p234 = por %p232, %p233
      %p235 = scmp.ne.s32.totalorder %s223, %s224
      %p236 = scmp.eq.s32.totalorder %s25, 1
      %p237 = por %p235, %p236
      %p239 = scmp.ne.s32.totalorder %s224, %s238
      %p240 = scmp.eq.s32.totalorder %s25, 0
      %p241 = por %p239, %p240
      %s242 = ssub.s32 %s19, %s26
      %p243 = scmp.eq.s32.totalorder %s242, 0
      %s245 = sadd.s32 %s244, 1
      %s246 = scalar_select %p243, %s244, %s245
      %p249 = pneg %p243
      %p250 = scmp.eq.s32.totalorder %s19, 1
      %p251 = por %p249, %p250
      %p252 = scmp.ne.s32.totalorder %s244, %s247
      %p253 = scmp.eq.s32.totalorder %s19, 0
      %p254 = por %p252, %p253
      %p255 = scmp.ne.s32.totalorder %s244, %s247
      %p256 = scmp.eq.s32.totalorder %s24, 1
      %p257 = por %p255, %p256
      %p258 = scmp.ne.s32.totalorder %s247, %s248
      %p259 = scmp.eq.s32.totalorder %s24, 0
      %p260 = por %p258, %p259
      %p261 = scmp.ne.s32.totalorder %s247, %s248
      %p262 = scmp.eq.s32.totalorder %s25, 1
      %p263 = por %p261, %p262
      %p265 = scmp.ne.s32.totalorder %s248, %s264
      %p266 = scmp.eq.s32.totalorder %s25, 0
      %p267 = por %p265, %p266
      %p268 = scmp.le.s32.totalorder 1, %s19
      %p269 = scmp.lt.s32.totalorder %s19, 3
      %p270 = pnand %p268, %p269
      %p271 = pneg %p270
      // Predicated region
      $region9: #{tpu_custom_call.1} parent=5 // pred_check
        _
      $region10: #{tpu_custom_call.1} parent=5 // pred_check_branch
        %273 = sbr.rel (%p270) target = $region12
      $region11: #{tpu_custom_call.1} parent=5 // pred_region
        %s274 = ssub.s32 %s19, 1
        // Predicated region
        $region13: #{tpu_custom_call.1} parent=11 // pred_check
          %p275 = pneg %p66
        $region14: #{tpu_custom_call.1} parent=11 // pred_check_branch
          %277 = sbr.rel (%p275) target = $region16
        $region15: #{tpu_custom_call.1} parent=11 // pred_region
          _
        $region16: #{tpu_custom_call.1} parent=11 // pred_fallthru
          _
        // Predicated region
        $region17: #{tpu_custom_call.1} parent=11 // pred_check
          %p278 = pneg %p87
        $region18: #{tpu_custom_call.1} parent=11 // pred_check_branch
          %280 = sbr.rel (%p278) target = $region20
        $region19: #{tpu_custom_call.1} parent=11 // pred_region
          _
        $region20: #{tpu_custom_call.1} parent=11 // pred_fallthru
          _
        // Predicated region
        $region21: #{tpu_custom_call.1} parent=11 // pred_check
          %p281 = pneg %p108
        $region22: #{tpu_custom_call.1} parent=11 // pred_check_branch
          %283 = sbr.rel (%p281) target = $region24
        $region23: #{tpu_custom_call.1} parent=11 // pred_region
          _
        $region24: #{tpu_custom_call.1} parent=11 // pred_fallthru
          _
        // Predicated region
        $region25: #{tpu_custom_call.1} parent=11 // pred_check
          %p284 = pneg %p129
        $region26: #{tpu_custom_call.1} parent=11 // pred_check_branch
          %286 = sbr.rel (%p284) target = $region28
        $region27: #{tpu_custom_call.1} parent=11 // pred_region
          _
        $region28: #{tpu_custom_call.1} parent=11 // pred_fallthru
          _
        // Predicated region
        $region29: #{tpu_custom_call.1} parent=11 // pred_check
          %p287 = pneg %p150
        $region30: #{tpu_custom_call.1} parent=11 // pred_check_branch
          %289 = sbr.rel (%p287) target = $region32
        $region31: #{tpu_custom_call.1} parent=11 // pred_region
          _
        $region32: #{tpu_custom_call.1} parent=11 // pred_fallthru
          _
        // Predicated region
        $region33: #{tpu_custom_call.1} parent=11 // pred_check
          %p290 = pneg %p171
        $region34: #{tpu_custom_call.1} parent=11 // pred_check_branch
          %292 = sbr.rel (%p290) target = $region36
        $region35: #{tpu_custom_call.1} parent=11 // pred_region
          _
        $region36: #{tpu_custom_call.1} parent=11 // pred_fallthru
          _
        // Predicated region
        $region37: #{tpu_custom_call.1} parent=11 // pred_check
          %p293 = pneg %p192
        $region38: #{tpu_custom_call.1} parent=11 // pred_check_branch
          %295 = sbr.rel (%p293) target = $region40
        $region39: #{tpu_custom_call.1} parent=11 // pred_region
          _
        $region40: #{tpu_custom_call.1} parent=11 // pred_fallthru
          _
        // Predicated region
        $region41: #{tpu_custom_call.1} parent=11 // pred_check
          %p296 = pneg %p213
        $region42: #{tpu_custom_call.1} parent=11 // pred_check_branch
          %298 = sbr.rel (%p296) target = $region44
        $region43: #{tpu_custom_call.1} parent=11 // pred_region
          _
        $region44: #{tpu_custom_call.1} parent=11 // pred_fallthru
          _
        // Predicated region
        $region45: #{tpu_custom_call.1} parent=11 // pred_check
          %p299 = pneg %p234
        $region46: #{tpu_custom_call.1} parent=11 // pred_check_branch
          %301 = sbr.rel (%p299) target = $region48
        $region47: #{tpu_custom_call.1} parent=11 // pred_region
          _
        $region48: #{tpu_custom_call.1} parent=11 // pred_fallthru
          _
      $region12: #{tpu_custom_call.1} parent=5 // pred_fallthru
        _
      %p302 = scmp.lt.s32.totalorder %s19, 2
      // Predicated region
      $region49: #{tpu_custom_call.1} parent=5 // pred_check
        %p303 = pneg %p302
      $region50: #{tpu_custom_call.1} parent=5 // pred_check_branch
        %305 = sbr.rel (%p303) target = $region52
      $region51: #{tpu_custom_call.1} parent=5 // pred_region
        // Predicated region
        $region53: #{tpu_custom_call.1} parent=51 // pred_check
          %p306 = pneg %p39
        $region54: #{tpu_custom_call.1} parent=51 // pred_check_branch
          %308 = sbr.rel (%p306) target = $region56
        $region55: #{tpu_custom_call.1} parent=51 // pred_region
          %s309 = smul.u32 2, %s19
          %p310 = scmp.lt.s32.totalorder %s309, 3
          %s311 = scalar_select %p310, %s309, 3
          %s312 = smul.addr %s311, 72
          %s313 = smul.addr %s312, 4
          %s314 = scalar_lea.vmem %s0, %s313
          %s315 = smul.u32 2, %s19
        $region56: #{tpu_custom_call.1} parent=51 // pred_fallthru
          _
      $region52: #{tpu_custom_call.1} parent=5 // pred_fallthru
        _
      %p316 = scmp.le.s32.totalorder 1, %s19
      %p317 = scmp.lt.s32.totalorder %s19, 3
      %p318 = pnand %p316, %p317
      %p319 = pneg %p318
      // Predicated region
      $region57: #{tpu_custom_call.1} parent=5 // pred_check
        _
      $region58: #{tpu_custom_call.1} parent=5 // pred_check_branch
        %321 = sbr.rel (%p318) target = $region60
      $region59: #{tpu_custom_call.1} parent=5 // pred_region
        %s322 = ssub.s32 %s19, 1
        %s323 = smul.u32 2, %s24
        %p324 = scmp.lt.s32.totalorder %s323, 3
        %s325 = scalar_select %p324, %s323, 3
        %s326 = smul.addr %s325, 72
        %s327 = smul.addr %s326, 4
        %s328 = scalar_lea.vmem %s0, %s327
        %p329 = pneg %p45
        %p330 = pneg %p42
        %p331 = pneg %p66
        %p332 = pneg %p63
        %p333 = pneg %p87
        %p334 = pneg %p84
        %p335 = pneg %p108
        %p336 = pneg %p105
        %p337 = pneg %p129
        %p338 = pneg %p126
        %p339 = pneg %p150
        %p340 = pneg %p147
        %p341 = pneg %p171
        %p342 = pneg %p168
        %p343 = pneg %p192
        %p344 = pneg %p189
        %p345 = pneg %p213
        %p346 = pneg %p210
        %p347 = pneg %p234
        %p348 = pneg %p231
        %p349 = pneg %p260
        %p350 = pneg %p257
        %s351 = sand.u32 %s247, 1
        %s352 = scalar_lea.sflag [#allocation4], %s351
        %s353 = sand.u32 %s247, 1
        %s354 = smul.addr %s353, 64
        %s355 = scalar_lea.vmem [#allocation3], %s354
        %s356 = smul.u32 2, %s24
        %p357 = scmp.lt.s32.totalorder %s356, 3
        %s358 = scalar_select %p357, %s356, 3
        %s359 = smul.addr %s358, 72
        %s360 = smul.addr %s359, 4
        %s361 = scalar_lea.vmem %s0, %s360
        %s362 = smul.u32 2, %s24
        %s363 = smul.u32 2, %s24
        %v365 = vld [vmem:[%s1] sm:$0xf]
        %v366 = vld [vmem:[%s1 + $0x4] sm:$0x3]
        %v367 = vld [vmem:[%s361] sm:$0xf]
        %v368 = vld [vmem:[%s361 + $0x8] sm:$0xf]
        %v369 = vld [vmem:[%s361 + $0x10] sm:$0xf]
        %v370 = vld [vmem:[%s361 + $0x18] sm:$0xf]
        %v371 = vld [vmem:[%s361 + $0x20] sm:$0xf]
        %v372 = vld [vmem:[%s361 + $0x28] sm:$0xf]
        %v373 = vld [vmem:[%s361 + $0x30] sm:$0xf]
        %v374 = vld [vmem:[%s361 + $0x38] sm:$0xf]
        %v375 = vld [vmem:[%s361 + $0x120] sm:$0xf]
        %v376 = vld [vmem:[%s361 + $0x128] sm:$0xf]
        %v377 = vld [vmem:[%s361 + $0x130] sm:$0xf]
        %v378 = vld [vmem:[%s361 + $0x138] sm:$0xf]
        %v379 = vld [vmem:[%s361 + $0x140] sm:$0xf]
        %v380 = vld [vmem:[%s361 + $0x148] sm:$0xf]
        %v381 = vld [vmem:[%s361 + $0x150] sm:$0xf]
        %v382 = vld [vmem:[%s361 + $0x158] sm:$0xf]
        %s383 = scalar_lea.vmem %s361, 72
        %v384 = vld [vmem:[%s383] sm:$0xf]
        %v385 = vld [vmem:[%s383 + $0x8] sm:$0xf]
        %v386 = vld [vmem:[%s383 + $0x10] sm:$0xf]
        %v387 = vld [vmem:[%s383 + $0x18] sm:$0xf]
        %v388 = vld [vmem:[%s383 + $0x20] sm:$0xf]
        %v389 = vld [vmem:[%s383 + $0x28] sm:$0xf]
        %v390 = vld [vmem:[%s383 + $0x30] sm:$0xf]
        %v391 = vld [vmem:[%s383 + $0x38] sm:$0xf]
        %v392 = vld [vmem:[%s383 + $0x120] sm:$0xf]
        %v393 = vld [vmem:[%s383 + $0x128] sm:$0xf]
        %v394 = vld [vmem:[%s383 + $0x130] sm:$0xf]
        %v395 = vld [vmem:[%s383 + $0x138] sm:$0xf]
        %v396 = vld [vmem:[%s383 + $0x140] sm:$0xf]
        %v397 = vld [vmem:[%s383 + $0x148] sm:$0xf]
        %v398 = vld [vmem:[%s383 + $0x150] sm:$0xf]
        %v399 = vld [vmem:[%s383 + $0x158] sm:$0xf]
        %v400 = vld [vmem:[%s361 + $0x4] sm:$0x1]
        %v401 = vld [vmem:[%s361 + $0xc] sm:$0x1]
        %v402 = vld [vmem:[%s361 + $0x14] sm:$0x1]
        %v403 = vld [vmem:[%s361 + $0x1c] sm:$0x1]
        %v404 = vld [vmem:[%s361 + $0x24] sm:$0x1]
        %v405 = vld [vmem:[%s361 + $0x2c] sm:$0x1]
        %v406 = vld [vmem:[%s361 + $0x34] sm:$0x1]
        %v407 = vld [vmem:[%s361 + $0x3c] sm:$0x1]
        %v408 = vld [vmem:[%s361 + $0x124] sm:$0x1]
        %v409 = vld [vmem:[%s361 + $0x12c] sm:$0x1]
        %v410 = vld [vmem:[%s361 + $0x134] sm:$0x1]
        %v411 = vld [vmem:[%s361 + $0x13c] sm:$0x1]
        %v412 = vld [vmem:[%s361 + $0x144] sm:$0x1]
        %v413 = vld [vmem:[%s361 + $0x14c] sm:$0x1]
        %v414 = vld [vmem:[%s361 + $0x154] sm:$0x1]
        %v415 = vld [vmem:[%s361 + $0x15c] sm:$0x1]
        %v432 = vunpack.c.l.b16 %v384
        %v433 = vunpack.c.l.b16 %v385
        %v434 = vunpack.c.l.b16 %v386
        %v435 = vunpack.c.l.b16 %v387
        %v436 = vunpack.c.l.b16 %v388
        %v437 = vunpack.c.l.b16 %v389
        %v438 = vunpack.c.l.b16 %v390
        %v439 = vunpack.c.l.b16 %v391
        %v440 = vunpack.c.l.b16 %v392
        %v441 = vunpack.c.l.b16 %v393
        %v442 = vunpack.c.l.b16 %v394
        %v443 = vunpack.c.l.b16 %v395
        %v444 = vunpack.c.l.b16 %v396
        %v445 = vunpack.c.l.b16 %v397
        %v446 = vunpack.c.l.b16 %v398
        %v447 = vunpack.c.l.b16 %v399
        %v448 = vpack.c.b16 %v433, %v432
        %v449 = vpack.c.b16 %v435, %v434
        %v450 = vpack.c.b16 %v437, %v436
        %v451 = vpack.c.b16 %v439, %v438
        %v452 = vpack.c.b16 %v441, %v440
        %v453 = vpack.c.b16 %v443, %v442
        %v454 = vpack.c.b16 %v445, %v444
        %v455 = vpack.c.b16 %v447, %v446
        %v457 = vunpack.c.l.b16 %v365
        %v458 = vpack.c.b16 %v457, %v457
        %v459 = vrot.slane %v458, 2
        %vm460 = vcmask 31744
        %v462 = vsel %vm460, %v448, 0
        %v465 = vsel %vm460, %v449, 0
        %v468 = vsel %vm460, %v450, 0
        %v471 = vsel %vm460, %v451, 0
        %v474 = vsel %vm460, %v452, 0
        %v477 = vsel %vm460, %v453, 0
        %v480 = vsel %vm460, %v454, 0
        %v483 = vsel %vm460, %v455, 0
        %vm485 = vcmask 1041408
        %v487 = vsel %vm485, %v459, 0
        %489 = vmatprep.subr.bf16.mxu0 0
        %490 = vmatpush1.bf16.msra.mxu0 %v487
        %491 = vmatprep.subr.bf16.mxu0 0
        %492 = vmatpush1.bf16.msra.mxu0 0
        %493 = vmatprep.subr.bf16.mxu0 0
        %494 = vmatpush1.bf16.msra.mxu0 0
        %495 = vmatprep.subr.bf16.mxu0 0
        %496 = vmatpush1.bf16.msra.mxu0 0
        %497 = vmatprep.subr.bf16.mxu0 0
        %498 = vmatpush1.bf16.msra.mxu0 0
        %499 = vmatprep.subr.bf16.mxu0 0
        %500 = vmatpush1.bf16.msra.mxu0 0
        %501 = vmatprep.subr.bf16.mxu0 0
        %502 = vmatpush1.bf16.msra.mxu0 0
        %503 = vmatprep.subr.bf16.mxu0 0
        %504 = vmatpush1.bf16.msra.mxu0 0
        %505 = vmatprep.subr.bf16.mxu0 0
        %506 = vmatpush1.bf16.msra.mxu0 0
        %507 = vmatprep.subr.bf16.mxu0 0
        %508 = vmatpush1.bf16.msra.mxu0 0
        %509 = vmatprep.subr.bf16.mxu0 0
        %510 = vmatpush1.bf16.msra.mxu0 0
        %511 = vmatprep.subr.bf16.mxu0 0
        %512 = vmatpush1.bf16.msra.mxu0 0
        %513 = vmatprep.subr.bf16.mxu0 0
        %514 = vmatpush1.bf16.msra.mxu0 0
        %515 = vmatprep.subr.bf16.mxu0 0
        %516 = vmatpush1.bf16.msra.mxu0 0
        %517 = vmatprep.subr.bf16.mxu0 0
        %518 = vmatpush1.bf16.msra.mxu0 0
        %519 = vmatprep.subr.bf16.mxu0 0
        %520 = vmatpush1.bf16.msra.mxu0 0
        %521 = vmatprep.mubr.bf16.mxu0 0
        %522 = vmatmul.mubr.bf16.gmra.mrb[0].mxu0 %v462
        %v523 = vpop.f32.mrb[0].mxu0
        %v524 = vadd.f32 0.0, %v523
        %v525 = vpop.f32.mrb[0].mxu0
        %v526 = vpop.f32.mrb[0].mxu0
        %v527 = vadd.f32 0.0, %v526
        %v528 = vpop.f32.mrb[0].mxu0
        %529 = vmatprep.mubr.bf16.mxu0 0
        %530 = vmatmul.mubr.bf16.gmra.mrb[0].mxu0 %v465
        %v531 = vpop.f32.mrb[0].mxu0
        %v532 = vadd.f32 0.0, %v531
        %v533 = vpop.f32.mrb[0].mxu0
        %v534 = vpop.f32.mrb[0].mxu0
        %v535 = vadd.f32 0.0, %v534
        %v536 = vpop.f32.mrb[0].mxu0
        %537 = vmatprep.mubr.bf16.mxu0 0
        %538 = vmatmul.mubr.bf16.gmra.mrb[0].mxu0 %v468
        %v539 = vpop.f32.mrb[0].mxu0
        %v540 = vadd.f32 0.0, %v539
        %v541 = vpop.f32.mrb[0].mxu0
        %v542 = vpop.f32.mrb[0].mxu0
        %v543 = vadd.f32 0.0, %v542
        %v544 = vpop.f32.mrb[0].mxu0
        %545 = vmatprep.mubr.bf16.mxu0 0
        %546 = vmatmul.mubr.bf16.gmra.mrb[0].mxu0 %v471
        %v547 = vpop.f32.mrb[0].mxu0
        %v548 = vadd.f32 0.0, %v547
        %v549 = vpop.f32.mrb[0].mxu0
        %v550 = vpop.f32.mrb[0].mxu0
        %v551 = vadd.f32 0.0, %v550
        %v552 = vpop.f32.mrb[0].mxu0
        %553 = vmatprep.mubr.bf16.mxu0 0
        %554 = vmatmul.mubr.bf16.gmra.mrb[0].mxu0 %v474
        %v555 = vpop.f32.mrb[0].mxu0
        %v556 = vadd.f32 0.0, %v555
        %v557 = vpop.f32.mrb[0].mxu0
        %v558 = vpop.f32.mrb[0].mxu0
        %v559 = vadd.f32 0.0, %v558
        %v560 = vpop.f32.mrb[0].mxu0
        %561 = vmatprep.mubr.bf16.mxu0 0
        %562 = vmatmul.mubr.bf16.gmra.mrb[0].mxu0 %v477
        %v563 = vpop.f32.mrb[0].mxu0
        %v564 = vadd.f32 0.0, %v563
        %v565 = vpop.f32.mrb[0].mxu0
        %v566 = vpop.f32.mrb[0].mxu0
        %v567 = vadd.f32 0.0, %v566
        %v568 = vpop.f32.mrb[0].mxu0
        %569 = vmatprep.mubr.bf16.mxu0 0
        %570 = vmatmul.mubr.bf16.gmra.mrb[0].mxu0 %v480
        %v571 = vpop.f32.mrb[0].mxu0
        %v572 = vadd.f32 0.0, %v571
        %v573 = vpop.f32.mrb[0].mxu0
        %v574 = vpop.f32.mrb[0].mxu0
        %v575 = vadd.f32 0.0, %v574
        %v576 = vpop.f32.mrb[0].mxu0
        %577 = vmatprep.mubr.bf16.mxu0 0
        %578 = vmatmul.mubr.bf16.gmra.mrb[0].mxu0 %v483
        %v579 = vpop.f32.mrb[0].mxu0
        %v580 = vadd.f32 0.0, %v579
        %v581 = vpop.f32.mrb[0].mxu0
        %v582 = vpop.f32.mrb[0].mxu0
        %v583 = vadd.f32 0.0, %v582
        %v584 = vpop.f32.mrb[0].mxu0
        %585 = vdwg.mxu0
        %v602 = vunpack.c.l.b16 %v367
        %v603 = vunpack.c.l.b16 %v368
        %v604 = vunpack.c.l.b16 %v369
        %v605 = vunpack.c.l.b16 %v370
        %v606 = vunpack.c.l.b16 %v371
        %v607 = vunpack.c.l.b16 %v372
        %v608 = vunpack.c.l.b16 %v373
        %v609 = vunpack.c.l.b16 %v374
        %v610 = vunpack.c.l.b16 %v375
        %v611 = vunpack.c.l.b16 %v376
        %v612 = vunpack.c.l.b16 %v377
        %v613 = vunpack.c.l.b16 %v378
        %v614 = vunpack.c.l.b16 %v379
        %v615 = vunpack.c.l.b16 %v380
        %v616 = vunpack.c.l.b16 %v381
        %v617 = vunpack.c.l.b16 %v382
        %v618 = vpack.c.b16 %v603, %v602
        %v619 = vpack.c.b16 %v605, %v604
        %v620 = vpack.c.b16 %v607, %v606
        %v621 = vpack.c.b16 %v609, %v608
        %v622 = vpack.c.b16 %v611, %v610
        %v623 = vpack.c.b16 %v613, %v612
        %v624 = vpack.c.b16 %v615, %v614
        %v625 = vpack.c.b16 %v617, %v616
        %v627 = vsel %vm460, %v618, 0
        %v630 = vsel %vm460, %v619, 0
        %v633 = vsel %vm460, %v620, 0
        %v636 = vsel %vm460, %v621, 0
        %v639 = vsel %vm460, %v622, 0
        %v642 = vsel %vm460, %v623, 0
        %v645 = vsel %vm460, %v624, 0
        %v648 = vsel %vm460, %v625, 0
        %v651 = vsel %vm485, %v365, 0
        %653 = vmatprep.subr.bf16.mxu0 0
        %654 = vmatpush1.bf16.msra.mxu0 %v651
        %655 = vmatprep.subr.bf16.mxu0 0
        %656 = vmatpush1.bf16.msra.mxu0 0
        %657 = vmatprep.subr.bf16.mxu0 0
        %658 = vmatpush1.bf16.msra.mxu0 0
        %659 = vmatprep.subr.bf16.mxu0 0
        %660 = vmatpush1.bf16.msra.mxu0 0
        %661 = vmatprep.subr.bf16.mxu0 0
        %662 = vmatpush1.bf16.msra.mxu0 0
        %663 = vmatprep.subr.bf16.mxu0 0
        %664 = vmatpush1.bf16.msra.mxu0 0
        %665 = vmatprep.subr.bf16.mxu0 0
        %666 = vmatpush1.bf16.msra.mxu0 0
        %667 = vmatprep.subr.bf16.mxu0 0
        %668 = vmatpush1.bf16.msra.mxu0 0
        %669 = vmatprep.subr.bf16.mxu0 0
        %670 = vmatpush1.bf16.msra.mxu0 0
        %671 = vmatprep.subr.bf16.mxu0 0
        %672 = vmatpush1.bf16.msra.mxu0 0
        %673 = vmatprep.subr.bf16.mxu0 0
        %674 = vmatpush1.bf16.msra.mxu0 0
        %675 = vmatprep.subr.bf16.mxu0 0
        %676 = vmatpush1.bf16.msra.mxu0 0
        %677 = vmatprep.subr.bf16.mxu0 0
        %678 = vmatpush1.bf16.msra.mxu0 0
        %679 = vmatprep.subr.bf16.mxu0 0
        %680 = vmatpush1.bf16.msra.mxu0 0
        %681 = vmatprep.subr.bf16.mxu0 0
        %682 = vmatpush1.bf16.msra.mxu0 0
        %683 = vmatprep.subr.bf16.mxu0 0
        %684 = vmatpush1.bf16.msra.mxu0 0
        %685 = vmatprep.mubr.bf16.mxu0 0
        %686 = vmatmul.mubr.bf16.gmra.mrb[0].mxu0 %v627
        %v687 = vpop.f32.mrb[0].mxu0
        %v688 = vadd.f32 %v524, %v687
        %v689 = vpop.f32.mrb[0].mxu0
        %v690 = vpop.f32.mrb[0].mxu0
        %v691 = vadd.f32 %v527, %v690
        %v692 = vpop.f32.mrb[0].mxu0
        %693 = vmatprep.mubr.bf16.mxu0 0
        %694 = vmatmul.mubr.bf16.gmra.mrb[0].mxu0 %v630
        %v695 = vpop.f32.mrb[0].mxu0
        %v696 = vadd.f32 %v532, %v695
        %v697 = vpop.f32.mrb[0].mxu0
        %v698 = vpop.f32.mrb[0].mxu0
        %v699 = vadd.f32 %v535, %v698
        %v700 = vpop.f32.mrb[0].mxu0
        %701 = vmatprep.mubr.bf16.mxu0 0
        %702 = vmatmul.mubr.bf16.gmra.mrb[0].mxu0 %v633
        %v703 = vpop.f32.mrb[0].mxu0
        %v704 = vadd.f32 %v540, %v703
        %v705 = vpop.f32.mrb[0].mxu0
        %v706 = vpop.f32.mrb[0].mxu0
        %v707 = vadd.f32 %v543, %v706
        %v708 = vpop.f32.mrb[0].mxu0
        %709 = vmatprep.mubr.bf16.mxu0 0
        %710 = vmatmul.mubr.bf16.gmra.mrb[0].mxu0 %v636
        %v711 = vpop.f32.mrb[0].mxu0
        %v712 = vadd.f32 %v548, %v711
        %v713 = vpop.f32.mrb[0].mxu0
        %v714 = vpop.f32.mrb[0].mxu0
        %v715 = vadd.f32 %v551, %v714
        %v716 = vpop.f32.mrb[0].mxu0
        %717 = vmatprep.mubr.bf16.mxu0 0
        %718 = vmatmul.mubr.bf16.gmra.mrb[0].mxu0 %v639
        %v719 = vpop.f32.mrb[0].mxu0
        %v720 = vadd.f32 %v556, %v719
        %v721 = vpop.f32.mrb[0].mxu0
        %v722 = vpop.f32.mrb[0].mxu0
        %v723 = vadd.f32 %v559, %v722
        %v724 = vpop.f32.mrb[0].mxu0
        %725 = vmatprep.mubr.bf16.mxu0 0
        %726 = vmatmul.mubr.bf16.gmra.mrb[0].mxu0 %v642
        %v727 = vpop.f32.mrb[0].mxu0
        %v728 = vadd.f32 %v564, %v727
        %v729 = vpop.f32.mrb[0].mxu0
        %v730 = vpop.f32.mrb[0].mxu0
        %v731 = vadd.f32 %v567, %v730
        %v732 = vpop.f32.mrb[0].mxu0
        %733 = vmatprep.mubr.bf16.mxu0 0
        %734 = vmatmul.mubr.bf16.gmra.mrb[0].mxu0 %v645
        %v735 = vpop.f32.mrb[0].mxu0
        %v736 = vadd.f32 %v572, %v735
        %v737 = vpop.f32.mrb[0].mxu0
        %v738 = vpop.f32.mrb[0].mxu0
        %v739 = vadd.f32 %v575, %v738
        %v740 = vpop.f32.mrb[0].mxu0
        %741 = vmatprep.mubr.bf16.mxu0 0
        %742 = vmatmul.mubr.bf16.gmra.mrb[0].mxu0 %v648
        %v743 = vpop.f32.mrb[0].mxu0
        %v744 = vadd.f32 %v580, %v743
        %v745 = vpop.f32.mrb[0].mxu0
        %v746 = vpop.f32.mrb[0].mxu0
        %v747 = vadd.f32 %v583, %v746
        %v748 = vpop.f32.mrb[0].mxu0
        %749 = vdwg.mxu0
        %vm750 = vsmask.f32 3328
        %vm751 = vsmask.f32 7440
        %vm752 = vmor %vm750, %vm751
        %v754 = vshrl.u32 %v367, 16
        %v756 = vrot.slane %v754, 4
        %v757 = vshll.u32 %v367, 16
        %v759 = vrot.slane %v757, 5
        %v760 = vor.u32 %v756, %v759
        %v761 = vrot.slane %v760, 4
        %v763 = vshll.u32 %v400, 16
        %v765 = vrot.slane %v763, 5
        %v766 = vsel %vm752, %v761, %v765
        %v768 = vshrl.u32 %v368, 16
        %v770 = vrot.slane %v768, 4
        %v771 = vshll.u32 %v368, 16
        %v773 = vrot.slane %v771, 5
        %v774 = vor.u32 %v770, %v773
        %v775 = vrot.slane %v774, 4
        %v777 = vshll.u32 %v401, 16
        %v779 = vrot.slane %v777, 5
        %v780 = vsel %vm752, %v775, %v779
        %v782 = vshrl.u32 %v369, 16
        %v784 = vrot.slane %v782, 4
        %v785 = vshll.u32 %v369, 16
        %v787 = vrot.slane %v785, 5
        %v788 = vor.u32 %v784, %v787
        %v789 = vrot.slane %v788, 4
        %v791 = vshll.u32 %v402, 16
        %v793 = vrot.slane %v791, 5
        %v794 = vsel %vm752, %v789, %v793
        %v796 = vshrl.u32 %v370, 16
        %v798 = vrot.slane %v796, 4
        %v799 = vshll.u32 %v370, 16
        %v801 = vrot.slane %v799, 5
        %v802 = vor.u32 %v798, %v801
        %v803 = vrot.slane %v802, 4
        %v805 = vshll.u32 %v403, 16
        %v807 = vrot.slane %v805, 5
        %v808 = vsel %vm752, %v803, %v807
        %v810 = vshrl.u32 %v371, 16
        %v812 = vrot.slane %v810, 4
        %v813 = vshll.u32 %v371, 16
        %v815 = vrot.slane %v813, 5
        %v816 = vor.u32 %v812, %v815
        %v817 = vrot.slane %v816, 4
        %v819 = vshll.u32 %v404, 16
        %v821 = vrot.slane %v819, 5
        %v822 = vsel %vm752, %v817, %v821
        %v824 = vshrl.u32 %v372, 16
        %v826 = vrot.slane %v824, 4
        %v827 = vshll.u32 %v372, 16
        %v829 = vrot.slane %v827, 5
        %v830 = vor.u32 %v826, %v829
        %v831 = vrot.slane %v830, 4
        %v833 = vshll.u32 %v405, 16
        %v835 = vrot.slane %v833, 5
        %v836 = vsel %vm752, %v831, %v835
        %v838 = vshrl.u32 %v373, 16
        %v840 = vrot.slane %v838, 4
        %v841 = vshll.u32 %v373, 16
        %v843 = vrot.slane %v841, 5
        %v844 = vor.u32 %v840, %v843
        %v845 = vrot.slane %v844, 4
        %v847 = vshll.u32 %v406, 16
        %v849 = vrot.slane %v847, 5
        %v850 = vsel %vm752, %v845, %v849
        %v852 = vshrl.u32 %v374, 16
        %v854 = vrot.slane %v852, 4
        %v855 = vshll.u32 %v374, 16
        %v857 = vrot.slane %v855, 5
        %v858 = vor.u32 %v854, %v857
        %v859 = vrot.slane %v858, 4
        %v861 = vshll.u32 %v407, 16
        %v863 = vrot.slane %v861, 5
        %v864 = vsel %vm752, %v859, %v863
        %v866 = vshrl.u32 %v375, 16
        %v868 = vrot.slane %v866, 4
        %v869 = vshll.u32 %v375, 16
        %v871 = vrot.slane %v869, 5
        %v872 = vor.u32 %v868, %v871
        %v873 = vrot.slane %v872, 4
        %v875 = vshll.u32 %v408, 16
        %v877 = vrot.slane %v875, 5
        %v878 = vsel %vm752, %v873, %v877
        %v880 = vshrl.u32 %v376, 16
        %v882 = vrot.slane %v880, 4
        %v883 = vshll.u32 %v376, 16
        %v885 = vrot.slane %v883, 5
        %v886 = vor.u32 %v882, %v885
        %v887 = vrot.slane %v886, 4
        %v889 = vshll.u32 %v409, 16
        %v891 = vrot.slane %v889, 5
        %v892 = vsel %vm752, %v887, %v891
        %v894 = vshrl.u32 %v377, 16
        %v896 = vrot.slane %v894, 4
        %v897 = vshll.u32 %v377, 16
        %v899 = vrot.slane %v897, 5
        %v900 = vor.u32 %v896, %v899
        %v901 = vrot.slane %v900, 4
        %v903 = vshll.u32 %v410, 16
        %v905 = vrot.slane %v903, 5
        %v906 = vsel %vm752, %v901, %v905
        %v908 = vshrl.u32 %v378, 16
        %v910 = vrot.slane %v908, 4
        %v911 = vshll.u32 %v378, 16
        %v913 = vrot.slane %v911, 5
        %v914 = vor.u32 %v910, %v913
        %v915 = vrot.slane %v914, 4
        %v917 = vshll.u32 %v411, 16
        %v919 = vrot.slane %v917, 5
        %v920 = vsel %vm752, %v915, %v919
        %v922 = vshrl.u32 %v379, 16
        %v924 = vrot.slane %v922, 4
        %v925 = vshll.u32 %v379, 16
        %v927 = vrot.slane %v925, 5
        %v928 = vor.u32 %v924, %v927
        %v929 = vrot.slane %v928, 4
        %v931 = vshll.u32 %v412, 16
        %v933 = vrot.slane %v931, 5
        %v934 = vsel %vm752, %v929, %v933
        %v936 = vshrl.u32 %v380, 16
        %v938 = vrot.slane %v936, 4
        %v939 = vshll.u32 %v380, 16
        %v941 = vrot.slane %v939, 5
        %v942 = vor.u32 %v938, %v941
        %v943 = vrot.slane %v942, 4
        %v945 = vshll.u32 %v413, 16
        %v947 = vrot.slane %v945, 5
        %v948 = vsel %vm752, %v943, %v947
        %v950 = vshrl.u32 %v381, 16
        %v952 = vrot.slane %v950, 4
        %v953 = vshll.u32 %v381, 16
        %v955 = vrot.slane %v953, 5
        %v956 = vor.u32 %v952, %v955
        %v957 = vrot.slane %v956, 4
        %v959 = vshll.u32 %v414, 16
        %v961 = vrot.slane %v959, 5
        %v962 = vsel %vm752, %v957, %v961
        %v964 = vshrl.u32 %v382, 16
        %v966 = vrot.slane %v964, 4
        %v967 = vshll.u32 %v382, 16
        %v969 = vrot.slane %v967, 5
        %v970 = vor.u32 %v966, %v969
        %v971 = vrot.slane %v970, 4
        %v973 = vshll.u32 %v415, 16
        %v975 = vrot.slane %v973, 5
        %v976 = vsel %vm752, %v971, %v975
        %v977 = vunpack.c.l.b16 %v766
        %v978 = vunpack.c.l.b16 %v780
        %v979 = vunpack.c.l.b16 %v794
        %v980 = vunpack.c.l.b16 %v808
        %v981 = vunpack.c.l.b16 %v822
        %v982 = vunpack.c.l.b16 %v836
        %v983 = vunpack.c.l.b16 %v850
        %v984 = vunpack.c.l.b16 %v864
        %v985 = vunpack.c.l.b16 %v878
        %v986 = vunpack.c.l.b16 %v892
        %v987 = vunpack.c.l.b16 %v906
        %v988 = vunpack.c.l.b16 %v920
        %v989 = vunpack.c.l.b16 %v934
        %v990 = vunpack.c.l.b16 %v948
        %v991 = vunpack.c.l.b16 %v962
        %v992 = vunpack.c.l.b16 %v976
        %v993 = vpack.c.b16 %v978, %v977
        %v994 = vpack.c.b16 %v980, %v979
        %v995 = vpack.c.b16 %v982, %v981
        %v996 = vpack.c.b16 %v984, %v983
        %v997 = vpack.c.b16 %v986, %v985
        %v998 = vpack.c.b16 %v988, %v987
        %v999 = vpack.c.b16 %v990, %v989
        %v1000 = vpack.c.b16 %v992, %v991
        %v1002 = vsel %vm460, %v993, 0
        %v1005 = vsel %vm460, %v994, 0
        %v1008 = vsel %vm460, %v995, 0
        %v1011 = vsel %vm460, %v996, 0
        %v1014 = vsel %vm460, %v997, 0
        %v1017 = vsel %vm460, %v998, 0
        %v1020 = vsel %vm460, %v999, 0
        %v1023 = vsel %vm460, %v1000, 0
        %v1026 = vsel %vm485, %v366, 0
        %1028 = vmatprep.subr.bf16.mxu0 0
        %1029 = vmatpush1.bf16.msra.mxu0 %v1026
        %1030 = vmatprep.subr.bf16.mxu0 0
        %1031 = vmatpush1.bf16.msra.mxu0 0
        %1032 = vmatprep.subr.bf16.mxu0 0
        %1033 = vmatpush1.bf16.msra.mxu0 0
        %1034 = vmatprep.subr.bf16.mxu0 0
        %1035 = vmatpush1.bf16.msra.mxu0 0
        %1036 = vmatprep.subr.bf16.mxu0 0
        %1037 = vmatpush1.bf16.msra.mxu0 0
        %1038 = vmatprep.subr.bf16.mxu0 0
        %1039 = vmatpush1.bf16.msra.mxu0 0
        %1040 = vmatprep.subr.bf16.mxu0 0
        %1041 = vmatpush1.bf16.msra.mxu0 0
        %1042 = vmatprep.subr.bf16.mxu0 0
        %1043 = vmatpush1.bf16.msra.mxu0 0
        %1044 = vmatprep.subr.bf16.mxu0 0
        %1045 = vmatpush1.bf16.msra.mxu0 0
        %1046 = vmatprep.subr.bf16.mxu0 0
        %1047 = vmatpush1.bf16.msra.mxu0 0
        %1048 = vmatprep.subr.bf16.mxu0 0
        %1049 = vmatpush1.bf16.msra.mxu0 0
        %1050 = vmatprep.subr.bf16.mxu0 0
        %1051 = vmatpush1.bf16.msra.mxu0 0
        %1052 = vmatprep.subr.bf16.mxu0 0
        %1053 = vmatpush1.bf16.msra.mxu0 0
        %1054 = vmatprep.subr.bf16.mxu0 0
        %1055 = vmatpush1.bf16.msra.mxu0 0
        %1056 = vmatprep.subr.bf16.mxu0 0
        %1057 = vmatpush1.bf16.msra.mxu0 0
        %1058 = vmatprep.subr.bf16.mxu0 0
        %1059 = vmatpush1.bf16.msra.mxu0 0
        %1060 = vmatprep.mubr.bf16.mxu0 0
        %1061 = vmatmul.mubr.bf16.gmra.mrb[0].mxu0 %v1002
        %v1062 = vpop.f32.mrb[0].mxu0
        %v1063 = vadd.f32 0.0, %v1062
        %v1064 = vpop.f32.mrb[0].mxu0
        %v1065 = vpop.f32.mrb[0].mxu0
        %v1066 = vadd.f32 0.0, %v1065
        %v1067 = vpop.f32.mrb[0].mxu0
        %1068 = vmatprep.mubr.bf16.mxu0 0
        %1069 = vmatmul.mubr.bf16.gmra.mrb[0].mxu0 %v1005
        %v1070 = vpop.f32.mrb[0].mxu0
        %v1071 = vadd.f32 0.0, %v1070
        %v1072 = vpop.f32.mrb[0].mxu0
        %v1073 = vpop.f32.mrb[0].mxu0
        %v1074 = vadd.f32 0.0, %v1073
        %v1075 = vpop.f32.mrb[0].mxu0
        %1076 = vmatprep.mubr.bf16.mxu0 0
        %1077 = vmatmul.mubr.bf16.gmra.mrb[0].mxu0 %v1008
        %v1078 = vpop.f32.mrb[0].mxu0
        %v1079 = vadd.f32 0.0, %v1078
        %v1080 = vpop.f32.mrb[0].mxu0
        %v1081 = vpop.f32.mrb[0].mxu0
        %v1082 = vadd.f32 0.0, %v1081
        %v1083 = vpop.f32.mrb[0].mxu0
        %1084 = vmatprep.mubr.bf16.mxu0 0
        %1085 = vmatmul.mubr.bf16.gmra.mrb[0].mxu0 %v1011
        %v1086 = vpop.f32.mrb[0].mxu0
        %v1087 = vadd.f32 0.0, %v1086
        %v1088 = vpop.f32.mrb[0].mxu0
        %v1089 = vpop.f32.mrb[0].mxu0
        %v1090 = vadd.f32 0.0, %v1089
        %v1091 = vpop.f32.mrb[0].mxu0
        %1092 = vmatprep.mubr.bf16.mxu0 0
        %1093 = vmatmul.mubr.bf16.gmra.mrb[0].mxu0 %v1014
        %v1094 = vpop.f32.mrb[0].mxu0
        %v1095 = vadd.f32 0.0, %v1094
        %v1096 = vpop.f32.mrb[0].mxu0
        %v1097 = vpop.f32.mrb[0].mxu0
        %v1098 = vadd.f32 0.0, %v1097
        %v1099 = vpop.f32.mrb[0].mxu0
        %1100 = vmatprep.mubr.bf16.mxu0 0
        %1101 = vmatmul.mubr.bf16.gmra.mrb[0].mxu0 %v1017
        %v1102 = vpop.f32.mrb[0].mxu0
        %v1103 = vadd.f32 0.0, %v1102
        %v1104 = vpop.f32.mrb[0].mxu0
        %v1105 = vpop.f32.mrb[0].mxu0
        %v1106 = vadd.f32 0.0, %v1105
        %v1107 = vpop.f32.mrb[0].mxu0
        %1108 = vmatprep.mubr.bf16.mxu0 0
        %1109 = vmatmul.mubr.bf16.gmra.mrb[0].mxu0 %v1020
        %v1110 = vpop.f32.mrb[0].mxu0
        %v1111 = vadd.f32 0.0, %v1110
        %v1112 = vpop.f32.mrb[0].mxu0
        %v1113 = vpop.f32.mrb[0].mxu0
        %v1114 = vadd.f32 0.0, %v1113
        %v1115 = vpop.f32.mrb[0].mxu0
        %1116 = vmatprep.mubr.bf16.mxu0 0
        %1117 = vmatmul.mubr.bf16.gmra.mrb[0].mxu0 %v1023
        %v1118 = vpop.f32.mrb[0].mxu0
        %v1119 = vadd.f32 0.0, %v1118
        %v1120 = vpop.f32.mrb[0].mxu0
        %v1121 = vpop.f32.mrb[0].mxu0
        %v1122 = vadd.f32 0.0, %v1121
        %v1123 = vpop.f32.mrb[0].mxu0
        %1124 = vdwg.mxu0
        %v1125 = vadd.f32 %v688, %v1063
        %v1126 = vadd.f32 %v691, %v1066
        %v1127 = vadd.f32 %v696, %v1071
        %v1128 = vadd.f32 %v699, %v1074
        %v1129 = vadd.f32 %v704, %v1079
        %v1130 = vadd.f32 %v707, %v1082
        %v1131 = vadd.f32 %v712, %v1087
        %v1132 = vadd.f32 %v715, %v1090
        %v1133 = vadd.f32 %v720, %v1095
        %v1134 = vadd.f32 %v723, %v1098
        %v1135 = vadd.f32 %v728, %v1103
        %v1136 = vadd.f32 %v731, %v1106
        %v1137 = vadd.f32 %v736, %v1111
        %v1138 = vadd.f32 %v739, %v1114
        %v1139 = vadd.f32 %v744, %v1119
        %v1140 = vadd.f32 %v747, %v1122
        %s1141 = scalar_lea.vmem %s1, 8
        %v1142 = vld [vmem:[%s1141] sm:$0xf]
        %v1143 = vld [vmem:[%s1141 + $0x4] sm:$0x3]
        %s1144 = scalar_lea.vmem %s361, 144
        %v1145 = vld [vmem:[%s1144] sm:$0xf]
        %v1146 = vld [vmem:[%s1144 + $0x8] sm:$0xf]
        %v1147 = vld [vmem:[%s1144 + $0x10] sm:$0xf]
        %v1148 = vld [vmem:[%s1144 + $0x18] sm:$0xf]
        %v1149 = vld [vmem:[%s1144 + $0x20] sm:$0xf]
        %v1150 = vld [vmem:[%s1144 + $0x28] sm:$0xf]
        %v1151 = vld [vmem:[%s1144 + $0x30] sm:$0xf]
        %v1152 = vld [vmem:[%s1144 + $0x38] sm:$0xf]
        %v1153 = vld [vmem:[%s1144 + $0x120] sm:$0xf]
        %v1154 = vld [vmem:[%s1144 + $0x128] sm:$0xf]
        %v1155 = vld [vmem:[%s1144 + $0x130] sm:$0xf]
        %v1156 = vld [vmem:[%s1144 + $0x138] sm:$0xf]
        %v1157 = vld [vmem:[%s1144 + $0x140] sm:$0xf]
        %v1158 = vld [vmem:[%s1144 + $0x148] sm:$0xf]
        %v1159 = vld [vmem:[%s1144 + $0x150] sm:$0xf]
        %v1160 = vld [vmem:[%s1144 + $0x158] sm:$0xf]
        %s1161 = scalar_lea.vmem %s361, 216
        %v1162 = vld [vmem:[%s1161] sm:$0xf]
        %v1163 = vld [vmem:[%s1161 + $0x8] sm:$0xf]
        %v1164 = vld [vmem:[%s1161 + $0x10] sm:$0xf]
        %v1165 = vld [vmem:[%s1161 + $0x18] sm:$0xf]
        %v1166 = vld [vmem:[%s1161 + $0x20] sm:$0xf]
        %v1167 = vld [vmem:[%s1161 + $0x28] sm:$0xf]
        %v1168 = vld [vmem:[%s1161 + $0x30] sm:$0xf]
        %v1169 = vld [vmem:[%s1161 + $0x38] sm:$0xf]
        %v1170 = vld [vmem:[%s1161 + $0x120] sm:$0xf]
        %v1171 = vld [vmem:[%s1161 + $0x128] sm:$0xf]
        %v1172 = vld [vmem:[%s1161 + $0x130] sm:$0xf]
        %v1173 = vld [vmem:[%s1161 + $0x138] sm:$0xf]
        %v1174 = vld [vmem:[%s1161 + $0x140] sm:$0xf]
        %v1175 = vld [vmem:[%s1161 + $0x148] sm:$0xf]
        %v1176 = vld [vmem:[%s1161 + $0x150] sm:$0xf]
        %v1177 = vld [vmem:[%s1161 + $0x158] sm:$0xf]
        %v1178 = vld [vmem:[%s1144 + $0x4] sm:$0x1]
        %v1179 = vld [vmem:[%s1144 + $0xc] sm:$0x1]
        %v1180 = vld [vmem:[%s1144 + $0x14] sm:$0x1]
        %v1181 = vld [vmem:[%s1144 + $0x1c] sm:$0x1]
        %v1182 = vld [vmem:[%s1144 + $0x24] sm:$0x1]
        %v1183 = vld [vmem:[%s1144 + $0x2c] sm:$0x1]
        %v1184 = vld [vmem:[%s1144 + $0x34] sm:$0x1]
        %v1185 = vld [vmem:[%s1144 + $0x3c] sm:$0x1]
        %v1186 = vld [vmem:[%s1144 + $0x124] sm:$0x1]
        %v1187 = vld [vmem:[%s1144 + $0x12c] sm:$0x1]
        %v1188 = vld [vmem:[%s1144 + $0x134] sm:$0x1]
        %v1189 = vld [vmem:[%s1144 + $0x13c] sm:$0x1]
        %v1190 = vld [vmem:[%s1144 + $0x144] sm:$0x1]
        %v1191 = vld [vmem:[%s1144 + $0x14c] sm:$0x1]
        %v1192 = vld [vmem:[%s1144 + $0x154] sm:$0x1]
        %v1193 = vld [vmem:[%s1144 + $0x15c] sm:$0x1]
        %v1210 = vunpack.c.l.b16 %v1145
        %v1211 = vunpack.c.l.b16 %v1146
        %v1212 = vunpack.c.l.b16 %v1147
        %v1213 = vunpack.c.l.b16 %v1148
        %v1214 = vunpack.c.l.b16 %v1149
        %v1215 = vunpack.c.l.b16 %v1150
        %v1216 = vunpack.c.l.b16 %v1151
        %v1217 = vunpack.c.l.b16 %v1152
        %v1218 = vunpack.c.l.b16 %v1153
        %v1219 = vunpack.c.l.b16 %v1154
        %v1220 = vunpack.c.l.b16 %v1155
        %v1221 = vunpack.c.l.b16 %v1156
        %v1222 = vunpack.c.l.b16 %v1157
        %v1223 = vunpack.c.l.b16 %v1158
        %v1224 = vunpack.c.l.b16 %v1159
        %v1225 = vunpack.c.l.b16 %v1160
        %v1226 = vpack.c.b16 %v1211, %v1210
        %v1227 = vpack.c.b16 %v1213, %v1212
        %v1228 = vpack.c.b16 %v1215, %v1214
        %v1229 = vpack.c.b16 %v1217, %v1216
        %v1230 = vpack.c.b16 %v1219, %v1218
        %v1231 = vpack.c.b16 %v1221, %v1220
        %v1232 = vpack.c.b16 %v1223, %v1222
        %v1233 = vpack.c.b16 %v1225, %v1224
        %v1235 = vsel %vm460, %v1226, 0
        %v1238 = vsel %vm460, %v1227, 0
        %v1241 = vsel %vm460, %v1228, 0
        %v1244 = vsel %vm460, %v1229, 0
        %v1247 = vsel %vm460, %v1230, 0
        %v1250 = vsel %vm460, %v1231, 0
        %v1253 = vsel %vm460, %v1232, 0
        %v1256 = vsel %vm460, %v1233, 0
        %v1259 = vsel %vm485, %v1142, 0
        %1261 = vmatprep.subr.bf16.mxu0 0
        %1262 = vmatpush1.bf16.msra.mxu0 %v1259
        %1263 = vmatprep.subr.bf16.mxu0 0
        %1264 = vmatpush1.bf16.msra.mxu0 0
        %1265 = vmatprep.subr.bf16.mxu0 0
        %1266 = vmatpush1.bf16.msra.mxu0 0
        %1267 = vmatprep.subr.bf16.mxu0 0
        %1268 = vmatpush1.bf16.msra.mxu0 0
        %1269 = vmatprep.subr.bf16.mxu0 0
        %1270 = vmatpush1.bf16.msra.mxu0 0
        %1271 = vmatprep.subr.bf16.mxu0 0
        %1272 = vmatpush1.bf16.msra.mxu0 0
        %1273 = vmatprep.subr.bf16.mxu0 0
        %1274 = vmatpush1.bf16.msra.mxu0 0
        %1275 = vmatprep.subr.bf16.mxu0 0
        %1276 = vmatpush1.bf16.msra.mxu0 0
        %1277 = vmatprep.subr.bf16.mxu0 0
        %1278 = vmatpush1.bf16.msra.mxu0 0
        %1279 = vmatprep.subr.bf16.mxu0 0
        %1280 = vmatpush1.bf16.msra.mxu0 0
        %1281 = vmatprep.subr.bf16.mxu0 0
        %1282 = vmatpush1.bf16.msra.mxu0 0
        %1283 = vmatprep.subr.bf16.mxu0 0
        %1284 = vmatpush1.bf16.msra.mxu0 0
        %1285 = vmatprep.subr.bf16.mxu0 0
        %1286 = vmatpush1.bf16.msra.mxu0 0
        %1287 = vmatprep.subr.bf16.mxu0 0
        %1288 = vmatpush1.bf16.msra.mxu0 0
        %1289 = vmatprep.subr.bf16.mxu0 0
        %1290 = vmatpush1.bf16.msra.mxu0 0
        %1291 = vmatprep.subr.bf16.mxu0 0
        %1292 = vmatpush1.bf16.msra.mxu0 0
        %1293 = vmatprep.mubr.bf16.mxu0 0
        %1294 = vmatmul.mubr.bf16.gmra.mrb[0].mxu0 %v1235
        %v1295 = vpop.f32.mrb[0].mxu0
        %v1296 = vadd.f32 0.0, %v1295
        %v1297 = vpop.f32.mrb[0].mxu0
        %v1298 = vpop.f32.mrb[0].mxu0
        %v1299 = vadd.f32 0.0, %v1298
        %v1300 = vpop.f32.mrb[0].mxu0
        %1301 = vmatprep.mubr.bf16.mxu0 0
        %1302 = vmatmul.mubr.bf16.gmra.mrb[0].mxu0 %v1238
        %v1303 = vpop.f32.mrb[0].mxu0
        %v1304 = vadd.f32 0.0, %v1303
        %v1305 = vpop.f32.mrb[0].mxu0
        %v1306 = vpop.f32.mrb[0].mxu0
        %v1307 = vadd.f32 0.0, %v1306
        %v1308 = vpop.f32.mrb[0].mxu0
        %1309 = vmatprep.mubr.bf16.mxu0 0
        %1310 = vmatmul.mubr.bf16.gmra.mrb[0].mxu0 %v1241
        %v1311 = vpop.f32.mrb[0].mxu0
        %v1312 = vadd.f32 0.0, %v1311
        %v1313 = vpop.f32.mrb[0].mxu0
        %v1314 = vpop.f32.mrb[0].mxu0
        %v1315 = vadd.f32 0.0, %v1314
        %v1316 = vpop.f32.mrb[0].mxu0
        %1317 = vmatprep.mubr.bf16.mxu0 0
        %1318 = vmatmul.mubr.bf16.gmra.mrb[0].mxu0 %v1244
        %v1319 = vpop.f32.mrb[0].mxu0
        %v1320 = vadd.f32 0.0, %v1319
        %v1321 = vpop.f32.mrb[0].mxu0
        %v1322 = vpop.f32.mrb[0].mxu0
        %v1323 = vadd.f32 0.0, %v1322
        %v1324 = vpop.f32.mrb[0].mxu0
        %1325 = vmatprep.mubr.bf16.mxu0 0
        %1326 = vmatmul.mubr.bf16.gmra.mrb[0].mxu0 %v1247
        %v1327 = vpop.f32.mrb[0].mxu0
        %v1328 = vadd.f32 0.0, %v1327
        %v1329 = vpop.f32.mrb[0].mxu0
        %v1330 = vpop.f32.mrb[0].mxu0
        %v1331 = vadd.f32 0.0, %v1330
        %v1332 = vpop.f32.mrb[0].mxu0
        %1333 = vmatprep.mubr.bf16.mxu0 0
        %1334 = vmatmul.mubr.bf16.gmra.mrb[0].mxu0 %v1250
        %v1335 = vpop.f32.mrb[0].mxu0
        %v1336 = vadd.f32 0.0, %v1335
        %v1337 = vpop.f32.mrb[0].mxu0
        %v1338 = vpop.f32.mrb[0].mxu0
        %v1339 = vadd.f32 0.0, %v1338
        %v1340 = vpop.f32.mrb[0].mxu0
        %1341 = vmatprep.mubr.bf16.mxu0 0
        %1342 = vmatmul.mubr.bf16.gmra.mrb[0].mxu0 %v1253
        %v1343 = vpop.f32.mrb[0].mxu0
        %v1344 = vadd.f32 0.0, %v1343
        %v1345 = vpop.f32.mrb[0].mxu0
        %v1346 = vpop.f32.mrb[0].mxu0
        %v1347 = vadd.f32 0.0, %v1346
        %v1348 = vpop.f32.mrb[0].mxu0
        %1349 = vmatprep.mubr.bf16.mxu0 0
        %1350 = vmatmul.mubr.bf16.gmra.mrb[0].mxu0 %v1256
        %v1351 = vpop.f32.mrb[0].mxu0
        %v1352 = vadd.f32 0.0, %v1351
        %v1353 = vpop.f32.mrb[0].mxu0
        %v1354 = vpop.f32.mrb[0].mxu0
        %v1355 = vadd.f32 0.0, %v1354
        %v1356 = vpop.f32.mrb[0].mxu0
        %1357 = vdwg.mxu0
        %v1358 = vadd.f32 %v1125, %v1296
        %v1359 = vadd.f32 %v1126, %v1299
        %v1360 = vadd.f32 %v1127, %v1304
        %v1361 = vadd.f32 %v1128, %v1307
        %v1362 = vadd.f32 %v1129, %v1312
        %v1363 = vadd.f32 %v1130, %v1315
        %v1364 = vadd.f32 %v1131, %v1320
        %v1365 = vadd.f32 %v1132, %v1323
        %v1366 = vadd.f32 %v1133, %v1328
        %v1367 = vadd.f32 %v1134, %v1331
        %v1368 = vadd.f32 %v1135, %v1336
        %v1369 = vadd.f32 %v1136, %v1339
        %v1370 = vadd.f32 %v1137, %v1344
        %v1371 = vadd.f32 %v1138, %v1347
        %v1372 = vadd.f32 %v1139, %v1352
        %v1373 = vadd.f32 %v1140, %v1355
        %v1390 = vunpack.c.l.b16 %v1162
        %v1391 = vunpack.c.l.b16 %v1163
        %v1392 = vunpack.c.l.b16 %v1164
        %v1393 = vunpack.c.l.b16 %v1165
        %v1394 = vunpack.c.l.b16 %v1166
        %v1395 = vunpack.c.l.b16 %v1167
        %v1396 = vunpack.c.l.b16 %v1168
        %v1397 = vunpack.c.l.b16 %v1169
        %v1398 = vunpack.c.l.b16 %v1170
        %v1399 = vunpack.c.l.b16 %v1171
        %v1400 = vunpack.c.l.b16 %v1172
        %v1401 = vunpack.c.l.b16 %v1173
        %v1402 = vunpack.c.l.b16 %v1174
        %v1403 = vunpack.c.l.b16 %v1175
        %v1404 = vunpack.c.l.b16 %v1176
        %v1405 = vunpack.c.l.b16 %v1177
        %v1406 = vpack.c.b16 %v1391, %v1390
        %v1407 = vpack.c.b16 %v1393, %v1392
        %v1408 = vpack.c.b16 %v1395, %v1394
        %v1409 = vpack.c.b16 %v1397, %v1396
        %v1410 = vpack.c.b16 %v1399, %v1398
        %v1411 = vpack.c.b16 %v1401, %v1400
        %v1412 = vpack.c.b16 %v1403, %v1402
        %v1413 = vpack.c.b16 %v1405, %v1404
        %v1415 = vunpack.c.l.b16 %v1142
        %v1416 = vpack.c.b16 %v1415, %v1415
        %v1417 = vrot.slane %v1416, 2
        %v1419 = vsel %vm460, %v1406, 0
        %v1422 = vsel %vm460, %v1407, 0
        %v1425 = vsel %vm460, %v1408, 0
        %v1428 = vsel %vm460, %v1409, 0
        %v1431 = vsel %vm460, %v1410, 0
        %v1434 = vsel %vm460, %v1411, 0
        %v1437 = vsel %vm460, %v1412, 0
        %v1440 = vsel %vm460, %v1413, 0
        %v1443 = vsel %vm485, %v1417, 0
        %1445 = vmatprep.subr.bf16.mxu0 0
        %1446 = vmatpush1.bf16.msra.mxu0 %v1443
        %1447 = vmatprep.subr.bf16.mxu0 0
        %1448 = vmatpush1.bf16.msra.mxu0 0
        %1449 = vmatprep.subr.bf16.mxu0 0
        %1450 = vmatpush1.bf16.msra.mxu0 0
        %1451 = vmatprep.subr.bf16.mxu0 0
        %1452 = vmatpush1.bf16.msra.mxu0 0
        %1453 = vmatprep.subr.bf16.mxu0 0
        %1454 = vmatpush1.bf16.msra.mxu0 0
        %1455 = vmatprep.subr.bf16.mxu0 0
        %1456 = vmatpush1.bf16.msra.mxu0 0
        %1457 = vmatprep.subr.bf16.mxu0 0
        %1458 = vmatpush1.bf16.msra.mxu0 0
        %1459 = vmatprep.subr.bf16.mxu0 0
        %1460 = vmatpush1.bf16.msra.mxu0 0
        %1461 = vmatprep.subr.bf16.mxu0 0
        %1462 = vmatpush1.bf16.msra.mxu0 0
        %1463 = vmatprep.subr.bf16.mxu0 0
        %1464 = vmatpush1.bf16.msra.mxu0 0
        %1465 = vmatprep.subr.bf16.mxu0 0
        %1466 = vmatpush1.bf16.msra.mxu0 0
        %1467 = vmatprep.subr.bf16.mxu0 0
        %1468 = vmatpush1.bf16.msra.mxu0 0
        %1469 = vmatprep.subr.bf16.mxu0 0
        %1470 = vmatpush1.bf16.msra.mxu0 0
        %1471 = vmatprep.subr.bf16.mxu0 0
        %1472 = vmatpush1.bf16.msra.mxu0 0
        %1473 = vmatprep.subr.bf16.mxu0 0
        %1474 = vmatpush1.bf16.msra.mxu0 0
        %1475 = vmatprep.subr.bf16.mxu0 0
        %1476 = vmatpush1.bf16.msra.mxu0 0
        %1477 = vmatprep.mubr.bf16.mxu0 0
        %1478 = vmatmul.mubr.bf16.gmra.mrb[0].mxu0 %v1419
        %v1479 = vpop.f32.mrb[0].mxu0
        %v1480 = vadd.f32 0.0, %v1479
        %v1481 = vpop.f32.mrb[0].mxu0
        %v1482 = vpop.f32.mrb[0].mxu0
        %v1483 = vadd.f32 0.0, %v1482
        %v1484 = vpop.f32.mrb[0].mxu0
        %1485 = vmatprep.mubr.bf16.mxu0 0
        %1486 = vmatmul.mubr.bf16.gmra.mrb[0].mxu0 %v1422
        %v1487 = vpop.f32.mrb[0].mxu0
        %v1488 = vadd.f32 0.0, %v1487
        %v1489 = vpop.f32.mrb[0].mxu0
        %v1490 = vpop.f32.mrb[0].mxu0
        %v1491 = vadd.f32 0.0, %v1490
        %v1492 = vpop.f32.mrb[0].mxu0
        %1493 = vmatprep.mubr.bf16.mxu0 0
        %1494 = vmatmul.mubr.bf16.gmra.mrb[0].mxu0 %v1425
        %v1495 = vpop.f32.mrb[0].mxu0
        %v1496 = vadd.f32 0.0, %v1495
        %v1497 = vpop.f32.mrb[0].mxu0
        %v1498 = vpop.f32.mrb[0].mxu0
        %v1499 = vadd.f32 0.0, %v1498
        %v1500 = vpop.f32.mrb[0].mxu0
        %1501 = vmatprep.mubr.bf16.mxu0 0
        %1502 = vmatmul.mubr.bf16.gmra.mrb[0].mxu0 %v1428
        %v1503 = vpop.f32.mrb[0].mxu0
        %v1504 = vadd.f32 0.0, %v1503
        %v1505 = vpop.f32.mrb[0].mxu0
        %v1506 = vpop.f32.mrb[0].mxu0
        %v1507 = vadd.f32 0.0, %v1506
        %v1508 = vpop.f32.mrb[0].mxu0
        %1509 = vmatprep.mubr.bf16.mxu0 0
        %1510 = vmatmul.mubr.bf16.gmra.mrb[0].mxu0 %v1431
        %v1511 = vpop.f32.mrb[0].mxu0
        %v1512 = vadd.f32 0.0, %v1511
        %v1513 = vpop.f32.mrb[0].mxu0
        %v1514 = vpop.f32.mrb[0].mxu0
        %v1515 = vadd.f32 0.0, %v1514
        %v1516 = vpop.f32.mrb[0].mxu0
        %1517 = vmatprep.mubr.bf16.mxu0 0
        %1518 = vmatmul.mubr.bf16.gmra.mrb[0].mxu0 %v1434
        %v1519 = vpop.f32.mrb[0].mxu0
        %v1520 = vadd.f32 0.0, %v1519
        %v1521 = vpop.f32.mrb[0].mxu0
        %v1522 = vpop.f32.mrb[0].mxu0
        %v1523 = vadd.f32 0.0, %v1522
        %v1524 = vpop.f32.mrb[0].mxu0
        %1525 = vmatprep.mubr.bf16.mxu0 0
        %1526 = vmatmul.mubr.bf16.gmra.mrb[0].mxu0 %v1437
        %v1527 = vpop.f32.mrb[0].mxu0
        %v1528 = vadd.f32 0.0, %v1527
        %v1529 = vpop.f32.mrb[0].mxu0
        %v1530 = vpop.f32.mrb[0].mxu0
        %v1531 = vadd.f32 0.0, %v1530
        %v1532 = vpop.f32.mrb[0].mxu0
        %1533 = vmatprep.mubr.bf16.mxu0 0
        %1534 = vmatmul.mubr.bf16.gmra.mrb[0].mxu0 %v1440
        %v1535 = vpop.f32.mrb[0].mxu0
        %v1536 = vadd.f32 0.0, %v1535
        %v1537 = vpop.f32.mrb[0].mxu0
        %v1538 = vpop.f32.mrb[0].mxu0
        %v1539 = vadd.f32 0.0, %v1538
        %v1540 = vpop.f32.mrb[0].mxu0
        %1541 = vdwg.mxu0
        %v1542 = vadd.f32 %v1358, %v1480
        %v1543 = vadd.f32 %v1359, %v1483
        %v1544 = vadd.f32 %v1360, %v1488
        %v1545 = vadd.f32 %v1361, %v1491
        %v1546 = vadd.f32 %v1362, %v1496
        %v1547 = vadd.f32 %v1363, %v1499
        %v1548 = vadd.f32 %v1364, %v1504
        %v1549 = vadd.f32 %v1365, %v1507
        %v1550 = vadd.f32 %v1366, %v1512
        %v1551 = vadd.f32 %v1367, %v1515
        %v1552 = vadd.f32 %v1368, %v1520
        %v1553 = vadd.f32 %v1369, %v1523
        %v1554 = vadd.f32 %v1370, %v1528
        %v1555 = vadd.f32 %v1371, %v1531
        %v1556 = vadd.f32 %v1372, %v1536
        %v1557 = vadd.f32 %v1373, %v1539
        %v1559 = vshrl.u32 %v1145, 16
        %v1561 = vrot.slane %v1559, 4
        %v1562 = vshll.u32 %v1145, 16
        %v1564 = vrot.slane %v1562, 5
        %v1565 = vor.u32 %v1561, %v1564
        %v1566 = vrot.slane %v1565, 4
        %v1568 = vshll.u32 %v1178, 16
        %v1570 = vrot.slane %v1568, 5
        %v1571 = vsel %vm752, %v1566, %v1570
        %v1573 = vshrl.u32 %v1146, 16
        %v1575 = vrot.slane %v1573, 4
        %v1576 = vshll.u32 %v1146, 16
        %v1578 = vrot.slane %v1576, 5
        %v1579 = vor.u32 %v1575, %v1578
        %v1580 = vrot.slane %v1579, 4
        %v1582 = vshll.u32 %v1179, 16
        %v1584 = vrot.slane %v1582, 5
        %v1585 = vsel %vm752, %v1580, %v1584
        %v1587 = vshrl.u32 %v1147, 16
        %v1589 = vrot.slane %v1587, 4
        %v1590 = vshll.u32 %v1147, 16
        %v1592 = vrot.slane %v1590, 5
        %v1593 = vor.u32 %v1589, %v1592
        %v1594 = vrot.slane %v1593, 4
        %v1596 = vshll.u32 %v1180, 16
        %v1598 = vrot.slane %v1596, 5
        %v1599 = vsel %vm752, %v1594, %v1598
        %v1601 = vshrl.u32 %v1148, 16
        %v1603 = vrot.slane %v1601, 4
        %v1604 = vshll.u32 %v1148, 16
        %v1606 = vrot.slane %v1604, 5
        %v1607 = vor.u32 %v1603, %v1606
        %v1608 = vrot.slane %v1607, 4
        %v1610 = vshll.u32 %v1181, 16
        %v1612 = vrot.slane %v1610, 5
        %v1613 = vsel %vm752, %v1608, %v1612
        %v1615 = vshrl.u32 %v1149, 16
        %v1617 = vrot.slane %v1615, 4
        %v1618 = vshll.u32 %v1149, 16
        %v1620 = vrot.slane %v1618, 5
        %v1621 = vor.u32 %v1617, %v1620
        %v1622 = vrot.slane %v1621, 4
        %v1624 = vshll.u32 %v1182, 16
        %v1626 = vrot.slane %v1624, 5
        %v1627 = vsel %vm752, %v1622, %v1626
        %v1629 = vshrl.u32 %v1150, 16
        %v1631 = vrot.slane %v1629, 4
        %v1632 = vshll.u32 %v1150, 16
        %v1634 = vrot.slane %v1632, 5
        %v1635 = vor.u32 %v1631, %v1634
        %v1636 = vrot.slane %v1635, 4
        %v1638 = vshll.u32 %v1183, 16
        %v1640 = vrot.slane %v1638, 5
        %v1641 = vsel %vm752, %v1636, %v1640
        %v1643 = vshrl.u32 %v1151, 16
        %v1645 = vrot.slane %v1643, 4
        %v1646 = vshll.u32 %v1151, 16
        %v1648 = vrot.slane %v1646, 5
        %v1649 = vor.u32 %v1645, %v1648
        %v1650 = vrot.slane %v1649, 4
        %v1652 = vshll.u32 %v1184, 16
        %v1654 = vrot.slane %v1652, 5
        %v1655 = vsel %vm752, %v1650, %v1654
        %v1657 = vshrl.u32 %v1152, 16
        %v1659 = vrot.slane %v1657, 4
        %v1660 = vshll.u32 %v1152, 16
        %v1662 = vrot.slane %v1660, 5
        %v1663 = vor.u32 %v1659, %v1662
        %v1664 = vrot.slane %v1663, 4
        %v1666 = vshll.u32 %v1185, 16
        %v1668 = vrot.slane %v1666, 5
        %v1669 = vsel %vm752, %v1664, %v1668
        %v1671 = vshrl.u32 %v1153, 16
        %v1673 = vrot.slane %v1671, 4
        %v1674 = vshll.u32 %v1153, 16
        %v1676 = vrot.slane %v1674, 5
        %v1677 = vor.u32 %v1673, %v1676
        %v1678 = vrot.slane %v1677, 4
        %v1680 = vshll.u32 %v1186, 16
        %v1682 = vrot.slane %v1680, 5
        %v1683 = vsel %vm752, %v1678, %v1682
        %v1685 = vshrl.u32 %v1154, 16
        %v1687 = vrot.slane %v1685, 4
        %v1688 = vshll.u32 %v1154, 16
        %v1690 = vrot.slane %v1688, 5
        %v1691 = vor.u32 %v1687, %v1690
        %v1692 = vrot.slane %v1691, 4
        %v1694 = vshll.u32 %v1187, 16
        %v1696 = vrot.slane %v1694, 5
        %v1697 = vsel %vm752, %v1692, %v1696
        %v1699 = vshrl.u32 %v1155, 16
        %v1701 = vrot.slane %v1699, 4
        %v1702 = vshll.u32 %v1155, 16
        %v1704 = vrot.slane %v1702, 5
        %v1705 = vor.u32 %v1701, %v1704
        %v1706 = vrot.slane %v1705, 4
        %v1708 = vshll.u32 %v1188, 16
        %v1710 = vrot.slane %v1708, 5
        %v1711 = vsel %vm752, %v1706, %v1710
        %v1713 = vshrl.u32 %v1156, 16
        %v1715 = vrot.slane %v1713, 4
        %v1716 = vshll.u32 %v1156, 16
        %v1718 = vrot.slane %v1716, 5
        %v1719 = vor.u32 %v1715, %v1718
        %v1720 = vrot.slane %v1719, 4
        %v1722 = vshll.u32 %v1189, 16
        %v1724 = vrot.slane %v1722, 5
        %v1725 = vsel %vm752, %v1720, %v1724
        %v1727 = vshrl.u32 %v1157, 16
        %v1729 = vrot.slane %v1727, 4
        %v1730 = vshll.u32 %v1157, 16
        %v1732 = vrot.slane %v1730, 5
        %v1733 = vor.u32 %v1729, %v1732
        %v1734 = vrot.slane %v1733, 4
        %v1736 = vshll.u32 %v1190, 16
        %v1738 = vrot.slane %v1736, 5
        %v1739 = vsel %vm752, %v1734, %v1738
        %v1741 = vshrl.u32 %v1158, 16
        %v1743 = vrot.slane %v1741, 4
        %v1744 = vshll.u32 %v1158, 16
        %v1746 = vrot.slane %v1744, 5
        %v1747 = vor.u32 %v1743, %v1746
        %v1748 = vrot.slane %v1747, 4
        %v1750 = vshll.u32 %v1191, 16
        %v1752 = vrot.slane %v1750, 5
        %v1753 = vsel %vm752, %v1748, %v1752
        %v1755 = vshrl.u32 %v1159, 16
        %v1757 = vrot.slane %v1755, 4
        %v1758 = vshll.u32 %v1159, 16
        %v1760 = vrot.slane %v1758, 5
        %v1761 = vor.u32 %v1757, %v1760
        %v1762 = vrot.slane %v1761, 4
        %v1764 = vshll.u32 %v1192, 16
        %v1766 = vrot.slane %v1764, 5
        %v1767 = vsel %vm752, %v1762, %v1766
        %v1769 = vshrl.u32 %v1160, 16
        %v1771 = vrot.slane %v1769, 4
        %v1772 = vshll.u32 %v1160, 16
        %v1774 = vrot.slane %v1772, 5
        %v1775 = vor.u32 %v1771, %v1774
        %v1776 = vrot.slane %v1775, 4
        %v1778 = vshll.u32 %v1193, 16
        %v1780 = vrot.slane %v1778, 5
        %v1781 = vsel %vm752, %v1776, %v1780
        %v1782 = vunpack.c.l.b16 %v1571
        %v1783 = vunpack.c.l.b16 %v1585
        %v1784 = vunpack.c.l.b16 %v1599
        %v1785 = vunpack.c.l.b16 %v1613
        %v1786 = vunpack.c.l.b16 %v1627
        %v1787 = vunpack.c.l.b16 %v1641
        %v1788 = vunpack.c.l.b16 %v1655
        %v1789 = vunpack.c.l.b16 %v1669
        %v1790 = vunpack.c.l.b16 %v1683
        %v1791 = vunpack.c.l.b16 %v1697
        %v1792 = vunpack.c.l.b16 %v1711
        %v1793 = vunpack.c.l.b16 %v1725
        %v1794 = vunpack.c.l.b16 %v1739
        %v1795 = vunpack.c.l.b16 %v1753
        %v1796 = vunpack.c.l.b16 %v1767
        %v1797 = vunpack.c.l.b16 %v1781
        %v1798 = vpack.c.b16 %v1783, %v1782
        %v1799 = vpack.c.b16 %v1785, %v1784
        %v1800 = vpack.c.b16 %v1787, %v1786
        %v1801 = vpack.c.b16 %v1789, %v1788
        %v1802 = vpack.c.b16 %v1791, %v1790
        %v1803 = vpack.c.b16 %v1793, %v1792
        %v1804 = vpack.c.b16 %v1795, %v1794
        %v1805 = vpack.c.b16 %v1797, %v1796
        %v1807 = vsel %vm460, %v1798, 0
        %v1810 = vsel %vm460, %v1799, 0
        %v1813 = vsel %vm460, %v1800, 0
        %v1816 = vsel %vm460, %v1801, 0
        %v1819 = vsel %vm460, %v1802, 0
        %v1822 = vsel %vm460, %v1803, 0
        %v1825 = vsel %vm460, %v1804, 0
        %v1828 = vsel %vm460, %v1805, 0
        %v1831 = vsel %vm485, %v1143, 0
        %1833 = vmatprep.subr.bf16.mxu0 0
        %1834 = vmatpush1.bf16.msra.mxu0 %v1831
        %1835 = vmatprep.subr.bf16.mxu0 0
        %1836 = vmatpush1.bf16.msra.mxu0 0
        %1837 = vmatprep.subr.bf16.mxu0 0
        %1838 = vmatpush1.bf16.msra.mxu0 0
        %1839 = vmatprep.subr.bf16.mxu0 0
        %1840 = vmatpush1.bf16.msra.mxu0 0
        %1841 = vmatprep.subr.bf16.mxu0 0
        %1842 = vmatpush1.bf16.msra.mxu0 0
        %1843 = vmatprep.subr.bf16.mxu0 0
        %1844 = vmatpush1.bf16.msra.mxu0 0
        %1845 = vmatprep.subr.bf16.mxu0 0
        %1846 = vmatpush1.bf16.msra.mxu0 0
        %1847 = vmatprep.subr.bf16.mxu0 0
        %1848 = vmatpush1.bf16.msra.mxu0 0
        %1849 = vmatprep.subr.bf16.mxu0 0
        %1850 = vmatpush1.bf16.msra.mxu0 0
        %1851 = vmatprep.subr.bf16.mxu0 0
        %1852 = vmatpush1.bf16.msra.mxu0 0
        %1853 = vmatprep.subr.bf16.mxu0 0
        %1854 = vmatpush1.bf16.msra.mxu0 0
        %1855 = vmatprep.subr.bf16.mxu0 0
        %1856 = vmatpush1.bf16.msra.mxu0 0
        %1857 = vmatprep.subr.bf16.mxu0 0
        %1858 = vmatpush1.bf16.msra.mxu0 0
        %1859 = vmatprep.subr.bf16.mxu0 0
        %1860 = vmatpush1.bf16.msra.mxu0 0
        %1861 = vmatprep.subr.bf16.mxu0 0
        %1862 = vmatpush1.bf16.msra.mxu0 0
        %1863 = vmatprep.subr.bf16.mxu0 0
        %1864 = vmatpush1.bf16.msra.mxu0 0
        %1865 = vmatprep.mubr.bf16.mxu0 0
        %1866 = vmatmul.mubr.bf16.gmra.mrb[0].mxu0 %v1807
        %v1867 = vpop.f32.mrb[0].mxu0
        %v1868 = vadd.f32 0.0, %v1867
        %v1869 = vpop.f32.mrb[0].mxu0
        %v1870 = vpop.f32.mrb[0].mxu0
        %v1871 = vadd.f32 0.0, %v1870
        %v1872 = vpop.f32.mrb[0].mxu0
        %1873 = vmatprep.mubr.bf16.mxu0 0
        %1874 = vmatmul.mubr.bf16.gmra.mrb[0].mxu0 %v1810
        %v1875 = vpop.f32.mrb[0].mxu0
        %v1876 = vadd.f32 0.0, %v1875
        %v1877 = vpop.f32.mrb[0].mxu0
        %v1878 = vpop.f32.mrb[0].mxu0
        %v1879 = vadd.f32 0.0, %v1878
        %v1880 = vpop.f32.mrb[0].mxu0
        %1881 = vmatprep.mubr.bf16.mxu0 0
        %1882 = vmatmul.mubr.bf16.gmra.mrb[0].mxu0 %v1813
        %v1883 = vpop.f32.mrb[0].mxu0
        %v1884 = vadd.f32 0.0, %v1883
        %v1885 = vpop.f32.mrb[0].mxu0
        %v1886 = vpop.f32.mrb[0].mxu0
        %v1887 = vadd.f32 0.0, %v1886
        %v1888 = vpop.f32.mrb[0].mxu0
        %1889 = vmatprep.mubr.bf16.mxu0 0
        %1890 = vmatmul.mubr.bf16.gmra.mrb[0].mxu0 %v1816
        %v1891 = vpop.f32.mrb[0].mxu0
        %v1892 = vadd.f32 0.0, %v1891
        %v1893 = vpop.f32.mrb[0].mxu0
        %v1894 = vpop.f32.mrb[0].mxu0
        %v1895 = vadd.f32 0.0, %v1894
        %v1896 = vpop.f32.mrb[0].mxu0
        %1897 = vmatprep.mubr.bf16.mxu0 0
        %1898 = vmatmul.mubr.bf16.gmra.mrb[0].mxu0 %v1819
        %v1899 = vpop.f32.mrb[0].mxu0
        %v1900 = vadd.f32 0.0, %v1899
        %v1901 = vpop.f32.mrb[0].mxu0
        %v1902 = vpop.f32.mrb[0].mxu0
        %v1903 = vadd.f32 0.0, %v1902
        %v1904 = vpop.f32.mrb[0].mxu0
        %1905 = vmatprep.mubr.bf16.mxu0 0
        %1906 = vmatmul.mubr.bf16.gmra.mrb[0].mxu0 %v1822
        %v1907 = vpop.f32.mrb[0].mxu0
        %v1908 = vadd.f32 0.0, %v1907
        %v1909 = vpop.f32.mrb[0].mxu0
        %v1910 = vpop.f32.mrb[0].mxu0
        %v1911 = vadd.f32 0.0, %v1910
        %v1912 = vpop.f32.mrb[0].mxu0
        %1913 = vmatprep.mubr.bf16.mxu0 0
        %1914 = vmatmul.mubr.bf16.gmra.mrb[0].mxu0 %v1825
        %v1915 = vpop.f32.mrb[0].mxu0
        %v1916 = vadd.f32 0.0, %v1915
        %v1917 = vpop.f32.mrb[0].mxu0
        %v1918 = vpop.f32.mrb[0].mxu0
        %v1919 = vadd.f32 0.0, %v1918
        %v1920 = vpop.f32.mrb[0].mxu0
        %1921 = vmatprep.mubr.bf16.mxu0 0
        %1922 = vmatmul.mubr.bf16.gmra.mrb[0].mxu0 %v1828
        %v1923 = vpop.f32.mrb[0].mxu0
        %v1924 = vadd.f32 0.0, %v1923
        %v1925 = vpop.f32.mrb[0].mxu0
        %v1926 = vpop.f32.mrb[0].mxu0
        %v1927 = vadd.f32 0.0, %v1926
        %v1928 = vpop.f32.mrb[0].mxu0
        %1929 = vdwg.mxu0
        %v1930 = vadd.f32 %v1542, %v1868
        %v1931 = vadd.f32 %v1543, %v1871
        %v1932 = vadd.f32 %v1544, %v1876
        %v1933 = vadd.f32 %v1545, %v1879
        %v1934 = vadd.f32 %v1546, %v1884
        %v1935 = vadd.f32 %v1547, %v1887
        %v1936 = vadd.f32 %v1548, %v1892
        %v1937 = vadd.f32 %v1549, %v1895
        %v1938 = vadd.f32 %v1550, %v1900
        %v1939 = vadd.f32 %v1551, %v1903
        %v1940 = vadd.f32 %v1552, %v1908
        %v1941 = vadd.f32 %v1553, %v1911
        %v1942 = vadd.f32 %v1554, %v1916
        %v1943 = vadd.f32 %v1555, %v1919
        %v1944 = vadd.f32 %v1556, %v1924
        %v1945 = vadd.f32 %v1557, %v1927
        %s1946 = scalar_lea.vmem %s1, 16
        %v1947 = vld [vmem:[%s1946] sm:$0xf]
        %v1948 = vld [vmem:[%s1946 + $0x4] sm:$0x3]
        %s1949 = scalar_lea.vmem %s361, 8
        %v1950 = vld [vmem:[%s1949] sm:$0xf]
        %v1951 = vld [vmem:[%s1949 + $0x8] sm:$0xf]
        %v1952 = vld [vmem:[%s1949 + $0x10] sm:$0xf]
        %v1953 = vld [vmem:[%s1949 + $0x18] sm:$0xf]
        %v1954 = vld [vmem:[%s1949 + $0x20] sm:$0xf]
        %v1955 = vld [vmem:[%s1949 + $0x28] sm:$0xf]
        %v1956 = vld [vmem:[%s1949 + $0x30] sm:$0xf]
        %v1957 = vld [vmem:[%s1949 + $0x38] sm:$0xf]
        %v1958 = vld [vmem:[%s1949 + $0x120] sm:$0xf]
        %v1959 = vld [vmem:[%s1949 + $0x128] sm:$0xf]
        %v1960 = vld [vmem:[%s1949 + $0x130] sm:$0xf]
        %v1961 = vld [vmem:[%s1949 + $0x138] sm:$0xf]
        %v1962 = vld [vmem:[%s1949 + $0x140] sm:$0xf]
        %v1963 = vld [vmem:[%s1949 + $0x148] sm:$0xf]
        %v1964 = vld [vmem:[%s1949 + $0x150] sm:$0xf]
        %v1965 = vld [vmem:[%s1949 + $0x158] sm:$0xf]
        %s1966 = scalar_lea.vmem %s361, 80
        %v1967 = vld [vmem:[%s1966] sm:$0xf]
        %v1968 = vld [vmem:[%s1966 + $0x8] sm:$0xf]
        %v1969 = vld [vmem:[%s1966 + $0x10] sm:$0xf]
        %v1970 = vld [vmem:[%s1966 + $0x18] sm:$0xf]
        %v1971 = vld [vmem:[%s1966 + $0x20] sm:$0xf]
        %v1972 = vld [vmem:[%s1966 + $0x28] sm:$0xf]
        %v1973 = vld [vmem:[%s1966 + $0x30] sm:$0xf]
        %v1974 = vld [vmem:[%s1966 + $0x38] sm:$0xf]
        %v1975 = vld [vmem:[%s1966 + $0x120] sm:$0xf]
        %v1976 = vld [vmem:[%s1966 + $0x128] sm:$0xf]
        %v1977 = vld [vmem:[%s1966 + $0x130] sm:$0xf]
        %v1978 = vld [vmem:[%s1966 + $0x138] sm:$0xf]
        %v1979 = vld [vmem:[%s1966 + $0x140] sm:$0xf]
        %v1980 = vld [vmem:[%s1966 + $0x148] sm:$0xf]
        %v1981 = vld [vmem:[%s1966 + $0x150] sm:$0xf]
        %v1982 = vld [vmem:[%s1966 + $0x158] sm:$0xf]
        %v1983 = vld [vmem:[%s1949 + $0x4] sm:$0x1]
        %v1984 = vld [vmem:[%s1949 + $0xc] sm:$0x1]
        %v1985 = vld [vmem:[%s1949 + $0x14] sm:$0x1]
        %v1986 = vld [vmem:[%s1949 + $0x1c] sm:$0x1]
        %v1987 = vld [vmem:[%s1949 + $0x24] sm:$0x1]
        %v1988 = vld [vmem:[%s1949 + $0x2c] sm:$0x1]
        %v1989 = vld [vmem:[%s1949 + $0x34] sm:$0x1]
        %v1990 = vld [vmem:[%s1949 + $0x3c] sm:$0x1]
        %v1991 = vld [vmem:[%s1949 + $0x124] sm:$0x1]
        %v1992 = vld [vmem:[%s1949 + $0x12c] sm:$0x1]
        %v1993 = vld [vmem:[%s1949 + $0x134] sm:$0x1]
        %v1994 = vld [vmem:[%s1949 + $0x13c] sm:$0x1]
        %v1995 = vld [vmem:[%s1949 + $0x144] sm:$0x1]
        %v1996 = vld [vmem:[%s1949 + $0x14c] sm:$0x1]
        %v1997 = vld [vmem:[%s1949 + $0x154] sm:$0x1]
        %v1998 = vld [vmem:[%s1949 + $0x15c] sm:$0x1]
        %v2015 = vunpack.c.l.b16 %v1950
        %v2016 = vunpack.c.l.b16 %v1951
        %v2017 = vunpack.c.l.b16 %v1952
        %v2018 = vunpack.c.l.b16 %v1953
        %v2019 = vunpack.c.l.b16 %v1954
        %v2020 = vunpack.c.l.b16 %v1955
        %v2021 = vunpack.c.l.b16 %v1956
        %v2022 = vunpack.c.l.b16 %v1957
        %v2023 = vunpack.c.l.b16 %v1958
        %v2024 = vunpack.c.l.b16 %v1959
        %v2025 = vunpack.c.l.b16 %v1960
        %v2026 = vunpack.c.l.b16 %v1961
        %v2027 = vunpack.c.l.b16 %v1962
        %v2028 = vunpack.c.l.b16 %v1963
        %v2029 = vunpack.c.l.b16 %v1964
        %v2030 = vunpack.c.l.b16 %v1965
        %v2031 = vpack.c.b16 %v2016, %v2015
        %v2032 = vpack.c.b16 %v2018, %v2017
        %v2033 = vpack.c.b16 %v2020, %v2019
        %v2034 = vpack.c.b16 %v2022, %v2021
        %v2035 = vpack.c.b16 %v2024, %v2023
        %v2036 = vpack.c.b16 %v2026, %v2025
        %v2037 = vpack.c.b16 %v2028, %v2027
        %v2038 = vpack.c.b16 %v2030, %v2029
        %v2040 = vsel %vm460, %v2031, 0
        %v2043 = vsel %vm460, %v2032, 0
        %v2046 = vsel %vm460, %v2033, 0
        %v2049 = vsel %vm460, %v2034, 0
        %v2052 = vsel %vm460, %v2035, 0
        %v2055 = vsel %vm460, %v2036, 0
        %v2058 = vsel %vm460, %v2037, 0
        %v2061 = vsel %vm460, %v2038, 0
        %v2064 = vsel %vm485, %v1947, 0
        %2066 = vmatprep.subr.bf16.mxu0 0
        %2067 = vmatpush1.bf16.msra.mxu0 %v2064
        %2068 = vmatprep.subr.bf16.mxu0 0
        %2069 = vmatpush1.bf16.msra.mxu0 0
        %2070 = vmatprep.subr.bf16.mxu0 0
        %2071 = vmatpush1.bf16.msra.mxu0 0
        %2072 = vmatprep.subr.bf16.mxu0 0
        %2073 = vmatpush1.bf16.msra.mxu0 0
        %2074 = vmatprep.subr.bf16.mxu0 0
        %2075 = vmatpush1.bf16.msra.mxu0 0
        %2076 = vmatprep.subr.bf16.mxu0 0
        %2077 = vmatpush1.bf16.msra.mxu0 0
        %2078 = vmatprep.subr.bf16.mxu0 0
        %2079 = vmatpush1.bf16.msra.mxu0 0
        %2080 = vmatprep.subr.bf16.mxu0 0
        %2081 = vmatpush1.bf16.msra.mxu0 0
        %2082 = vmatprep.subr.bf16.mxu0 0
        %2083 = vmatpush1.bf16.msra.mxu0 0
        %2084 = vmatprep.subr.bf16.mxu0 0
        %2085 = vmatpush1.bf16.msra.mxu0 0
        %2086 = vmatprep.subr.bf16.mxu0 0
        %2087 = vmatpush1.bf16.msra.mxu0 0
        %2088 = vmatprep.subr.bf16.mxu0 0
        %2089 = vmatpush1.bf16.msra.mxu0 0
        %2090 = vmatprep.subr.bf16.mxu0 0
        %2091 = vmatpush1.bf16.msra.mxu0 0
        %2092 = vmatprep.subr.bf16.mxu0 0
        %2093 = vmatpush1.bf16.msra.mxu0 0
        %2094 = vmatprep.subr.bf16.mxu0 0
        %2095 = vmatpush1.bf16.msra.mxu0 0
        %2096 = vmatprep.subr.bf16.mxu0 0
        %2097 = vmatpush1.bf16.msra.mxu0 0
        %2098 = vmatprep.mubr.bf16.mxu0 0
        %2099 = vmatmul.mubr.bf16.gmra.mrb[0].mxu0 %v2040
        %v2100 = vpop.f32.mrb[0].mxu0
        %v2101 = vadd.f32 0.0, %v2100
        %v2102 = vpop.f32.mrb[0].mxu0
        %v2103 = vpop.f32.mrb[0].mxu0
        %v2104 = vadd.f32 0.0, %v2103
        %v2105 = vpop.f32.mrb[0].mxu0
        %2106 = vmatprep.mubr.bf16.mxu0 0
        %2107 = vmatmul.mubr.bf16.gmra.mrb[0].mxu0 %v2043
        %v2108 = vpop.f32.mrb[0].mxu0
        %v2109 = vadd.f32 0.0, %v2108
        %v2110 = vpop.f32.mrb[0].mxu0
        %v2111 = vpop.f32.mrb[0].mxu0
        %v2112 = vadd.f32 0.0, %v2111
        %v2113 = vpop.f32.mrb[0].mxu0
        %2114 = vmatprep.mubr.bf16.mxu0 0
        %2115 = vmatmul.mubr.bf16.gmra.mrb[0].mxu0 %v2046
        %v2116 = vpop.f32.mrb[0].mxu0
        %v2117 = vadd.f32 0.0, %v2116
        %v2118 = vpop.f32.mrb[0].mxu0
        %v2119 = vpop.f32.mrb[0].mxu0
        %v2120 = vadd.f32 0.0, %v2119
        %v2121 = vpop.f32.mrb[0].mxu0
        %2122 = vmatprep.mubr.bf16.mxu0 0
        %2123 = vmatmul.mubr.bf16.gmra.mrb[0].mxu0 %v2049
        %v2124 = vpop.f32.mrb[0].mxu0
        %v2125 = vadd.f32 0.0, %v2124
        %v2126 = vpop.f32.mrb[0].mxu0
        %v2127 = vpop.f32.mrb[0].mxu0
        %v2128 = vadd.f32 0.0, %v2127
        %v2129 = vpop.f32.mrb[0].mxu0
        %2130 = vmatprep.mubr.bf16.mxu0 0
        %2131 = vmatmul.mubr.bf16.gmra.mrb[0].mxu0 %v2052
        %v2132 = vpop.f32.mrb[0].mxu0
        %v2133 = vadd.f32 0.0, %v2132
        %v2134 = vpop.f32.mrb[0].mxu0
        %v2135 = vpop.f32.mrb[0].mxu0
        %v2136 = vadd.f32 0.0, %v2135
        %v2137 = vpop.f32.mrb[0].mxu0
        %2138 = vmatprep.mubr.bf16.mxu0 0
        %2139 = vmatmul.mubr.bf16.gmra.mrb[0].mxu0 %v2055
        %v2140 = vpop.f32.mrb[0].mxu0
        %v2141 = vadd.f32 0.0, %v2140
        %v2142 = vpop.f32.mrb[0].mxu0
        %v2143 = vpop.f32.mrb[0].mxu0
        %v2144 = vadd.f32 0.0, %v2143
        %v2145 = vpop.f32.mrb[0].mxu0
        %2146 = vmatprep.mubr.bf16.mxu0 0
        %2147 = vmatmul.mubr.bf16.gmra.mrb[0].mxu0 %v2058
        %v2148 = vpop.f32.mrb[0].mxu0
        %v2149 = vadd.f32 0.0, %v2148
        %v2150 = vpop.f32.mrb[0].mxu0
        %v2151 = vpop.f32.mrb[0].mxu0
        %v2152 = vadd.f32 0.0, %v2151
        %v2153 = vpop.f32.mrb[0].mxu0
        %2154 = vmatprep.mubr.bf16.mxu0 0
        %2155 = vmatmul.mubr.bf16.gmra.mrb[0].mxu0 %v2061
        %v2156 = vpop.f32.mrb[0].mxu0
        %v2157 = vadd.f32 0.0, %v2156
        %v2158 = vpop.f32.mrb[0].mxu0
        %v2159 = vpop.f32.mrb[0].mxu0
        %v2160 = vadd.f32 0.0, %v2159
        %v2161 = vpop.f32.mrb[0].mxu0
        %2162 = vdwg.mxu0
        %v2163 = vadd.f32 %v1930, %v2101
        %v2164 = vadd.f32 %v1931, %v2104
        %v2165 = vadd.f32 %v1932, %v2109
        %v2166 = vadd.f32 %v1933, %v2112
        %v2167 = vadd.f32 %v1934, %v2117
        %v2168 = vadd.f32 %v1935, %v2120
        %v2169 = vadd.f32 %v1936, %v2125
        %v2170 = vadd.f32 %v1937, %v2128
        %v2171 = vadd.f32 %v1938, %v2133
        %v2172 = vadd.f32 %v1939, %v2136
        %v2173 = vadd.f32 %v1940, %v2141
        %v2174 = vadd.f32 %v1941, %v2144
        %v2175 = vadd.f32 %v1942, %v2149
        %v2176 = vadd.f32 %v1943, %v2152
        %v2177 = vadd.f32 %v1944, %v2157
        %v2178 = vadd.f32 %v1945, %v2160
        %v2195 = vunpack.c.l.b16 %v1967
        %v2196 = vunpack.c.l.b16 %v1968
        %v2197 = vunpack.c.l.b16 %v1969
        %v2198 = vunpack.c.l.b16 %v1970
        %v2199 = vunpack.c.l.b16 %v1971
        %v2200 = vunpack.c.l.b16 %v1972
        %v2201 = vunpack.c.l.b16 %v1973
        %v2202 = vunpack.c.l.b16 %v1974
        %v2203 = vunpack.c.l.b16 %v1975
        %v2204 = vunpack.c.l.b16 %v1976
        %v2205 = vunpack.c.l.b16 %v1977
        %v2206 = vunpack.c.l.b16 %v1978
        %v2207 = vunpack.c.l.b16 %v1979
        %v2208 = vunpack.c.l.b16 %v1980
        %v2209 = vunpack.c.l.b16 %v1981
        %v2210 = vunpack.c.l.b16 %v1982
        %v2211 = vpack.c.b16 %v2196, %v2195
        %v2212 = vpack.c.b16 %v2198, %v2197
        %v2213 = vpack.c.b16 %v2200, %v2199
        %v2214 = vpack.c.b16 %v2202, %v2201
        %v2215 = vpack.c.b16 %v2204, %v2203
        %v2216 = vpack.c.b16 %v2206, %v2205
        %v2217 = vpack.c.b16 %v2208, %v2207
        %v2218 = vpack.c.b16 %v2210, %v2209
        %v2220 = vunpack.c.l.b16 %v1947
        %v2221 = vpack.c.b16 %v2220, %v2220
        %v2222 = vrot.slane %v2221, 2
        %v2224 = vsel %vm460, %v2211, 0
        %v2227 = vsel %vm460, %v2212, 0
        %v2230 = vsel %vm460, %v2213, 0
        %v2233 = vsel %vm460, %v2214, 0
        %v2236 = vsel %vm460, %v2215, 0
        %v2239 = vsel %vm460, %v2216, 0
        %v2242 = vsel %vm460, %v2217, 0
        %v2245 = vsel %vm460, %v2218, 0
        %v2248 = vsel %vm485, %v2222, 0
        %2250 = vmatprep.subr.bf16.mxu0 0
        %2251 = vmatpush1.bf16.msra.mxu0 %v2248
        %2252 = vmatprep.subr.bf16.mxu0 0
        %2253 = vmatpush1.bf16.msra.mxu0 0
        %2254 = vmatprep.subr.bf16.mxu0 0
        %2255 = vmatpush1.bf16.msra.mxu0 0
        %2256 = vmatprep.subr.bf16.mxu0 0
        %2257 = vmatpush1.bf16.msra.mxu0 0
        %2258 = vmatprep.subr.bf16.mxu0 0
        %2259 = vmatpush1.bf16.msra.mxu0 0
        %2260 = vmatprep.subr.bf16.mxu0 0
        %2261 = vmatpush1.bf16.msra.mxu0 0
        %2262 = vmatprep.subr.bf16.mxu0 0
        %2263 = vmatpush1.bf16.msra.mxu0 0
        %2264 = vmatprep.subr.bf16.mxu0 0
        %2265 = vmatpush1.bf16.msra.mxu0 0
        %2266 = vmatprep.subr.bf16.mxu0 0
        %2267 = vmatpush1.bf16.msra.mxu0 0
        %2268 = vmatprep.subr.bf16.mxu0 0
        %2269 = vmatpush1.bf16.msra.mxu0 0
        %2270 = vmatprep.subr.bf16.mxu0 0
        %2271 = vmatpush1.bf16.msra.mxu0 0
        %2272 = vmatprep.subr.bf16.mxu0 0
        %2273 = vmatpush1.bf16.msra.mxu0 0
        %2274 = vmatprep.subr.bf16.mxu0 0
        %2275 = vmatpush1.bf16.msra.mxu0 0
        %2276 = vmatprep.subr.bf16.mxu0 0
        %2277 = vmatpush1.bf16.msra.mxu0 0
        %2278 = vmatprep.subr.bf16.mxu0 0
        %2279 = vmatpush1.bf16.msra.mxu0 0
        %2280 = vmatprep.subr.bf16.mxu0 0
        %2281 = vmatpush1.bf16.msra.mxu0 0
        %2282 = vmatprep.mubr.bf16.mxu0 0
        %2283 = vmatmul.mubr.bf16.gmra.mrb[0].mxu0 %v2224
        %v2284 = vpop.f32.mrb[0].mxu0
        %v2285 = vadd.f32 0.0, %v2284
        %v2286 = vpop.f32.mrb[0].mxu0
        %v2287 = vpop.f32.mrb[0].mxu0
        %v2288 = vadd.f32 0.0, %v2287
        %v2289 = vpop.f32.mrb[0].mxu0
        %2290 = vmatprep.mubr.bf16.mxu0 0
        %2291 = vmatmul.mubr.bf16.gmra.mrb[0].mxu0 %v2227
        %v2292 = vpop.f32.mrb[0].mxu0
        %v2293 = vadd.f32 0.0, %v2292
        %v2294 = vpop.f32.mrb[0].mxu0
        %v2295 = vpop.f32.mrb[0].mxu0
        %v2296 = vadd.f32 0.0, %v2295
        %v2297 = vpop.f32.mrb[0].mxu0
        %2298 = vmatprep.mubr.bf16.mxu0 0
        %2299 = vmatmul.mubr.bf16.gmra.mrb[0].mxu0 %v2230
        %v2300 = vpop.f32.mrb[0].mxu0
        %v2301 = vadd.f32 0.0, %v2300
        %v2302 = vpop.f32.mrb[0].mxu0
        %v2303 = vpop.f32.mrb[0].mxu0
        %v2304 = vadd.f32 0.0, %v2303
        %v2305 = vpop.f32.mrb[0].mxu0
        %2306 = vmatprep.mubr.bf16.mxu0 0
        %2307 = vmatmul.mubr.bf16.gmra.mrb[0].mxu0 %v2233
        %v2308 = vpop.f32.mrb[0].mxu0
        %v2309 = vadd.f32 0.0, %v2308
        %v2310 = vpop.f32.mrb[0].mxu0
        %v2311 = vpop.f32.mrb[0].mxu0
        %v2312 = vadd.f32 0.0, %v2311
        %v2313 = vpop.f32.mrb[0].mxu0
        %2314 = vmatprep.mubr.bf16.mxu0 0
        %2315 = vmatmul.mubr.bf16.gmra.mrb[0].mxu0 %v2236
        %v2316 = vpop.f32.mrb[0].mxu0
        %v2317 = vadd.f32 0.0, %v2316
        %v2318 = vpop.f32.mrb[0].mxu0
        %v2319 = vpop.f32.mrb[0].mxu0
        %v2320 = vadd.f32 0.0, %v2319
        %v2321 = vpop.f32.mrb[0].mxu0
        %2322 = vmatprep.mubr.bf16.mxu0 0
        %2323 = vmatmul.mubr.bf16.gmra.mrb[0].mxu0 %v2239
        %v2324 = vpop.f32.mrb[0].mxu0
        %v2325 = vadd.f32 0.0, %v2324
        %v2326 = vpop.f32.mrb[0].mxu0
        %v2327 = vpop.f32.mrb[0].mxu0
        %v2328 = vadd.f32 0.0, %v2327
        %v2329 = vpop.f32.mrb[0].mxu0
        %2330 = vmatprep.mubr.bf16.mxu0 0
        %2331 = vmatmul.mubr.bf16.gmra.mrb[0].mxu0 %v2242
        %v2332 = vpop.f32.mrb[0].mxu0
        %v2333 = vadd.f32 0.0, %v2332
        %v2334 = vpop.f32.mrb[0].mxu0
        %v2335 = vpop.f32.mrb[0].mxu0
        %v2336 = vadd.f32 0.0, %v2335
        %v2337 = vpop.f32.mrb[0].mxu0
        %2338 = vmatprep.mubr.bf16.mxu0 0
        %2339 = vmatmul.mubr.bf16.gmra.mrb[0].mxu0 %v2245
        %v2340 = vpop.f32.mrb[0].mxu0
        %v2341 = vadd.f32 0.0, %v2340
        %v2342 = vpop.f32.mrb[0].mxu0
        %v2343 = vpop.f32.mrb[0].mxu0
        %v2344 = vadd.f32 0.0, %v2343
        %v2345 = vpop.f32.mrb[0].mxu0
        %2346 = vdwg.mxu0
        %v2347 = vadd.f32 %v2163, %v2285
        %v2348 = vadd.f32 %v2164, %v2288
        %v2349 = vadd.f32 %v2165, %v2293
        %v2350 = vadd.f32 %v2166, %v2296
        %v2351 = vadd.f32 %v2167, %v2301
        %v2352 = vadd.f32 %v2168, %v2304
        %v2353 = vadd.f32 %v2169, %v2309
        %v2354 = vadd.f32 %v2170, %v2312
        %v2355 = vadd.f32 %v2171, %v2317
        %v2356 = vadd.f32 %v2172, %v2320
        %v2357 = vadd.f32 %v2173, %v2325
        %v2358 = vadd.f32 %v2174, %v2328
        %v2359 = vadd.f32 %v2175, %v2333
        %v2360 = vadd.f32 %v2176, %v2336
        %v2361 = vadd.f32 %v2177, %v2341
        %v2362 = vadd.f32 %v2178, %v2344
        %v2364 = vshrl.u32 %v1950, 16
        %v2366 = vrot.slane %v2364, 4
        %v2367 = vshll.u32 %v1950, 16
        %v2369 = vrot.slane %v2367, 5
        %v2370 = vor.u32 %v2366, %v2369
        %v2371 = vrot.slane %v2370, 4
        %v2373 = vshll.u32 %v1983, 16
        %v2375 = vrot.slane %v2373, 5
        %v2376 = vsel %vm752, %v2371, %v2375
        %v2378 = vshrl.u32 %v1951, 16
        %v2380 = vrot.slane %v2378, 4
        %v2381 = vshll.u32 %v1951, 16
        %v2383 = vrot.slane %v2381, 5
        %v2384 = vor.u32 %v2380, %v2383
        %v2385 = vrot.slane %v2384, 4
        %v2387 = vshll.u32 %v1984, 16
        %v2389 = vrot.slane %v2387, 5
        %v2390 = vsel %vm752, %v2385, %v2389
        %v2392 = vshrl.u32 %v1952, 16
        %v2394 = vrot.slane %v2392, 4
        %v2395 = vshll.u32 %v1952, 16
        %v2397 = vrot.slane %v2395, 5
        %v2398 = vor.u32 %v2394, %v2397
        %v2399 = vrot.slane %v2398, 4
        %v2401 = vshll.u32 %v1985, 16
        %v2403 = vrot.slane %v2401, 5
        %v2404 = vsel %vm752, %v2399, %v2403
        %v2406 = vshrl.u32 %v1953, 16
        %v2408 = vrot.slane %v2406, 4
        %v2409 = vshll.u32 %v1953, 16
        %v2411 = vrot.slane %v2409, 5
        %v2412 = vor.u32 %v2408, %v2411
        %v2413 = vrot.slane %v2412, 4
        %v2415 = vshll.u32 %v1986, 16
        %v2417 = vrot.slane %v2415, 5
        %v2418 = vsel %vm752, %v2413, %v2417
        %v2420 = vshrl.u32 %v1954, 16
        %v2422 = vrot.slane %v2420, 4
        %v2423 = vshll.u32 %v1954, 16
        %v2425 = vrot.slane %v2423, 5
        %v2426 = vor.u32 %v2422, %v2425
        %v2427 = vrot.slane %v2426, 4
        %v2429 = vshll.u32 %v1987, 16
        %v2431 = vrot.slane %v2429, 5
        %v2432 = vsel %vm752, %v2427, %v2431
        %v2434 = vshrl.u32 %v1955, 16
        %v2436 = vrot.slane %v2434, 4
        %v2437 = vshll.u32 %v1955, 16
        %v2439 = vrot.slane %v2437, 5
        %v2440 = vor.u32 %v2436, %v2439
        %v2441 = vrot.slane %v2440, 4
        %v2443 = vshll.u32 %v1988, 16
        %v2445 = vrot.slane %v2443, 5
        %v2446 = vsel %vm752, %v2441, %v2445
        %v2448 = vshrl.u32 %v1956, 16
        %v2450 = vrot.slane %v2448, 4
        %v2451 = vshll.u32 %v1956, 16
        %v2453 = vrot.slane %v2451, 5
        %v2454 = vor.u32 %v2450, %v2453
        %v2455 = vrot.slane %v2454, 4
        %v2457 = vshll.u32 %v1989, 16
        %v2459 = vrot.slane %v2457, 5
        %v2460 = vsel %vm752, %v2455, %v2459
        %v2462 = vshrl.u32 %v1957, 16
        %v2464 = vrot.slane %v2462, 4
        %v2465 = vshll.u32 %v1957, 16
        %v2467 = vrot.slane %v2465, 5
        %v2468 = vor.u32 %v2464, %v2467
        %v2469 = vrot.slane %v2468, 4
        %v2471 = vshll.u32 %v1990, 16
        %v2473 = vrot.slane %v2471, 5
        %v2474 = vsel %vm752, %v2469, %v2473
        %v2476 = vshrl.u32 %v1958, 16
        %v2478 = vrot.slane %v2476, 4
        %v2479 = vshll.u32 %v1958, 16
        %v2481 = vrot.slane %v2479, 5
        %v2482 = vor.u32 %v2478, %v2481
        %v2483 = vrot.slane %v2482, 4
        %v2485 = vshll.u32 %v1991, 16
        %v2487 = vrot.slane %v2485, 5
        %v2488 = vsel %vm752, %v2483, %v2487
        %v2490 = vshrl.u32 %v1959, 16
        %v2492 = vrot.slane %v2490, 4
        %v2493 = vshll.u32 %v1959, 16
        %v2495 = vrot.slane %v2493, 5
        %v2496 = vor.u32 %v2492, %v2495
        %v2497 = vrot.slane %v2496, 4
        %v2499 = vshll.u32 %v1992, 16
        %v2501 = vrot.slane %v2499, 5
        %v2502 = vsel %vm752, %v2497, %v2501
        %v2504 = vshrl.u32 %v1960, 16
        %v2506 = vrot.slane %v2504, 4
        %v2507 = vshll.u32 %v1960, 16
        %v2509 = vrot.slane %v2507, 5
        %v2510 = vor.u32 %v2506, %v2509
        %v2511 = vrot.slane %v2510, 4
        %v2513 = vshll.u32 %v1993, 16
        %v2515 = vrot.slane %v2513, 5
        %v2516 = vsel %vm752, %v2511, %v2515
        %v2518 = vshrl.u32 %v1961, 16
        %v2520 = vrot.slane %v2518, 4
        %v2521 = vshll.u32 %v1961, 16
        %v2523 = vrot.slane %v2521, 5
        %v2524 = vor.u32 %v2520, %v2523
        %v2525 = vrot.slane %v2524, 4
        %v2527 = vshll.u32 %v1994, 16
        %v2529 = vrot.slane %v2527, 5
        %v2530 = vsel %vm752, %v2525, %v2529
        %v2532 = vshrl.u32 %v1962, 16
        %v2534 = vrot.slane %v2532, 4
        %v2535 = vshll.u32 %v1962, 16
        %v2537 = vrot.slane %v2535, 5
        %v2538 = vor.u32 %v2534, %v2537
        %v2539 = vrot.slane %v2538, 4
        %v2541 = vshll.u32 %v1995, 16
        %v2543 = vrot.slane %v2541, 5
        %v2544 = vsel %vm752, %v2539, %v2543
        %v2546 = vshrl.u32 %v1963, 16
        %v2548 = vrot.slane %v2546, 4
        %v2549 = vshll.u32 %v1963, 16
        %v2551 = vrot.slane %v2549, 5
        %v2552 = vor.u32 %v2548, %v2551
        %v2553 = vrot.slane %v2552, 4
        %v2555 = vshll.u32 %v1996, 16
        %v2557 = vrot.slane %v2555, 5
        %v2558 = vsel %vm752, %v2553, %v2557
        %v2560 = vshrl.u32 %v1964, 16
        %v2562 = vrot.slane %v2560, 4
        %v2563 = vshll.u32 %v1964, 16
        %v2565 = vrot.slane %v2563, 5
        %v2566 = vor.u32 %v2562, %v2565
        %v2567 = vrot.slane %v2566, 4
        %v2569 = vshll.u32 %v1997, 16
        %v2571 = vrot.slane %v2569, 5
        %v2572 = vsel %vm752, %v2567, %v2571
        %v2574 = vshrl.u32 %v1965, 16
        %v2576 = vrot.slane %v2574, 4
        %v2577 = vshll.u32 %v1965, 16
        %v2579 = vrot.slane %v2577, 5
        %v2580 = vor.u32 %v2576, %v2579
        %v2581 = vrot.slane %v2580, 4
        %v2583 = vshll.u32 %v1998, 16
        %v2585 = vrot.slane %v2583, 5
        %v2586 = vsel %vm752, %v2581, %v2585
        %v2587 = vunpack.c.l.b16 %v2376
        %v2588 = vunpack.c.l.b16 %v2390
        %v2589 = vunpack.c.l.b16 %v2404
        %v2590 = vunpack.c.l.b16 %v2418
        %v2591 = vunpack.c.l.b16 %v2432
        %v2592 = vunpack.c.l.b16 %v2446
        %v2593 = vunpack.c.l.b16 %v2460
        %v2594 = vunpack.c.l.b16 %v2474
        %v2595 = vunpack.c.l.b16 %v2488
        %v2596 = vunpack.c.l.b16 %v2502
        %v2597 = vunpack.c.l.b16 %v2516
        %v2598 = vunpack.c.l.b16 %v2530
        %v2599 = vunpack.c.l.b16 %v2544
        %v2600 = vunpack.c.l.b16 %v2558
        %v2601 = vunpack.c.l.b16 %v2572
        %v2602 = vunpack.c.l.b16 %v2586
        %v2603 = vpack.c.b16 %v2588, %v2587
        %v2604 = vpack.c.b16 %v2590, %v2589
        %v2605 = vpack.c.b16 %v2592, %v2591
        %v2606 = vpack.c.b16 %v2594, %v2593
        %v2607 = vpack.c.b16 %v2596, %v2595
        %v2608 = vpack.c.b16 %v2598, %v2597
        %v2609 = vpack.c.b16 %v2600, %v2599
        %v2610 = vpack.c.b16 %v2602, %v2601
        %v2612 = vsel %vm460, %v2603, 0
        %v2615 = vsel %vm460, %v2604, 0
        %v2618 = vsel %vm460, %v2605, 0
        %v2621 = vsel %vm460, %v2606, 0
        %v2624 = vsel %vm460, %v2607, 0
        %v2627 = vsel %vm460, %v2608, 0
        %v2630 = vsel %vm460, %v2609, 0
        %v2633 = vsel %vm460, %v2610, 0
        %v2636 = vsel %vm485, %v1948, 0
        %2638 = vmatprep.subr.bf16.mxu0 0
        %2639 = vmatpush1.bf16.msra.mxu0 %v2636
        %2640 = vmatprep.subr.bf16.mxu0 0
        %2641 = vmatpush1.bf16.msra.mxu0 0
        %2642 = vmatprep.subr.bf16.mxu0 0
        %2643 = vmatpush1.bf16.msra.mxu0 0
        %2644 = vmatprep.subr.bf16.mxu0 0
        %2645 = vmatpush1.bf16.msra.mxu0 0
        %2646 = vmatprep.subr.bf16.mxu0 0
        %2647 = vmatpush1.bf16.msra.mxu0 0
        %2648 = vmatprep.subr.bf16.mxu0 0
        %2649 = vmatpush1.bf16.msra.mxu0 0
        %2650 = vmatprep.subr.bf16.mxu0 0
        %2651 = vmatpush1.bf16.msra.mxu0 0
        %2652 = vmatprep.subr.bf16.mxu0 0
        %2653 = vmatpush1.bf16.msra.mxu0 0
        %2654 = vmatprep.subr.bf16.mxu0 0
        %2655 = vmatpush1.bf16.msra.mxu0 0
        %2656 = vmatprep.subr.bf16.mxu0 0
        %2657 = vmatpush1.bf16.msra.mxu0 0
        %2658 = vmatprep.subr.bf16.mxu0 0
        %2659 = vmatpush1.bf16.msra.mxu0 0
        %2660 = vmatprep.subr.bf16.mxu0 0
        %2661 = vmatpush1.bf16.msra.mxu0 0
        %2662 = vmatprep.subr.bf16.mxu0 0
        %2663 = vmatpush1.bf16.msra.mxu0 0
        %2664 = vmatprep.subr.bf16.mxu0 0
        %2665 = vmatpush1.bf16.msra.mxu0 0
        %2666 = vmatprep.subr.bf16.mxu0 0
        %2667 = vmatpush1.bf16.msra.mxu0 0
        %2668 = vmatprep.subr.bf16.mxu0 0
        %2669 = vmatpush1.bf16.msra.mxu0 0
        %2670 = vmatprep.mubr.bf16.mxu0 0
        %2671 = vmatmul.mubr.bf16.gmra.mrb[0].mxu0 %v2612
        %v2672 = vpop.f32.mrb[0].mxu0
        %v2673 = vadd.f32 0.0, %v2672
        %v2674 = vpop.f32.mrb[0].mxu0
        %v2675 = vpop.f32.mrb[0].mxu0
        %v2676 = vadd.f32 0.0, %v2675
        %v2677 = vpop.f32.mrb[0].mxu0
        %2678 = vmatprep.mubr.bf16.mxu0 0
        %2679 = vmatmul.mubr.bf16.gmra.mrb[0].mxu0 %v2615
        %v2680 = vpop.f32.mrb[0].mxu0
        %v2681 = vadd.f32 0.0, %v2680
        %v2682 = vpop.f32.mrb[0].mxu0
        %v2683 = vpop.f32.mrb[0].mxu0
        %v2684 = vadd.f32 0.0, %v2683
        %v2685 = vpop.f32.mrb[0].mxu0
        %2686 = vmatprep.mubr.bf16.mxu0 0
        %2687 = vmatmul.mubr.bf16.gmra.mrb[0].mxu0 %v2618
        %v2688 = vpop.f32.mrb[0].mxu0
        %v2689 = vadd.f32 0.0, %v2688
        %v2690 = vpop.f32.mrb[0].mxu0
        %v2691 = vpop.f32.mrb[0].mxu0
        %v2692 = vadd.f32 0.0, %v2691
        %v2693 = vpop.f32.mrb[0].mxu0
        %2694 = vmatprep.mubr.bf16.mxu0 0
        %2695 = vmatmul.mubr.bf16.gmra.mrb[0].mxu0 %v2621
        %v2696 = vpop.f32.mrb[0].mxu0
        %v2697 = vadd.f32 0.0, %v2696
        %v2698 = vpop.f32.mrb[0].mxu0
        %v2699 = vpop.f32.mrb[0].mxu0
        %v2700 = vadd.f32 0.0, %v2699
        %v2701 = vpop.f32.mrb[0].mxu0
        %2702 = vmatprep.mubr.bf16.mxu0 0
        %2703 = vmatmul.mubr.bf16.gmra.mrb[0].mxu0 %v2624
        %v2704 = vpop.f32.mrb[0].mxu0
        %v2705 = vadd.f32 0.0, %v2704
        %v2706 = vpop.f32.mrb[0].mxu0
        %v2707 = vpop.f32.mrb[0].mxu0
        %v2708 = vadd.f32 0.0, %v2707
        %v2709 = vpop.f32.mrb[0].mxu0
        %2710 = vmatprep.mubr.bf16.mxu0 0
        %2711 = vmatmul.mubr.bf16.gmra.mrb[0].mxu0 %v2627
        %v2712 = vpop.f32.mrb[0].mxu0
        %v2713 = vadd.f32 0.0, %v2712
        %v2714 = vpop.f32.mrb[0].mxu0
        %v2715 = vpop.f32.mrb[0].mxu0
        %v2716 = vadd.f32 0.0, %v2715
        %v2717 = vpop.f32.mrb[0].mxu0
        %2718 = vmatprep.mubr.bf16.mxu0 0
        %2719 = vmatmul.mubr.bf16.gmra.mrb[0].mxu0 %v2630
        %v2720 = vpop.f32.mrb[0].mxu0
        %v2721 = vadd.f32 0.0, %v2720
        %v2722 = vpop.f32.mrb[0].mxu0
        %v2723 = vpop.f32.mrb[0].mxu0
        %v2724 = vadd.f32 0.0, %v2723
        %v2725 = vpop.f32.mrb[0].mxu0
        %2726 = vmatprep.mubr.bf16.mxu0 0
        %2727 = vmatmul.mubr.bf16.gmra.mrb[0].mxu0 %v2633
        %v2728 = vpop.f32.mrb[0].mxu0
        %v2729 = vadd.f32 0.0, %v2728
        %v2730 = vpop.f32.mrb[0].mxu0
        %v2731 = vpop.f32.mrb[0].mxu0
        %v2732 = vadd.f32 0.0, %v2731
        %v2733 = vpop.f32.mrb[0].mxu0
        %2734 = vdwg.mxu0
        %v2735 = vadd.f32 %v2347, %v2673
        %v2736 = vadd.f32 %v2348, %v2676
        %v2737 = vadd.f32 %v2349, %v2681
        %v2738 = vadd.f32 %v2350, %v2684
        %v2739 = vadd.f32 %v2351, %v2689
        %v2740 = vadd.f32 %v2352, %v2692
        %v2741 = vadd.f32 %v2353, %v2697
        %v2742 = vadd.f32 %v2354, %v2700
        %v2743 = vadd.f32 %v2355, %v2705
        %v2744 = vadd.f32 %v2356, %v2708
        %v2745 = vadd.f32 %v2357, %v2713
        %v2746 = vadd.f32 %v2358, %v2716
        %v2747 = vadd.f32 %v2359, %v2721
        %v2748 = vadd.f32 %v2360, %v2724
        %v2749 = vadd.f32 %v2361, %v2729
        %v2750 = vadd.f32 %v2362, %v2732
        %v2751 = vld [vmem:[%s2] sm:$0x1]
        %v2753 = vlaneseq
        %v2754 = vshrl.u32 %v2753, 7
        %v2755 = vsub.s32 0, %v2754
        %v2756 = vrot.slane %v2751, %v2755
        %v2758 = vmul.f32 %v2735, %v2756
        %v2759 = vmul.f32 %v2736, %v2756
        %v2760 = vmul.f32 %v2737, %v2756
        %v2761 = vmul.f32 %v2738, %v2756
        %v2762 = vmul.f32 %v2739, %v2756
        %v2763 = vmul.f32 %v2740, %v2756
        %v2764 = vmul.f32 %v2741, %v2756
        %v2765 = vmul.f32 %v2742, %v2756
        %v2766 = vmul.f32 %v2743, %v2756
        %v2767 = vmul.f32 %v2744, %v2756
        %v2768 = vmul.f32 %v2745, %v2756
        %v2769 = vmul.f32 %v2746, %v2756
        %v2770 = vmul.f32 %v2747, %v2756
        %v2771 = vmul.f32 %v2748, %v2756
        %v2772 = vmul.f32 %v2749, %v2756
        %v2773 = vmul.f32 %v2750, %v2756
        %v2774 = vld [vmem:[%s3] sm:$0x1]
        %v2776 = vlaneseq
        %v2777 = vshrl.u32 %v2776, 7
        %v2778 = vsub.s32 0, %v2777
        %v2779 = vrot.slane %v2774, %v2778
        %v2781 = vadd.f32 %v2758, %v2779
        %v2782 = vadd.f32 %v2759, %v2779
        %v2783 = vadd.f32 %v2760, %v2779
        %v2784 = vadd.f32 %v2761, %v2779
        %v2785 = vadd.f32 %v2762, %v2779
        %v2786 = vadd.f32 %v2763, %v2779
        %v2787 = vadd.f32 %v2764, %v2779
        %v2788 = vadd.f32 %v2765, %v2779
        %v2789 = vadd.f32 %v2766, %v2779
        %v2790 = vadd.f32 %v2767, %v2779
        %v2791 = vadd.f32 %v2768, %v2779
        %v2792 = vadd.f32 %v2769, %v2779
        %v2793 = vadd.f32 %v2770, %v2779
        %v2794 = vadd.f32 %v2771, %v2779
        %v2795 = vadd.f32 %v2772, %v2779
        %v2796 = vadd.f32 %v2773, %v2779
        %v2797 = vmax.f32 %v2781, 0.0
        %v2798 = vmax.f32 %v2782, 0.0
        %v2799 = vmax.f32 %v2783, 0.0
        %v2800 = vmax.f32 %v2784, 0.0
        %v2801 = vmax.f32 %v2785, 0.0
        %v2802 = vmax.f32 %v2786, 0.0
        %v2803 = vmax.f32 %v2787, 0.0
        %v2804 = vmax.f32 %v2788, 0.0
        %v2805 = vmax.f32 %v2789, 0.0
        %v2806 = vmax.f32 %v2790, 0.0
        %v2807 = vmax.f32 %v2791, 0.0
        %v2808 = vmax.f32 %v2792, 0.0
        %v2809 = vmax.f32 %v2793, 0.0
        %v2810 = vmax.f32 %v2794, 0.0
        %v2811 = vmax.f32 %v2795, 0.0
        %v2812 = vmax.f32 %v2796, 0.0
        %v2813 = vpack.c.bf16 %v2798, %v2797
        %v2814 = vpack.c.bf16 %v2800, %v2799
        %v2815 = vpack.c.bf16 %v2802, %v2801
        %v2816 = vpack.c.bf16 %v2804, %v2803
        %v2817 = vpack.c.bf16 %v2806, %v2805
        %v2818 = vpack.c.bf16 %v2808, %v2807
        %v2819 = vpack.c.bf16 %v2810, %v2809
        %v2820 = vpack.c.bf16 %v2812, %v2811
        %v2829 = vunpack.c.l.b16 %v2813
        %v2830 = vunpack.c.h.b16 %v2813
        %v2831 = vunpack.c.l.b16 %v2814
        %v2832 = vunpack.c.h.b16 %v2814
        %v2833 = vunpack.c.l.b16 %v2815
        %v2834 = vunpack.c.h.b16 %v2815
        %v2835 = vunpack.c.l.b16 %v2816
        %v2836 = vunpack.c.h.b16 %v2816
        %v2837 = vunpack.c.l.b16 %v2817
        %v2838 = vunpack.c.h.b16 %v2817
        %v2839 = vunpack.c.l.b16 %v2818
        %v2840 = vunpack.c.h.b16 %v2818
        %v2841 = vunpack.c.l.b16 %v2819
        %v2842 = vunpack.c.h.b16 %v2819
        %v2843 = vunpack.c.l.b16 %v2820
        %v2844 = vunpack.c.h.b16 %v2820
        %v2845 = vpack.c.b16 %v2829, %v2829
        %v2846 = vpack.c.b16 %v2830, %v2830
        %v2847 = vpack.c.b16 %v2831, %v2831
        %v2848 = vpack.c.b16 %v2832, %v2832
        %v2849 = vpack.c.b16 %v2833, %v2833
        %v2850 = vpack.c.b16 %v2834, %v2834
        %v2851 = vpack.c.b16 %v2835, %v2835
        %v2852 = vpack.c.b16 %v2836, %v2836
        %v2853 = vpack.c.b16 %v2837, %v2837
        %v2854 = vpack.c.b16 %v2838, %v2838
        %v2855 = vpack.c.b16 %v2839, %v2839
        %v2856 = vpack.c.b16 %v2840, %v2840
        %v2857 = vpack.c.b16 %v2841, %v2841
        %v2858 = vpack.c.b16 %v2842, %v2842
        %v2859 = vpack.c.b16 %v2843, %v2843
        %v2860 = vpack.c.b16 %v2844, %v2844
        %v2862 = vshrl.u32 %v2845, 16
        %v2864 = vrot.slane %v2862, 7
        %v2865 = vshll.u32 %v2845, 16
        %v2867 = vor.u32 %v2864, %v2865
        %v2869 = vshrl.u32 %v2846, 16
        %v2871 = vrot.slane %v2869, 7
        %v2872 = vshll.u32 %v2846, 16
        %v2874 = vor.u32 %v2871, %v2872
        %v2876 = vshrl.u32 %v2847, 16
        %v2878 = vrot.slane %v2876, 7
        %v2879 = vshll.u32 %v2847, 16
        %v2881 = vor.u32 %v2878, %v2879
        %v2883 = vshrl.u32 %v2848, 16
        %v2885 = vrot.slane %v2883, 7
        %v2886 = vshll.u32 %v2848, 16
        %v2888 = vor.u32 %v2885, %v2886
        %v2890 = vshrl.u32 %v2849, 16
        %v2892 = vrot.slane %v2890, 7
        %v2893 = vshll.u32 %v2849, 16
        %v2895 = vor.u32 %v2892, %v2893
        %v2897 = vshrl.u32 %v2850, 16
        %v2899 = vrot.slane %v2897, 7
        %v2900 = vshll.u32 %v2850, 16
        %v2902 = vor.u32 %v2899, %v2900
        %v2904 = vshrl.u32 %v2851, 16
        %v2906 = vrot.slane %v2904, 7
        %v2907 = vshll.u32 %v2851, 16
        %v2909 = vor.u32 %v2906, %v2907
        %v2911 = vshrl.u32 %v2852, 16
        %v2913 = vrot.slane %v2911, 7
        %v2914 = vshll.u32 %v2852, 16
        %v2916 = vor.u32 %v2913, %v2914
        %v2918 = vshrl.u32 %v2853, 16
        %v2920 = vrot.slane %v2918, 7
        %v2921 = vshll.u32 %v2853, 16
        %v2923 = vor.u32 %v2920, %v2921
        %v2925 = vshrl.u32 %v2854, 16
        %v2927 = vrot.slane %v2925, 7
        %v2928 = vshll.u32 %v2854, 16
        %v2930 = vor.u32 %v2927, %v2928
        %v2932 = vshrl.u32 %v2855, 16
        %v2934 = vrot.slane %v2932, 7
        %v2935 = vshll.u32 %v2855, 16
        %v2937 = vor.u32 %v2934, %v2935
        %v2939 = vshrl.u32 %v2856, 16
        %v2941 = vrot.slane %v2939, 7
        %v2942 = vshll.u32 %v2856, 16
        %v2944 = vor.u32 %v2941, %v2942
        %v2946 = vshrl.u32 %v2857, 16
        %v2948 = vrot.slane %v2946, 7
        %v2949 = vshll.u32 %v2857, 16
        %v2951 = vor.u32 %v2948, %v2949
        %v2953 = vshrl.u32 %v2858, 16
        %v2955 = vrot.slane %v2953, 7
        %v2956 = vshll.u32 %v2858, 16
        %v2958 = vor.u32 %v2955, %v2956
        %v2960 = vshrl.u32 %v2859, 16
        %v2962 = vrot.slane %v2960, 7
        %v2963 = vshll.u32 %v2859, 16
        %v2965 = vor.u32 %v2962, %v2963
        %v2967 = vshrl.u32 %v2860, 16
        %v2969 = vrot.slane %v2967, 7
        %v2970 = vshll.u32 %v2860, 16
        %v2972 = vor.u32 %v2969, %v2970
        %vm2989 = vcmask 1040384
        %vm2990 = vsmask.f32 256
        %vm2991 = vmand %vm2989, %vm2990
        %v2992 = vsel %vm2991, 0, %v2867
        %v2993 = vsel %vm2991, 0, %v2874
        %v2994 = vsel %vm2991, 0, %v2881
        %v2995 = vsel %vm2991, 0, %v2888
        %v2996 = vsel %vm2991, 0, %v2895
        %v2997 = vsel %vm2991, 0, %v2902
        %v2998 = vsel %vm2991, 0, %v2909
        %v2999 = vsel %vm2991, 0, %v2916
        %v3000 = vsel %vm2991, 0, %v2923
        %v3001 = vsel %vm2991, 0, %v2930
        %v3002 = vsel %vm2991, 0, %v2937
        %v3003 = vsel %vm2991, 0, %v2944
        %v3004 = vsel %vm2991, 0, %v2951
        %v3005 = vsel %vm2991, 0, %v2958
        %v3006 = vsel %vm2991, 0, %v2965
        %v3007 = vsel %vm2991, 0, %v2972
        %vm3008 = vcmask 1044480
        %vm3009 = vsmask.f32 4352
        %vm3010 = vmand %vm3008, %vm3009
        %v3011 = vsel %vm3010, %v2992, 0
        %v3012 = vsel %vm3010, %v2993, 0
        %v3013 = vsel %vm3010, %v2994, 0
        %v3014 = vsel %vm3010, %v2995, 0
        %v3015 = vsel %vm3010, %v2996, 0
        %v3016 = vsel %vm3010, %v2997, 0
        %v3017 = vsel %vm3010, %v2998, 0
        %v3018 = vsel %vm3010, %v2999, 0
        %v3019 = vsel %vm3010, %v3000, 0
        %v3020 = vsel %vm3010, %v3001, 0
        %v3021 = vsel %vm3010, %v3002, 0
        %v3022 = vsel %vm3010, %v3003, 0
        %v3023 = vsel %vm3010, %v3004, 0
        %v3024 = vsel %vm3010, %v3005, 0
        %v3025 = vsel %vm3010, %v3006, 0
        %v3026 = vsel %vm3010, %v3007, 0
        %3027 = vst [vmem:[#allocation2] sm:$0xff] 0
        %3028 = vst [vmem:[#allocation2 + $0x8] sm:$0xff] %v3011
        %3029 = vst [vmem:[#allocation2 + $0x10] sm:$0xff] %v3012
        %3030 = vst [vmem:[#allocation2 + $0x18] sm:$0xff] %v3013
        %3031 = vst [vmem:[#allocation2 + $0x20] sm:$0xff] %v3014
        %3032 = vst [vmem:[#allocation2 + $0x28] sm:$0xff] %v3015
        %3033 = vst [vmem:[#allocation2 + $0x30] sm:$0xff] %v3016
        %3034 = vst [vmem:[#allocation2 + $0x38] sm:$0xff] %v3017
        %3035 = vst [vmem:[#allocation2 + $0x40] sm:$0xff] %v3018
        %3036 = vst [vmem:[#allocation2 + $0x48] sm:$0xff] 0
        %3037 = vst [vmem:[#allocation2 + $0x50] sm:$0xff] 0
        %3038 = vst [vmem:[#allocation2 + $0x58] sm:$0xff] %v3019
        %3039 = vst [vmem:[#allocation2 + $0x60] sm:$0xff] %v3020
        %3040 = vst [vmem:[#allocation2 + $0x68] sm:$0xff] %v3021
        %3041 = vst [vmem:[#allocation2 + $0x70] sm:$0xff] %v3022
        %3042 = vst [vmem:[#allocation2 + $0x78] sm:$0xff] %v3023
        %3043 = vst [vmem:[#allocation2 + $0x80] sm:$0xff] %v3024
        %3044 = vst [vmem:[#allocation2 + $0x88] sm:$0xff] %v3025
        %3045 = vst [vmem:[#allocation2 + $0x90] sm:$0xff] %v3026
        %3046 = vst [vmem:[#allocation2 + $0x98] sm:$0xff] 0
        %v3047 = vld [vmem:[%s4] sm:$0xf]
        %v3048 = vld [vmem:[%s4 + $0x4] sm:$0xf]
        %v3049 = vld [vmem:[%s4 + $0x8] sm:$0xf]
        %v3050 = vld [vmem:[%s4 + $0xc] sm:$0xf]
        %v3051 = vld [vmem:[%s4 + $0x10] sm:$0xf]
        %v3052 = vld [vmem:[%s4 + $0x14] sm:$0xf]
        %v3053 = vld [vmem:[%s4 + $0x18] sm:$0xf]
        %v3054 = vld [vmem:[%s4 + $0x1c] sm:$0xf]
        %v3055 = vld [vmem:[%s4 + $0x20] sm:$0xf]
        %v3056 = vld [vmem:[%s4 + $0x24] sm:$0xf]
        %v3057 = vld [vmem:[%s4 + $0x28] sm:$0xf]
        %v3058 = vld [vmem:[%s4 + $0x2c] sm:$0xf]
        %v3059 = vld [vmem:[%s4 + $0x30] sm:$0xf]
        %v3060 = vld [vmem:[%s4 + $0x34] sm:$0xf]
        %v3061 = vld [vmem:[%s4 + $0x38] sm:$0xf]
        %v3062 = vld [vmem:[%s4 + $0x3c] sm:$0xf]
        %v3063 = vld [vmem:[%s4 + $0x40] sm:$0xf]
        %v3064 = vld [vmem:[%s4 + $0x44] sm:$0xf]
        %v3065 = vld [vmem:[%s4 + $0x48] sm:$0xf]
        %v3066 = vld [vmem:[%s4 + $0x4c] sm:$0xf]
        %v3067 = vld [vmem:[%s4 + $0x50] sm:$0xf]
        %v3068 = vld [vmem:[%s4 + $0x54] sm:$0xf]
        %v3069 = vld [vmem:[%s4 + $0x58] sm:$0xf]
        %v3070 = vld [vmem:[%s4 + $0x5c] sm:$0xf]
        %v3071 = vld [vmem:[%s4 + $0x60] sm:$0xf]
        %v3072 = vld [vmem:[%s4 + $0x64] sm:$0xf]
        %v3073 = vld [vmem:[%s4 + $0x68] sm:$0xf]
        %v3074 = vld [vmem:[%s4 + $0x6c] sm:$0xf]
        %v3075 = vld [vmem:[%s4 + $0x70] sm:$0xf]
        %v3076 = vld [vmem:[%s4 + $0x74] sm:$0xf]
        %v3077 = vld [vmem:[%s4 + $0x78] sm:$0xf]
        %v3078 = vld [vmem:[%s4 + $0x7c] sm:$0xf]
        %v3079 = vld [vmem:[%s4 + $0x80] sm:$0xf]
        %v3080 = vld [vmem:[%s4 + $0x84] sm:$0xf]
        %v3081 = vld [vmem:[%s4 + $0x88] sm:$0xf]
        %v3082 = vld [vmem:[%s4 + $0x8c] sm:$0xf]
        %v3083 = vld [vmem:[%s4 + $0x90] sm:$0xf]
        %v3084 = vld [vmem:[%s4 + $0x94] sm:$0xf]
        %v3085 = vld [vmem:[%s4 + $0x98] sm:$0xf]
        %v3086 = vld [vmem:[%s4 + $0x9c] sm:$0xf]
        %v3087 = vld [vmem:[%s4 + $0xa0] sm:$0xf]
        %v3088 = vld [vmem:[%s4 + $0xa4] sm:$0xf]
        %v3089 = vld [vmem:[%s4 + $0xa8] sm:$0xf]
        %v3090 = vld [vmem:[%s4 + $0xac] sm:$0xf]
        %v3091 = vld [vmem:[%s4 + $0xb0] sm:$0xf]
        %v3092 = vld [vmem:[%s4 + $0xb4] sm:$0xf]
        %v3093 = vld [vmem:[%s4 + $0xb8] sm:$0xf]
        %v3094 = vld [vmem:[%s4 + $0xbc] sm:$0xf]
        %v3095 = vld [vmem:[#allocation2] sm:$0xf]
        %v3096 = vld [vmem:[#allocation2 + $0x8] sm:$0xf]
        %v3097 = vld [vmem:[#allocation2 + $0x10] sm:$0xf]
        %v3098 = vld [vmem:[#allocation2 + $0x18] sm:$0xf]
        %v3099 = vld [vmem:[#allocation2 + $0x20] sm:$0xf]
        %v3100 = vld [vmem:[#allocation2 + $0x28] sm:$0xf]
        %v3101 = vld [vmem:[#allocation2 + $0x30] sm:$0xf]
        %v3102 = vld [vmem:[#allocation2 + $0x38] sm:$0xf]
        %v3103 = vld [vmem:[#allocation2 + $0x50] sm:$0xf]
        %v3104 = vld [vmem:[#allocation2 + $0x58] sm:$0xf]
        %v3105 = vld [vmem:[#allocation2 + $0x60] sm:$0xf]
        %v3106 = vld [vmem:[#allocation2 + $0x68] sm:$0xf]
        %v3107 = vld [vmem:[#allocation2 + $0x70] sm:$0xf]
        %v3108 = vld [vmem:[#allocation2 + $0x78] sm:$0xf]
        %v3109 = vld [vmem:[#allocation2 + $0x80] sm:$0xf]
        %v3110 = vld [vmem:[#allocation2 + $0x88] sm:$0xf]
        %v3111 = vld [vmem:[#allocation2] sm:$0x1f]
        %v3112 = vld [vmem:[#allocation2 + $0x8] sm:$0x1f]
        %v3113 = vld [vmem:[#allocation2 + $0x10] sm:$0x1f]
        %v3114 = vld [vmem:[#allocation2 + $0x18] sm:$0x1f]
        %v3115 = vld [vmem:[#allocation2 + $0x20] sm:$0x1f]
        %v3116 = vld [vmem:[#allocation2 + $0x28] sm:$0x1f]
        %v3117 = vld [vmem:[#allocation2 + $0x30] sm:$0x1f]
        %v3118 = vld [vmem:[#allocation2 + $0x38] sm:$0x1f]
        %v3119 = vld [vmem:[#allocation2 + $0x50] sm:$0x1f]
        %v3120 = vld [vmem:[#allocation2 + $0x58] sm:$0x1f]
        %v3121 = vld [vmem:[#allocation2 + $0x60] sm:$0x1f]
        %v3122 = vld [vmem:[#allocation2 + $0x68] sm:$0x1f]
        %v3123 = vld [vmem:[#allocation2 + $0x70] sm:$0x1f]
        %v3124 = vld [vmem:[#allocation2 + $0x78] sm:$0x1f]
        %v3125 = vld [vmem:[#allocation2 + $0x80] sm:$0x1f]
        %v3126 = vld [vmem:[#allocation2 + $0x88] sm:$0x1f]
        %v3127 = vld [vmem:[#allocation2] sm:$0x1e]
        %v3128 = vld [vmem:[#allocation2 + $0x8] sm:$0x1e]
        %v3129 = vld [vmem:[#allocation2 + $0x10] sm:$0x1e]
        %v3130 = vld [vmem:[#allocation2 + $0x18] sm:$0x1e]
        %v3131 = vld [vmem:[#allocation2 + $0x20] sm:$0x1e]
        %v3132 = vld [vmem:[#allocation2 + $0x28] sm:$0x1e]
        %v3133 = vld [vmem:[#allocation2 + $0x30] sm:$0x1e]
        %v3134 = vld [vmem:[#allocation2 + $0x38] sm:$0x1e]
        %v3135 = vld [vmem:[#allocation2 + $0x50] sm:$0x1e]
        %v3136 = vld [vmem:[#allocation2 + $0x58] sm:$0x1e]
        %v3137 = vld [vmem:[#allocation2 + $0x60] sm:$0x1e]
        %v3138 = vld [vmem:[#allocation2 + $0x68] sm:$0x1e]
        %v3139 = vld [vmem:[#allocation2 + $0x70] sm:$0x1e]
        %v3140 = vld [vmem:[#allocation2 + $0x78] sm:$0x1e]
        %v3141 = vld [vmem:[#allocation2 + $0x80] sm:$0x1e]
        %v3142 = vld [vmem:[#allocation2 + $0x88] sm:$0x1e]
        %v3144 = vshrl.u32 %v3111, 16
        %v3146 = vshll.u32 %v3111, 16
        %v3148 = vrot.slane %v3146, 1
        %v3149 = vor.u32 %v3144, %v3148
        %v3151 = vshrl.u32 %v3112, 16
        %v3153 = vshll.u32 %v3112, 16
        %v3155 = vrot.slane %v3153, 1
        %v3156 = vor.u32 %v3151, %v3155
        %v3158 = vshrl.u32 %v3113, 16
        %v3160 = vshll.u32 %v3113, 16
        %v3162 = vrot.slane %v3160, 1
        %v3163 = vor.u32 %v3158, %v3162
        %v3165 = vshrl.u32 %v3114, 16
        %v3167 = vshll.u32 %v3114, 16
        %v3169 = vrot.slane %v3167, 1
        %v3170 = vor.u32 %v3165, %v3169
        %v3172 = vshrl.u32 %v3115, 16
        %v3174 = vshll.u32 %v3115, 16
        %v3176 = vrot.slane %v3174, 1
        %v3177 = vor.u32 %v3172, %v3176
        %v3179 = vshrl.u32 %v3116, 16
        %v3181 = vshll.u32 %v3116, 16
        %v3183 = vrot.slane %v3181, 1
        %v3184 = vor.u32 %v3179, %v3183
        %v3186 = vshrl.u32 %v3117, 16
        %v3188 = vshll.u32 %v3117, 16
        %v3190 = vrot.slane %v3188, 1
        %v3191 = vor.u32 %v3186, %v3190
        %v3193 = vshrl.u32 %v3118, 16
        %v3195 = vshll.u32 %v3118, 16
        %v3197 = vrot.slane %v3195, 1
        %v3198 = vor.u32 %v3193, %v3197
        %v3200 = vshrl.u32 %v3119, 16
        %v3202 = vshll.u32 %v3119, 16
        %v3204 = vrot.slane %v3202, 1
        %v3205 = vor.u32 %v3200, %v3204
        %v3207 = vshrl.u32 %v3120, 16
        %v3209 = vshll.u32 %v3120, 16
        %v3211 = vrot.slane %v3209, 1
        %v3212 = vor.u32 %v3207, %v3211
        %v3214 = vshrl.u32 %v3121, 16
        %v3216 = vshll.u32 %v3121, 16
        %v3218 = vrot.slane %v3216, 1
        %v3219 = vor.u32 %v3214, %v3218
        %v3221 = vshrl.u32 %v3122, 16
        %v3223 = vshll.u32 %v3122, 16
        %v3225 = vrot.slane %v3223, 1
        %v3226 = vor.u32 %v3221, %v3225
        %v3228 = vshrl.u32 %v3123, 16
        %v3230 = vshll.u32 %v3123, 16
        %v3232 = vrot.slane %v3230, 1
        %v3233 = vor.u32 %v3228, %v3232
        %v3235 = vshrl.u32 %v3124, 16
        %v3237 = vshll.u32 %v3124, 16
        %v3239 = vrot.slane %v3237, 1
        %v3240 = vor.u32 %v3235, %v3239
        %v3242 = vshrl.u32 %v3125, 16
        %v3244 = vshll.u32 %v3125, 16
        %v3246 = vrot.slane %v3244, 1
        %v3247 = vor.u32 %v3242, %v3246
        %v3249 = vshrl.u32 %v3126, 16
        %v3251 = vshll.u32 %v3126, 16
        %v3253 = vrot.slane %v3251, 1
        %v3254 = vor.u32 %v3249, %v3253
        %v3271 = vrot.slane %v3127, 1
        %v3272 = vrot.slane %v3128, 1
        %v3273 = vrot.slane %v3129, 1
        %v3274 = vrot.slane %v3130, 1
        %v3275 = vrot.slane %v3131, 1
        %v3276 = vrot.slane %v3132, 1
        %v3277 = vrot.slane %v3133, 1
        %v3278 = vrot.slane %v3134, 1
        %v3279 = vrot.slane %v3135, 1
        %v3280 = vrot.slane %v3136, 1
        %v3281 = vrot.slane %v3137, 1
        %v3282 = vrot.slane %v3138, 1
        %v3283 = vrot.slane %v3139, 1
        %v3284 = vrot.slane %v3140, 1
        %v3285 = vrot.slane %v3141, 1
        %v3286 = vrot.slane %v3142, 1
        %v3303 = vunpack.c.l.b16 %v3095
        %v3304 = vunpack.c.l.b16 %v3149
        %v3305 = vunpack.c.l.b16 %v3271
        %v3306 = vunpack.c.l.b16 %v3096
        %v3307 = vunpack.c.l.b16 %v3156
        %v3308 = vunpack.c.l.b16 %v3272
        %v3309 = vunpack.c.l.b16 %v3097
        %v3310 = vunpack.c.l.b16 %v3163
        %v3311 = vunpack.c.l.b16 %v3273
        %v3312 = vunpack.c.l.b16 %v3098
        %v3313 = vunpack.c.l.b16 %v3170
        %v3314 = vunpack.c.l.b16 %v3274
        %v3315 = vunpack.c.l.b16 %v3099
        %v3316 = vunpack.c.l.b16 %v3177
        %v3317 = vunpack.c.l.b16 %v3275
        %v3318 = vunpack.c.l.b16 %v3100
        %v3319 = vunpack.c.l.b16 %v3184
        %v3320 = vunpack.c.l.b16 %v3276
        %v3321 = vunpack.c.l.b16 %v3101
        %v3322 = vunpack.c.l.b16 %v3191
        %v3323 = vunpack.c.l.b16 %v3277
        %v3324 = vunpack.c.l.b16 %v3102
        %v3325 = vunpack.c.l.b16 %v3198
        %v3326 = vunpack.c.l.b16 %v3278
        %v3327 = vunpack.c.l.b16 %v3103
        %v3328 = vunpack.c.l.b16 %v3205
        %v3329 = vunpack.c.l.b16 %v3279
        %v3330 = vunpack.c.l.b16 %v3104
        %v3331 = vunpack.c.l.b16 %v3212
        %v3332 = vunpack.c.l.b16 %v3280
        %v3333 = vunpack.c.l.b16 %v3105
        %v3334 = vunpack.c.l.b16 %v3219
        %v3335 = vunpack.c.l.b16 %v3281
        %v3336 = vunpack.c.l.b16 %v3106
        %v3337 = vunpack.c.l.b16 %v3226
        %v3338 = vunpack.c.l.b16 %v3282
        %v3339 = vunpack.c.l.b16 %v3107
        %v3340 = vunpack.c.l.b16 %v3233
        %v3341 = vunpack.c.l.b16 %v3283
        %v3342 = vunpack.c.l.b16 %v3108
        %v3343 = vunpack.c.l.b16 %v3240
        %v3344 = vunpack.c.l.b16 %v3284
        %v3345 = vunpack.c.l.b16 %v3109
        %v3346 = vunpack.c.l.b16 %v3247
        %v3347 = vunpack.c.l.b16 %v3285
        %v3348 = vunpack.c.l.b16 %v3110
        %v3349 = vunpack.c.l.b16 %v3254
        %v3350 = vunpack.c.l.b16 %v3286
        %s3351 = scalar_lea.vmem %s4, 192
        %v3352 = vld [vmem:[%s3351] sm:$0xf]
        %v3353 = vld [vmem:[%s3351 + $0x4] sm:$0xf]
        %v3354 = vld [vmem:[%s3351 + $0x8] sm:$0xf]
        %v3355 = vld [vmem:[%s3351 + $0xc] sm:$0xf]
        %v3356 = vld [vmem:[%s3351 + $0x10] sm:$0xf]
        %v3357 = vld [vmem:[%s3351 + $0x14] sm:$0xf]
        %v3358 = vld [vmem:[%s3351 + $0x18] sm:$0xf]
        %v3359 = vld [vmem:[%s3351 + $0x1c] sm:$0xf]
        %v3360 = vld [vmem:[%s3351 + $0x20] sm:$0xf]
        %v3361 = vld [vmem:[%s3351 + $0x24] sm:$0xf]
        %v3362 = vld [vmem:[%s3351 + $0x28] sm:$0xf]
        %v3363 = vld [vmem:[%s3351 + $0x2c] sm:$0xf]
        %v3364 = vld [vmem:[%s3351 + $0x30] sm:$0xf]
        %v3365 = vld [vmem:[%s3351 + $0x34] sm:$0xf]
        %v3366 = vld [vmem:[%s3351 + $0x38] sm:$0xf]
        %v3367 = vld [vmem:[%s3351 + $0x3c] sm:$0xf]
        %v3368 = vld [vmem:[%s3351 + $0x40] sm:$0xf]
        %v3369 = vld [vmem:[%s3351 + $0x44] sm:$0xf]
        %v3370 = vld [vmem:[%s3351 + $0x48] sm:$0xf]
        %v3371 = vld [vmem:[%s3351 + $0x4c] sm:$0xf]
        %v3372 = vld [vmem:[%s3351 + $0x50] sm:$0xf]
        %v3373 = vld [vmem:[%s3351 + $0x54] sm:$0xf]
        %v3374 = vld [vmem:[%s3351 + $0x58] sm:$0xf]
        %v3375 = vld [vmem:[%s3351 + $0x5c] sm:$0xf]
        %v3376 = vld [vmem:[%s3351 + $0x60] sm:$0xf]
        %v3377 = vld [vmem:[%s3351 + $0x64] sm:$0xf]
        %v3378 = vld [vmem:[%s3351 + $0x68] sm:$0xf]
        %v3379 = vld [vmem:[%s3351 + $0x6c] sm:$0xf]
        %v3380 = vld [vmem:[%s3351 + $0x70] sm:$0xf]
        %v3381 = vld [vmem:[%s3351 + $0x74] sm:$0xf]
        %v3382 = vld [vmem:[%s3351 + $0x78] sm:$0xf]
        %v3383 = vld [vmem:[%s3351 + $0x7c] sm:$0xf]
        %v3384 = vld [vmem:[%s3351 + $0x80] sm:$0xf]
        %v3385 = vld [vmem:[%s3351 + $0x84] sm:$0xf]
        %v3386 = vld [vmem:[%s3351 + $0x88] sm:$0xf]
        %v3387 = vld [vmem:[%s3351 + $0x8c] sm:$0xf]
        %v3388 = vld [vmem:[%s3351 + $0x90] sm:$0xf]
        %v3389 = vld [vmem:[%s3351 + $0x94] sm:$0xf]
        %v3390 = vld [vmem:[%s3351 + $0x98] sm:$0xf]
        %v3391 = vld [vmem:[%s3351 + $0x9c] sm:$0xf]
        %v3392 = vld [vmem:[%s3351 + $0xa0] sm:$0xf]
        %v3393 = vld [vmem:[%s3351 + $0xa4] sm:$0xf]
        %v3394 = vld [vmem:[%s3351 + $0xa8] sm:$0xf]
        %v3395 = vld [vmem:[%s3351 + $0xac] sm:$0xf]
        %v3396 = vld [vmem:[%s3351 + $0xb0] sm:$0xf]
        %v3397 = vld [vmem:[%s3351 + $0xb4] sm:$0xf]
        %v3398 = vld [vmem:[%s3351 + $0xb8] sm:$0xf]
        %v3399 = vld [vmem:[%s3351 + $0xbc] sm:$0xf]
        %s3400 = scalar_lea.vmem [#allocation2], 8
        %v3401 = vld [vmem:[%s3400] sm:$0xf]
        %v3402 = vld [vmem:[%s3400 + $0x8] sm:$0xf]
        %v3403 = vld [vmem:[%s3400 + $0x10] sm:$0xf]
        %v3404 = vld [vmem:[%s3400 + $0x18] sm:$0xf]
        %v3405 = vld [vmem:[%s3400 + $0x20] sm:$0xf]
        %v3406 = vld [vmem:[%s3400 + $0x28] sm:$0xf]
        %v3407 = vld [vmem:[%s3400 + $0x30] sm:$0xf]
        %v3408 = vld [vmem:[%s3400 + $0x38] sm:$0xf]
        %v3409 = vld [vmem:[%s3400 + $0x50] sm:$0xf]
        %v3410 = vld [vmem:[%s3400 + $0x58] sm:$0xf]
        %v3411 = vld [vmem:[%s3400 + $0x60] sm:$0xf]
        %v3412 = vld [vmem:[%s3400 + $0x68] sm:$0xf]
        %v3413 = vld [vmem:[%s3400 + $0x70] sm:$0xf]
        %v3414 = vld [vmem:[%s3400 + $0x78] sm:$0xf]
        %v3415 = vld [vmem:[%s3400 + $0x80] sm:$0xf]
        %v3416 = vld [vmem:[%s3400 + $0x88] sm:$0xf]
        %v3417 = vld [vmem:[%s3400] sm:$0x1f]
        %v3418 = vld [vmem:[%s3400 + $0x8] sm:$0x1f]
        %v3419 = vld [vmem:[%s3400 + $0x10] sm:$0x1f]
        %v3420 = vld [vmem:[%s3400 + $0x18] sm:$0x1f]
        %v3421 = vld [vmem:[%s3400 + $0x20] sm:$0x1f]
        %v3422 = vld [vmem:[%s3400 + $0x28] sm:$0x1f]
        %v3423 = vld [vmem:[%s3400 + $0x30] sm:$0x1f]
        %v3424 = vld [vmem:[%s3400 + $0x38] sm:$0x1f]
        %v3425 = vld [vmem:[%s3400 + $0x50] sm:$0x1f]
        %v3426 = vld [vmem:[%s3400 + $0x58] sm:$0x1f]
        %v3427 = vld [vmem:[%s3400 + $0x60] sm:$0x1f]
        %v3428 = vld [vmem:[%s3400 + $0x68] sm:$0x1f]
        %v3429 = vld [vmem:[%s3400 + $0x70] sm:$0x1f]
        %v3430 = vld [vmem:[%s3400 + $0x78] sm:$0x1f]
        %v3431 = vld [vmem:[%s3400 + $0x80] sm:$0x1f]
        %v3432 = vld [vmem:[%s3400 + $0x88] sm:$0x1f]
        %v3433 = vld [vmem:[%s3400] sm:$0x1e]
        %v3434 = vld [vmem:[%s3400 + $0x8] sm:$0x1e]
        %v3435 = vld [vmem:[%s3400 + $0x10] sm:$0x1e]
        %v3436 = vld [vmem:[%s3400 + $0x18] sm:$0x1e]
        %v3437 = vld [vmem:[%s3400 + $0x20] sm:$0x1e]
        %v3438 = vld [vmem:[%s3400 + $0x28] sm:$0x1e]
        %v3439 = vld [vmem:[%s3400 + $0x30] sm:$0x1e]
        %v3440 = vld [vmem:[%s3400 + $0x38] sm:$0x1e]
        %v3441 = vld [vmem:[%s3400 + $0x50] sm:$0x1e]
        %v3442 = vld [vmem:[%s3400 + $0x58] sm:$0x1e]
        %v3443 = vld [vmem:[%s3400 + $0x60] sm:$0x1e]
        %v3444 = vld [vmem:[%s3400 + $0x68] sm:$0x1e]
        %v3445 = vld [vmem:[%s3400 + $0x70] sm:$0x1e]
        %v3446 = vld [vmem:[%s3400 + $0x78] sm:$0x1e]
        %v3447 = vld [vmem:[%s3400 + $0x80] sm:$0x1e]
        %v3448 = vld [vmem:[%s3400 + $0x88] sm:$0x1e]
        %v3450 = vshrl.u32 %v3417, 16
        %v3452 = vshll.u32 %v3417, 16
        %v3454 = vrot.slane %v3452, 1
        %v3455 = vor.u32 %v3450, %v3454
        %v3457 = vshrl.u32 %v3418, 16
        %v3459 = vshll.u32 %v3418, 16
        %v3461 = vrot.slane %v3459, 1
        %v3462 = vor.u32 %v3457, %v3461
        %v3464 = vshrl.u32 %v3419, 16
        %v3466 = vshll.u32 %v3419, 16
        %v3468 = vrot.slane %v3466, 1
        %v3469 = vor.u32 %v3464, %v3468
        %v3471 = vshrl.u32 %v3420, 16
        %v3473 = vshll.u32 %v3420, 16
        %v3475 = vrot.slane %v3473, 1
        %v3476 = vor.u32 %v3471, %v3475
        %v3478 = vshrl.u32 %v3421, 16
        %v3480 = vshll.u32 %v3421, 16
        %v3482 = vrot.slane %v3480, 1
        %v3483 = vor.u32 %v3478, %v3482
        %v3485 = vshrl.u32 %v3422, 16
        %v3487 = vshll.u32 %v3422, 16
        %v3489 = vrot.slane %v3487, 1
        %v3490 = vor.u32 %v3485, %v3489
        %v3492 = vshrl.u32 %v3423, 16
        %v3494 = vshll.u32 %v3423, 16
        %v3496 = vrot.slane %v3494, 1
        %v3497 = vor.u32 %v3492, %v3496
        %v3499 = vshrl.u32 %v3424, 16
        %v3501 = vshll.u32 %v3424, 16
        %v3503 = vrot.slane %v3501, 1
        %v3504 = vor.u32 %v3499, %v3503
        %v3506 = vshrl.u32 %v3425, 16
        %v3508 = vshll.u32 %v3425, 16
        %v3510 = vrot.slane %v3508, 1
        %v3511 = vor.u32 %v3506, %v3510
        %v3513 = vshrl.u32 %v3426, 16
        %v3515 = vshll.u32 %v3426, 16
        %v3517 = vrot.slane %v3515, 1
        %v3518 = vor.u32 %v3513, %v3517
        %v3520 = vshrl.u32 %v3427, 16
        %v3522 = vshll.u32 %v3427, 16
        %v3524 = vrot.slane %v3522, 1
        %v3525 = vor.u32 %v3520, %v3524
        %v3527 = vshrl.u32 %v3428, 16
        %v3529 = vshll.u32 %v3428, 16
        %v3531 = vrot.slane %v3529, 1
        %v3532 = vor.u32 %v3527, %v3531
        %v3534 = vshrl.u32 %v3429, 16
        %v3536 = vshll.u32 %v3429, 16
        %v3538 = vrot.slane %v3536, 1
        %v3539 = vor.u32 %v3534, %v3538
        %v3541 = vshrl.u32 %v3430, 16
        %v3543 = vshll.u32 %v3430, 16
        %v3545 = vrot.slane %v3543, 1
        %v3546 = vor.u32 %v3541, %v3545
        %v3548 = vshrl.u32 %v3431, 16
        %v3550 = vshll.u32 %v3431, 16
        %v3552 = vrot.slane %v3550, 1
        %v3553 = vor.u32 %v3548, %v3552
        %v3555 = vshrl.u32 %v3432, 16
        %v3557 = vshll.u32 %v3432, 16
        %v3559 = vrot.slane %v3557, 1
        %v3560 = vor.u32 %v3555, %v3559
        %v3577 = vrot.slane %v3433, 1
        %v3578 = vrot.slane %v3434, 1
        %v3579 = vrot.slane %v3435, 1
        %v3580 = vrot.slane %v3436, 1
        %v3581 = vrot.slane %v3437, 1
        %v3582 = vrot.slane %v3438, 1
        %v3583 = vrot.slane %v3439, 1
        %v3584 = vrot.slane %v3440, 1
        %v3585 = vrot.slane %v3441, 1
        %v3586 = vrot.slane %v3442, 1
        %v3587 = vrot.slane %v3443, 1
        %v3588 = vrot.slane %v3444, 1
        %v3589 = vrot.slane %v3445, 1
        %v3590 = vrot.slane %v3446, 1
        %v3591 = vrot.slane %v3447, 1
        %v3592 = vrot.slane %v3448, 1
        %v3609 = vunpack.c.l.b16 %v3401
        %v3610 = vunpack.c.l.b16 %v3455
        %v3611 = vunpack.c.l.b16 %v3577
        %v3612 = vunpack.c.l.b16 %v3402
        %v3613 = vunpack.c.l.b16 %v3462
        %v3614 = vunpack.c.l.b16 %v3578
        %v3615 = vunpack.c.l.b16 %v3403
        %v3616 = vunpack.c.l.b16 %v3469
        %v3617 = vunpack.c.l.b16 %v3579
        %v3618 = vunpack.c.l.b16 %v3404
        %v3619 = vunpack.c.l.b16 %v3476
        %v3620 = vunpack.c.l.b16 %v3580
        %v3621 = vunpack.c.l.b16 %v3405
        %v3622 = vunpack.c.l.b16 %v3483
        %v3623 = vunpack.c.l.b16 %v3581
        %v3624 = vunpack.c.l.b16 %v3406
        %v3625 = vunpack.c.l.b16 %v3490
        %v3626 = vunpack.c.l.b16 %v3582
        %v3627 = vunpack.c.l.b16 %v3407
        %v3628 = vunpack.c.l.b16 %v3497
        %v3629 = vunpack.c.l.b16 %v3583
        %v3630 = vunpack.c.l.b16 %v3408
        %v3631 = vunpack.c.l.b16 %v3504
        %v3632 = vunpack.c.l.b16 %v3584
        %v3633 = vunpack.c.l.b16 %v3409
        %v3634 = vunpack.c.l.b16 %v3511
        %v3635 = vunpack.c.l.b16 %v3585
        %v3636 = vunpack.c.l.b16 %v3410
        %v3637 = vunpack.c.l.b16 %v3518
        %v3638 = vunpack.c.l.b16 %v3586
        %v3639 = vunpack.c.l.b16 %v3411
        %v3640 = vunpack.c.l.b16 %v3525
        %v3641 = vunpack.c.l.b16 %v3587
        %v3642 = vunpack.c.l.b16 %v3412
        %v3643 = vunpack.c.l.b16 %v3532
        %v3644 = vunpack.c.l.b16 %v3588
        %v3645 = vunpack.c.l.b16 %v3413
        %v3646 = vunpack.c.l.b16 %v3539
        %v3647 = vunpack.c.l.b16 %v3589
        %v3648 = vunpack.c.l.b16 %v3414
        %v3649 = vunpack.c.l.b16 %v3546
        %v3650 = vunpack.c.l.b16 %v3590
        %v3651 = vunpack.c.l.b16 %v3415
        %v3652 = vunpack.c.l.b16 %v3553
        %v3653 = vunpack.c.l.b16 %v3591
        %v3654 = vunpack.c.l.b16 %v3416
        %v3655 = vunpack.c.l.b16 %v3560
        %v3656 = vunpack.c.l.b16 %v3592
        %v3657 = vpack.c.b16 %v3612, %v3609
        %v3658 = vpack.c.b16 %v3613, %v3610
        %v3659 = vpack.c.b16 %v3614, %v3611
        %v3660 = vpack.c.b16 %v3618, %v3615
        %v3661 = vpack.c.b16 %v3619, %v3616
        %v3662 = vpack.c.b16 %v3620, %v3617
        %v3663 = vpack.c.b16 %v3624, %v3621
        %v3664 = vpack.c.b16 %v3625, %v3622
        %v3665 = vpack.c.b16 %v3626, %v3623
        %v3666 = vpack.c.b16 %v3630, %v3627
        %v3667 = vpack.c.b16 %v3631, %v3628
        %v3668 = vpack.c.b16 %v3632, %v3629
        %v3669 = vpack.c.b16 %v3636, %v3633
        %v3670 = vpack.c.b16 %v3637, %v3634
        %v3671 = vpack.c.b16 %v3638, %v3635
        %v3672 = vpack.c.b16 %v3642, %v3639
        %v3673 = vpack.c.b16 %v3643, %v3640
        %v3674 = vpack.c.b16 %v3644, %v3641
        %v3675 = vpack.c.b16 %v3648, %v3645
        %v3676 = vpack.c.b16 %v3649, %v3646
        %v3677 = vpack.c.b16 %v3650, %v3647
        %v3678 = vpack.c.b16 %v3654, %v3651
        %v3679 = vpack.c.b16 %v3655, %v3652
        %v3680 = vpack.c.b16 %v3656, %v3653
        %v3753 = vunpack.c.l.b16 %v3352
        %v3754 = vunpack.c.l.b16 %v3353
        %v3755 = vunpack.c.l.b16 %v3354
        %v3756 = vunpack.c.l.b16 %v3355
        %v3757 = vunpack.c.l.b16 %v3356
        %v3758 = vunpack.c.l.b16 %v3357
        %v3759 = vunpack.c.l.b16 %v3358
        %v3760 = vunpack.c.l.b16 %v3359
        %v3761 = vunpack.c.l.b16 %v3360
        %v3762 = vunpack.c.l.b16 %v3361
        %v3763 = vunpack.c.l.b16 %v3362
        %v3764 = vunpack.c.l.b16 %v3363
        %v3765 = vunpack.c.l.b16 %v3364
        %v3766 = vunpack.c.l.b16 %v3365
        %v3767 = vunpack.c.l.b16 %v3366
        %v3768 = vunpack.c.l.b16 %v3367
        %v3769 = vunpack.c.l.b16 %v3368
        %v3770 = vunpack.c.l.b16 %v3369
        %v3771 = vunpack.c.l.b16 %v3370
        %v3772 = vunpack.c.l.b16 %v3371
        %v3773 = vunpack.c.l.b16 %v3372
        %v3774 = vunpack.c.l.b16 %v3373
        %v3775 = vunpack.c.l.b16 %v3374
        %v3776 = vunpack.c.l.b16 %v3375
        %v3777 = vunpack.c.l.b16 %v3376
        %v3778 = vunpack.c.l.b16 %v3377
        %v3779 = vunpack.c.l.b16 %v3378
        %v3780 = vunpack.c.l.b16 %v3379
        %v3781 = vunpack.c.l.b16 %v3380
        %v3782 = vunpack.c.l.b16 %v3381
        %v3783 = vunpack.c.l.b16 %v3382
        %v3784 = vunpack.c.l.b16 %v3383
        %v3785 = vunpack.c.l.b16 %v3384
        %v3786 = vunpack.c.l.b16 %v3385
        %v3787 = vunpack.c.l.b16 %v3386
        %v3788 = vunpack.c.l.b16 %v3387
        %v3789 = vunpack.c.l.b16 %v3388
        %v3790 = vunpack.c.l.b16 %v3389
        %v3791 = vunpack.c.l.b16 %v3390
        %v3792 = vunpack.c.l.b16 %v3391
        %v3793 = vunpack.c.l.b16 %v3392
        %v3794 = vunpack.c.l.b16 %v3393
        %v3795 = vunpack.c.l.b16 %v3394
        %v3796 = vunpack.c.l.b16 %v3395
        %v3797 = vunpack.c.l.b16 %v3396
        %v3798 = vunpack.c.l.b16 %v3397
        %v3799 = vunpack.c.l.b16 %v3398
        %v3800 = vunpack.c.l.b16 %v3399
        %v3801 = vpack.c.b16 %v3754, %v3753
        %v3802 = vpack.c.b16 %v3756, %v3755
        %v3803 = vpack.c.b16 %v3758, %v3757
        %v3804 = vpack.c.b16 %v3760, %v3759
        %v3805 = vpack.c.b16 %v3762, %v3761
        %v3806 = vpack.c.b16 %v3764, %v3763
        %v3807 = vpack.c.b16 %v3766, %v3765
        %v3808 = vpack.c.b16 %v3768, %v3767
        %v3809 = vpack.c.b16 %v3770, %v3769
        %v3810 = vpack.c.b16 %v3772, %v3771
        %v3811 = vpack.c.b16 %v3774, %v3773
        %v3812 = vpack.c.b16 %v3776, %v3775
        %v3813 = vpack.c.b16 %v3778, %v3777
        %v3814 = vpack.c.b16 %v3780, %v3779
        %v3815 = vpack.c.b16 %v3782, %v3781
        %v3816 = vpack.c.b16 %v3784, %v3783
        %v3817 = vpack.c.b16 %v3786, %v3785
        %v3818 = vpack.c.b16 %v3788, %v3787
        %v3819 = vpack.c.b16 %v3790, %v3789
        %v3820 = vpack.c.b16 %v3792, %v3791
        %v3821 = vpack.c.b16 %v3794, %v3793
        %v3822 = vpack.c.b16 %v3796, %v3795
        %v3823 = vpack.c.b16 %v3798, %v3797
        %v3824 = vpack.c.b16 %v3800, %v3799
        %3849 = vmatprep.subr.bf16.mxu0 0
        %3850 = vmatpush1.bf16.msra.mxu0 %v3801
        %3851 = vmatprep.subr.bf16.mxu0 0
        %3852 = vmatpush1.bf16.msra.mxu0 %v3802
        %3853 = vmatprep.subr.bf16.mxu0 0
        %3854 = vmatpush1.bf16.msra.mxu0 %v3803
        %3855 = vmatprep.subr.bf16.mxu0 0
        %3856 = vmatpush1.bf16.msra.mxu0 %v3804
        %3857 = vmatprep.subr.bf16.mxu0 0
        %3858 = vmatpush1.bf16.msra.mxu0 %v3805
        %3859 = vmatprep.subr.bf16.mxu0 0
        %3860 = vmatpush1.bf16.msra.mxu0 %v3806
        %3861 = vmatprep.subr.bf16.mxu0 0
        %3862 = vmatpush1.bf16.msra.mxu0 %v3807
        %3863 = vmatprep.subr.bf16.mxu0 0
        %3864 = vmatpush1.bf16.msra.mxu0 %v3808
        %3865 = vmatprep.subr.bf16.mxu0 0
        %3866 = vmatpush1.bf16.msra.mxu0 %v3809
        %3867 = vmatprep.subr.bf16.mxu0 0
        %3868 = vmatpush1.bf16.msra.mxu0 %v3810
        %3869 = vmatprep.subr.bf16.mxu0 0
        %3870 = vmatpush1.bf16.msra.mxu0 %v3811
        %3871 = vmatprep.subr.bf16.mxu0 0
        %3872 = vmatpush1.bf16.msra.mxu0 %v3812
        %3873 = vmatprep.subr.bf16.mxu0 0
        %3874 = vmatpush1.bf16.msra.mxu0 %v3813
        %3875 = vmatprep.subr.bf16.mxu0 0
        %3876 = vmatpush1.bf16.msra.mxu0 %v3814
        %3877 = vmatprep.subr.bf16.mxu0 0
        %3878 = vmatpush1.bf16.msra.mxu0 %v3815
        %3879 = vmatprep.subr.bf16.mxu0 0
        %3880 = vmatpush1.bf16.msra.mxu0 %v3816
        %3881 = vmatprep.mubr.bf16.mxu0 %v3658
        %3882 = vmatmul.mubr.bf16.gmra.mrb[0].mxu0 %v3657
        %v3883 = vpop.f32.mrb[0].mxu0
        %v3884 = vadd.f32 0.0, %v3883
        %v3885 = vpop.f32.mrb[0].mxu0
        %v3886 = vpop.f32.mrb[0].mxu0
        %v3887 = vadd.f32 0.0, %v3886
        %v3888 = vpop.f32.mrb[0].mxu0
        %3889 = vmatprep.mubr.bf16.mxu0 %v3661
        %3890 = vmatmul.mubr.bf16.gmra.mrb[0].mxu0 %v3660
        %v3891 = vpop.f32.mrb[0].mxu0
        %v3892 = vadd.f32 0.0, %v3891
        %v3893 = vpop.f32.mrb[0].mxu0
        %v3894 = vpop.f32.mrb[0].mxu0
        %v3895 = vadd.f32 0.0, %v3894
        %v3896 = vpop.f32.mrb[0].mxu0
        %3897 = vmatprep.mubr.bf16.mxu0 %v3664
        %3898 = vmatmul.mubr.bf16.gmra.mrb[0].mxu0 %v3663
        %v3899 = vpop.f32.mrb[0].mxu0
        %v3900 = vadd.f32 0.0, %v3899
        %v3901 = vpop.f32.mrb[0].mxu0
        %v3902 = vpop.f32.mrb[0].mxu0
        %v3903 = vadd.f32 0.0, %v3902
        %v3904 = vpop.f32.mrb[0].mxu0
        %3905 = vmatprep.mubr.bf16.mxu0 %v3667
        %3906 = vmatmul.mubr.bf16.gmra.mrb[0].mxu0 %v3666
        %v3907 = vpop.f32.mrb[0].mxu0
        %v3908 = vadd.f32 0.0, %v3907
        %v3909 = vpop.f32.mrb[0].mxu0
        %v3910 = vpop.f32.mrb[0].mxu0
        %v3911 = vadd.f32 0.0, %v3910
        %v3912 = vpop.f32.mrb[0].mxu0
        %3913 = vmatprep.mubr.bf16.mxu0 %v3670
        %3914 = vmatmul.mubr.bf16.gmra.mrb[0].mxu0 %v3669
        %v3915 = vpop.f32.mrb[0].mxu0
        %v3916 = vadd.f32 0.0, %v3915
        %v3917 = vpop.f32.mrb[0].mxu0
        %v3918 = vpop.f32.mrb[0].mxu0
        %v3919 = vadd.f32 0.0, %v3918
        %v3920 = vpop.f32.mrb[0].mxu0
        %3921 = vmatprep.mubr.bf16.mxu0 %v3673
        %3922 = vmatmul.mubr.bf16.gmra.mrb[0].mxu0 %v3672
        %v3923 = vpop.f32.mrb[0].mxu0
        %v3924 = vadd.f32 0.0, %v3923
        %v3925 = vpop.f32.mrb[0].mxu0
        %v3926 = vpop.f32.mrb[0].mxu0
        %v3927 = vadd.f32 0.0, %v3926
        %v3928 = vpop.f32.mrb[0].mxu0
        %3929 = vmatprep.mubr.bf16.mxu0 %v3676
        %3930 = vmatmul.mubr.bf16.gmra.mrb[0].mxu0 %v3675
        %v3931 = vpop.f32.mrb[0].mxu0
        %v3932 = vadd.f32 0.0, %v3931
        %v3933 = vpop.f32.mrb[0].mxu0
        %v3934 = vpop.f32.mrb[0].mxu0
        %v3935 = vadd.f32 0.0, %v3934
        %v3936 = vpop.f32.mrb[0].mxu0
        %3937 = vmatprep.mubr.bf16.mxu0 %v3679
        %3938 = vmatmul.mubr.bf16.gmra.mrb[0].mxu0 %v3678
        %v3939 = vpop.f32.mrb[0].mxu0
        %v3940 = vadd.f32 0.0, %v3939
        %v3941 = vpop.f32.mrb[0].mxu0
        %v3942 = vpop.f32.mrb[0].mxu0
        %v3943 = vadd.f32 0.0, %v3942
        %v3944 = vpop.f32.mrb[0].mxu0
        %3945 = vdwg.mxu0
        %3946 = vmatprep.subr.bf16.mxu0 0
        %3947 = vmatpush1.bf16.msra.mxu0 %v3817
        %3948 = vmatprep.subr.bf16.mxu0 0
        %3949 = vmatpush1.bf16.msra.mxu0 %v3818
        %3950 = vmatprep.subr.bf16.mxu0 0
        %3951 = vmatpush1.bf16.msra.mxu0 %v3819
        %3952 = vmatprep.subr.bf16.mxu0 0
        %3953 = vmatpush1.bf16.msra.mxu0 %v3820
        %3954 = vmatprep.subr.bf16.mxu0 0
        %3955 = vmatpush1.bf16.msra.mxu0 %v3821
        %3956 = vmatprep.subr.bf16.mxu0 0
        %3957 = vmatpush1.bf16.msra.mxu0 %v3822
        %3958 = vmatprep.subr.bf16.mxu0 0
        %3959 = vmatpush1.bf16.msra.mxu0 %v3823
        %3960 = vmatprep.subr.bf16.mxu0 0
        %3961 = vmatpush1.bf16.msra.mxu0 %v3824
        %3962 = vmatprep.subr.bf16.mxu0 0
        %3963 = vmatpush1.bf16.msra.mxu0 0
        %3964 = vmatprep.subr.bf16.mxu0 0
        %3965 = vmatpush1.bf16.msra.mxu0 0
        %3966 = vmatprep.subr.bf16.mxu0 0
        %3967 = vmatpush1.bf16.msra.mxu0 0
        %3968 = vmatprep.subr.bf16.mxu0 0
        %3969 = vmatpush1.bf16.msra.mxu0 0
        %3970 = vmatprep.subr.bf16.mxu0 0
        %3971 = vmatpush1.bf16.msra.mxu0 0
        %3972 = vmatprep.subr.bf16.mxu0 0
        %3973 = vmatpush1.bf16.msra.mxu0 0
        %3974 = vmatprep.subr.bf16.mxu0 0
        %3975 = vmatpush1.bf16.msra.mxu0 0
        %3976 = vmatprep.subr.bf16.mxu0 0
        %3977 = vmatpush1.bf16.msra.mxu0 0
        %3978 = vmatprep.mubr.bf16.mxu0 0
        %3979 = vmatmul.mubr.bf16.gmra.mrb[0].mxu0 %v3659
        %v3980 = vpop.f32.mrb[0].mxu0
        %v3981 = vadd.f32 %v3884, %v3980
        %v3982 = vpop.f32.mrb[0].mxu0
        %v3983 = vpop.f32.mrb[0].mxu0
        %v3984 = vadd.f32 %v3887, %v3983
        %v3985 = vpop.f32.mrb[0].mxu0
        %3986 = vmatprep.mubr.bf16.mxu0 0
        %3987 = vmatmul.mubr.bf16.gmra.mrb[0].mxu0 %v3662
        %v3988 = vpop.f32.mrb[0].mxu0
        %v3989 = vadd.f32 %v3892, %v3988
        %v3990 = vpop.f32.mrb[0].mxu0
        %v3991 = vpop.f32.mrb[0].mxu0
        %v3992 = vadd.f32 %v3895, %v3991
        %v3993 = vpop.f32.mrb[0].mxu0
        %3994 = vmatprep.mubr.bf16.mxu0 0
        %3995 = vmatmul.mubr.bf16.gmra.mrb[0].mxu0 %v3665
        %v3996 = vpop.f32.mrb[0].mxu0
        %v3997 = vadd.f32 %v3900, %v3996
        %v3998 = vpop.f32.mrb[0].mxu0
        %v3999 = vpop.f32.mrb[0].mxu0
        %v4000 = vadd.f32 %v3903, %v3999
        %v4001 = vpop.f32.mrb[0].mxu0
        %4002 = vmatprep.mubr.bf16.mxu0 0
        %4003 = vmatmul.mubr.bf16.gmra.mrb[0].mxu0 %v3668
        %v4004 = vpop.f32.mrb[0].mxu0
        %v4005 = vadd.f32 %v3908, %v4004
        %v4006 = vpop.f32.mrb[0].mxu0
        %v4007 = vpop.f32.mrb[0].mxu0
        %v4008 = vadd.f32 %v3911, %v4007
        %v4009 = vpop.f32.mrb[0].mxu0
        %4010 = vmatprep.mubr.bf16.mxu0 0
        %4011 = vmatmul.mubr.bf16.gmra.mrb[0].mxu0 %v3671
        %v4012 = vpop.f32.mrb[0].mxu0
        %v4013 = vadd.f32 %v3916, %v4012
        %v4014 = vpop.f32.mrb[0].mxu0
        %v4015 = vpop.f32.mrb[0].mxu0
        %v4016 = vadd.f32 %v3919, %v4015
        %v4017 = vpop.f32.mrb[0].mxu0
        %4018 = vmatprep.mubr.bf16.mxu0 0
        %4019 = vmatmul.mubr.bf16.gmra.mrb[0].mxu0 %v3674
        %v4020 = vpop.f32.mrb[0].mxu0
        %v4021 = vadd.f32 %v3924, %v4020
        %v4022 = vpop.f32.mrb[0].mxu0
        %v4023 = vpop.f32.mrb[0].mxu0
        %v4024 = vadd.f32 %v3927, %v4023
        %v4025 = vpop.f32.mrb[0].mxu0
        %4026 = vmatprep.mubr.bf16.mxu0 0
        %4027 = vmatmul.mubr.bf16.gmra.mrb[0].mxu0 %v3677
        %v4028 = vpop.f32.mrb[0].mxu0
        %v4029 = vadd.f32 %v3932, %v4028
        %v4030 = vpop.f32.mrb[0].mxu0
        %v4031 = vpop.f32.mrb[0].mxu0
        %v4032 = vadd.f32 %v3935, %v4031
        %v4033 = vpop.f32.mrb[0].mxu0
        %4034 = vmatprep.mubr.bf16.mxu0 0
        %4035 = vmatmul.mubr.bf16.gmra.mrb[0].mxu0 %v3680
        %v4036 = vpop.f32.mrb[0].mxu0
        %v4037 = vadd.f32 %v3940, %v4036
        %v4038 = vpop.f32.mrb[0].mxu0
        %v4039 = vpop.f32.mrb[0].mxu0
        %v4040 = vadd.f32 %v3943, %v4039
        %v4041 = vpop.f32.mrb[0].mxu0
        %4042 = vdwg.mxu0
        %v4043 = vpack.c.b16 %v3306, %v3303
        %v4044 = vpack.c.b16 %v3307, %v3304
        %v4045 = vpack.c.b16 %v3308, %v3305
        %v4046 = vpack.c.b16 %v3312, %v3309
        %v4047 = vpack.c.b16 %v3313, %v3310
        %v4048 = vpack.c.b16 %v3314, %v3311
        %v4049 = vpack.c.b16 %v3318, %v3315
        %v4050 = vpack.c.b16 %v3319, %v3316
        %v4051 = vpack.c.b16 %v3320, %v3317
        %v4052 = vpack.c.b16 %v3324, %v3321
        %v4053 = vpack.c.b16 %v3325, %v3322
        %v4054 = vpack.c.b16 %v3326, %v3323
        %v4055 = vpack.c.b16 %v3330, %v3327
        %v4056 = vpack.c.b16 %v3331, %v3328
        %v4057 = vpack.c.b16 %v3332, %v3329
        %v4058 = vpack.c.b16 %v3336, %v3333
        %v4059 = vpack.c.b16 %v3337, %v3334
        %v4060 = vpack.c.b16 %v3338, %v3335
        %v4061 = vpack.c.b16 %v3342, %v3339
        %v4062 = vpack.c.b16 %v3343, %v3340
        %v4063 = vpack.c.b16 %v3344, %v3341
        %v4064 = vpack.c.b16 %v3348, %v3345
        %v4065 = vpack.c.b16 %v3349, %v3346
        %v4066 = vpack.c.b16 %v3350, %v3347
        %v4139 = vunpack.c.l.b16 %v3047
        %v4140 = vunpack.c.l.b16 %v3048
        %v4141 = vunpack.c.l.b16 %v3049
        %v4142 = vunpack.c.l.b16 %v3050
        %v4143 = vunpack.c.l.b16 %v3051
        %v4144 = vunpack.c.l.b16 %v3052
        %v4145 = vunpack.c.l.b16 %v3053
        %v4146 = vunpack.c.l.b16 %v3054
        %v4147 = vunpack.c.l.b16 %v3055
        %v4148 = vunpack.c.l.b16 %v3056
        %v4149 = vunpack.c.l.b16 %v3057
        %v4150 = vunpack.c.l.b16 %v3058
        %v4151 = vunpack.c.l.b16 %v3059
        %v4152 = vunpack.c.l.b16 %v3060
        %v4153 = vunpack.c.l.b16 %v3061
        %v4154 = vunpack.c.l.b16 %v3062
        %v4155 = vunpack.c.l.b16 %v3063
        %v4156 = vunpack.c.l.b16 %v3064
        %v4157 = vunpack.c.l.b16 %v3065
        %v4158 = vunpack.c.l.b16 %v3066
        %v4159 = vunpack.c.l.b16 %v3067
        %v4160 = vunpack.c.l.b16 %v3068
        %v4161 = vunpack.c.l.b16 %v3069
        %v4162 = vunpack.c.l.b16 %v3070
        %v4163 = vunpack.c.l.b16 %v3071
        %v4164 = vunpack.c.l.b16 %v3072
        %v4165 = vunpack.c.l.b16 %v3073
        %v4166 = vunpack.c.l.b16 %v3074
        %v4167 = vunpack.c.l.b16 %v3075
        %v4168 = vunpack.c.l.b16 %v3076
        %v4169 = vunpack.c.l.b16 %v3077
        %v4170 = vunpack.c.l.b16 %v3078
        %v4171 = vunpack.c.l.b16 %v3079
        %v4172 = vunpack.c.l.b16 %v3080
        %v4173 = vunpack.c.l.b16 %v3081
        %v4174 = vunpack.c.l.b16 %v3082
        %v4175 = vunpack.c.l.b16 %v3083
        %v4176 = vunpack.c.l.b16 %v3084
        %v4177 = vunpack.c.l.b16 %v3085
        %v4178 = vunpack.c.l.b16 %v3086
        %v4179 = vunpack.c.l.b16 %v3087
        %v4180 = vunpack.c.l.b16 %v3088
        %v4181 = vunpack.c.l.b16 %v3089
        %v4182 = vunpack.c.l.b16 %v3090
        %v4183 = vunpack.c.l.b16 %v3091
        %v4184 = vunpack.c.l.b16 %v3092
        %v4185 = vunpack.c.l.b16 %v3093
        %v4186 = vunpack.c.l.b16 %v3094
        %v4187 = vpack.c.b16 %v4140, %v4139
        %v4188 = vpack.c.b16 %v4142, %v4141
        %v4189 = vpack.c.b16 %v4144, %v4143
        %v4190 = vpack.c.b16 %v4146, %v4145
        %v4191 = vpack.c.b16 %v4148, %v4147
        %v4192 = vpack.c.b16 %v4150, %v4149
        %v4193 = vpack.c.b16 %v4152, %v4151
        %v4194 = vpack.c.b16 %v4154, %v4153
        %v4195 = vpack.c.b16 %v4156, %v4155
        %v4196 = vpack.c.b16 %v4158, %v4157
        %v4197 = vpack.c.b16 %v4160, %v4159
        %v4198 = vpack.c.b16 %v4162, %v4161
        %v4199 = vpack.c.b16 %v4164, %v4163
        %v4200 = vpack.c.b16 %v4166, %v4165
        %v4201 = vpack.c.b16 %v4168, %v4167
        %v4202 = vpack.c.b16 %v4170, %v4169
        %v4203 = vpack.c.b16 %v4172, %v4171
        %v4204 = vpack.c.b16 %v4174, %v4173
        %v4205 = vpack.c.b16 %v4176, %v4175
        %v4206 = vpack.c.b16 %v4178, %v4177
        %v4207 = vpack.c.b16 %v4180, %v4179
        %v4208 = vpack.c.b16 %v4182, %v4181
        %v4209 = vpack.c.b16 %v4184, %v4183
        %v4210 = vpack.c.b16 %v4186, %v4185
        %4235 = vmatprep.subr.bf16.mxu0 0
        %4236 = vmatpush1.bf16.msra.mxu0 %v4187
        %4237 = vmatprep.subr.bf16.mxu0 0
        %4238 = vmatpush1.bf16.msra.mxu0 %v4188
        %4239 = vmatprep.subr.bf16.mxu0 0
        %4240 = vmatpush1.bf16.msra.mxu0 %v4189
        %4241 = vmatprep.subr.bf16.mxu0 0
        %4242 = vmatpush1.bf16.msra.mxu0 %v4190
        %4243 = vmatprep.subr.bf16.mxu0 0
        %4244 = vmatpush1.bf16.msra.mxu0 %v4191
        %4245 = vmatprep.subr.bf16.mxu0 0
        %4246 = vmatpush1.bf16.msra.mxu0 %v4192
        %4247 = vmatprep.subr.bf16.mxu0 0
        %4248 = vmatpush1.bf16.msra.mxu0 %v4193
        %4249 = vmatprep.subr.bf16.mxu0 0
        %4250 = vmatpush1.bf16.msra.mxu0 %v4194
        %4251 = vmatprep.subr.bf16.mxu0 0
        %4252 = vmatpush1.bf16.msra.mxu0 %v4195
        %4253 = vmatprep.subr.bf16.mxu0 0
        %4254 = vmatpush1.bf16.msra.mxu0 %v4196
        %4255 = vmatprep.subr.bf16.mxu0 0
        %4256 = vmatpush1.bf16.msra.mxu0 %v4197
        %4257 = vmatprep.subr.bf16.mxu0 0
        %4258 = vmatpush1.bf16.msra.mxu0 %v4198
        %4259 = vmatprep.subr.bf16.mxu0 0
        %4260 = vmatpush1.bf16.msra.mxu0 %v4199
        %4261 = vmatprep.subr.bf16.mxu0 0
        %4262 = vmatpush1.bf16.msra.mxu0 %v4200
        %4263 = vmatprep.subr.bf16.mxu0 0
        %4264 = vmatpush1.bf16.msra.mxu0 %v4201
        %4265 = vmatprep.subr.bf16.mxu0 0
        %4266 = vmatpush1.bf16.msra.mxu0 %v4202
        %4267 = vmatprep.mubr.bf16.mxu0 %v4044
        %4268 = vmatmul.mubr.bf16.gmra.mrb[0].mxu0 %v4043
        %v4269 = vpop.f32.mrb[0].mxu0
        %v4270 = vadd.f32 %v3981, %v4269
        %v4271 = vpop.f32.mrb[0].mxu0
        %v4272 = vpop.f32.mrb[0].mxu0
        %v4273 = vadd.f32 %v3984, %v4272
        %v4274 = vpop.f32.mrb[0].mxu0
        %4275 = vmatprep.mubr.bf16.mxu0 %v4047
        %4276 = vmatmul.mubr.bf16.gmra.mrb[0].mxu0 %v4046
        %v4277 = vpop.f32.mrb[0].mxu0
        %v4278 = vadd.f32 %v3989, %v4277
        %v4279 = vpop.f32.mrb[0].mxu0
        %v4280 = vpop.f32.mrb[0].mxu0
        %v4281 = vadd.f32 %v3992, %v4280
        %v4282 = vpop.f32.mrb[0].mxu0
        %4283 = vmatprep.mubr.bf16.mxu0 %v4050
        %4284 = vmatmul.mubr.bf16.gmra.mrb[0].mxu0 %v4049
        %v4285 = vpop.f32.mrb[0].mxu0
        %v4286 = vadd.f32 %v3997, %v4285
        %v4287 = vpop.f32.mrb[0].mxu0
        %v4288 = vpop.f32.mrb[0].mxu0
        %v4289 = vadd.f32 %v4000, %v4288
        %v4290 = vpop.f32.mrb[0].mxu0
        %4291 = vmatprep.mubr.bf16.mxu0 %v4053
        %4292 = vmatmul.mubr.bf16.gmra.mrb[0].mxu0 %v4052
        %v4293 = vpop.f32.mrb[0].mxu0
        %v4294 = vadd.f32 %v4005, %v4293
        %v4295 = vpop.f32.mrb[0].mxu0
        %v4296 = vpop.f32.mrb[0].mxu0
        %v4297 = vadd.f32 %v4008, %v4296
        %v4298 = vpop.f32.mrb[0].mxu0
        %4299 = vmatprep.mubr.bf16.mxu0 %v4056
        %4300 = vmatmul.mubr.bf16.gmra.mrb[0].mxu0 %v4055
        %v4301 = vpop.f32.mrb[0].mxu0
        %v4302 = vadd.f32 %v4013, %v4301
        %v4303 = vpop.f32.mrb[0].mxu0
        %v4304 = vpop.f32.mrb[0].mxu0
        %v4305 = vadd.f32 %v4016, %v4304
        %v4306 = vpop.f32.mrb[0].mxu0
        %4307 = vmatprep.mubr.bf16.mxu0 %v4059
        %4308 = vmatmul.mubr.bf16.gmra.mrb[0].mxu0 %v4058
        %v4309 = vpop.f32.mrb[0].mxu0
        %v4310 = vadd.f32 %v4021, %v4309
        %v4311 = vpop.f32.mrb[0].mxu0
        %v4312 = vpop.f32.mrb[0].mxu0
        %v4313 = vadd.f32 %v4024, %v4312
        %v4314 = vpop.f32.mrb[0].mxu0
        %4315 = vmatprep.mubr.bf16.mxu0 %v4062
        %4316 = vmatmul.mubr.bf16.gmra.mrb[0].mxu0 %v4061
        %v4317 = vpop.f32.mrb[0].mxu0
        %v4318 = vadd.f32 %v4029, %v4317
        %v4319 = vpop.f32.mrb[0].mxu0
        %v4320 = vpop.f32.mrb[0].mxu0
        %v4321 = vadd.f32 %v4032, %v4320
        %v4322 = vpop.f32.mrb[0].mxu0
        %4323 = vmatprep.mubr.bf16.mxu0 %v4065
        %4324 = vmatmul.mubr.bf16.gmra.mrb[0].mxu0 %v4064
        %v4325 = vpop.f32.mrb[0].mxu0
        %v4326 = vadd.f32 %v4037, %v4325
        %v4327 = vpop.f32.mrb[0].mxu0
        %v4328 = vpop.f32.mrb[0].mxu0
        %v4329 = vadd.f32 %v4040, %v4328
        %v4330 = vpop.f32.mrb[0].mxu0
        %4331 = vdwg.mxu0
        %4332 = vmatprep.subr.bf16.mxu0 0
        %4333 = vmatpush1.bf16.msra.mxu0 %v4203
        %4334 = vmatprep.subr.bf16.mxu0 0
        %4335 = vmatpush1.bf16.msra.mxu0 %v4204
        %4336 = vmatprep.subr.bf16.mxu0 0
        %4337 = vmatpush1.bf16.msra.mxu0 %v4205
        %4338 = vmatprep.subr.bf16.mxu0 0
        %4339 = vmatpush1.bf16.msra.mxu0 %v4206
        %4340 = vmatprep.subr.bf16.mxu0 0
        %4341 = vmatpush1.bf16.msra.mxu0 %v4207
        %4342 = vmatprep.subr.bf16.mxu0 0
        %4343 = vmatpush1.bf16.msra.mxu0 %v4208
        %4344 = vmatprep.subr.bf16.mxu0 0
        %4345 = vmatpush1.bf16.msra.mxu0 %v4209
        %4346 = vmatprep.subr.bf16.mxu0 0
        %4347 = vmatpush1.bf16.msra.mxu0 %v4210
        %4348 = vmatprep.subr.bf16.mxu0 0
        %4349 = vmatpush1.bf16.msra.mxu0 0
        %4350 = vmatprep.subr.bf16.mxu0 0
        %4351 = vmatpush1.bf16.msra.mxu0 0
        %4352 = vmatprep.subr.bf16.mxu0 0
        %4353 = vmatpush1.bf16.msra.mxu0 0
        %4354 = vmatprep.subr.bf16.mxu0 0
        %4355 = vmatpush1.bf16.msra.mxu0 0
        %4356 = vmatprep.subr.bf16.mxu0 0
        %4357 = vmatpush1.bf16.msra.mxu0 0
        %4358 = vmatprep.subr.bf16.mxu0 0
        %4359 = vmatpush1.bf16.msra.mxu0 0
        %4360 = vmatprep.subr.bf16.mxu0 0
        %4361 = vmatpush1.bf16.msra.mxu0 0
        %4362 = vmatprep.subr.bf16.mxu0 0
        %4363 = vmatpush1.bf16.msra.mxu0 0
        %4364 = vmatprep.mubr.bf16.mxu0 0
        %4365 = vmatmul.mubr.bf16.gmra.mrb[0].mxu0 %v4045
        %v4366 = vpop.f32.mrb[0].mxu0
        %v4367 = vadd.f32 %v4270, %v4366
        %v4368 = vpop.f32.mrb[0].mxu0
        %v4369 = vpop.f32.mrb[0].mxu0
        %v4370 = vadd.f32 %v4273, %v4369
        %v4371 = vpop.f32.mrb[0].mxu0
        %4372 = vmatprep.mubr.bf16.mxu0 0
        %4373 = vmatmul.mubr.bf16.gmra.mrb[0].mxu0 %v4048
        %v4374 = vpop.f32.mrb[0].mxu0
        %v4375 = vadd.f32 %v4278, %v4374
        %v4376 = vpop.f32.mrb[0].mxu0
        %v4377 = vpop.f32.mrb[0].mxu0
        %v4378 = vadd.f32 %v4281, %v4377
        %v4379 = vpop.f32.mrb[0].mxu0
        %4380 = vmatprep.mubr.bf16.mxu0 0
        %4381 = vmatmul.mubr.bf16.gmra.mrb[0].mxu0 %v4051
        %v4382 = vpop.f32.mrb[0].mxu0
        %v4383 = vadd.f32 %v4286, %v4382
        %v4384 = vpop.f32.mrb[0].mxu0
        %v4385 = vpop.f32.mrb[0].mxu0
        %v4386 = vadd.f32 %v4289, %v4385
        %v4387 = vpop.f32.mrb[0].mxu0
        %4388 = vmatprep.mubr.bf16.mxu0 0
        %4389 = vmatmul.mubr.bf16.gmra.mrb[0].mxu0 %v4054
        %v4390 = vpop.f32.mrb[0].mxu0
        %v4391 = vadd.f32 %v4294, %v4390
        %v4392 = vpop.f32.mrb[0].mxu0
        %v4393 = vpop.f32.mrb[0].mxu0
        %v4394 = vadd.f32 %v4297, %v4393
        %v4395 = vpop.f32.mrb[0].mxu0
        %4396 = vmatprep.mubr.bf16.mxu0 0
        %4397 = vmatmul.mubr.bf16.gmra.mrb[0].mxu0 %v4057
        %v4398 = vpop.f32.mrb[0].mxu0
        %v4399 = vadd.f32 %v4302, %v4398
        %v4400 = vpop.f32.mrb[0].mxu0
        %v4401 = vpop.f32.mrb[0].mxu0
        %v4402 = vadd.f32 %v4305, %v4401
        %v4403 = vpop.f32.mrb[0].mxu0
        %4404 = vmatprep.mubr.bf16.mxu0 0
        %4405 = vmatmul.mubr.bf16.gmra.mrb[0].mxu0 %v4060
        %v4406 = vpop.f32.mrb[0].mxu0
        %v4407 = vadd.f32 %v4310, %v4406
        %v4408 = vpop.f32.mrb[0].mxu0
        %v4409 = vpop.f32.mrb[0].mxu0
        %v4410 = vadd.f32 %v4313, %v4409
        %v4411 = vpop.f32.mrb[0].mxu0
        %4412 = vmatprep.mubr.bf16.mxu0 0
        %4413 = vmatmul.mubr.bf16.gmra.mrb[0].mxu0 %v4063
        %v4414 = vpop.f32.mrb[0].mxu0
        %v4415 = vadd.f32 %v4318, %v4414
        %v4416 = vpop.f32.mrb[0].mxu0
        %v4417 = vpop.f32.mrb[0].mxu0
        %v4418 = vadd.f32 %v4321, %v4417
        %v4419 = vpop.f32.mrb[0].mxu0
        %4420 = vmatprep.mubr.bf16.mxu0 0
        %4421 = vmatmul.mubr.bf16.gmra.mrb[0].mxu0 %v4066
        %v4422 = vpop.f32.mrb[0].mxu0
        %v4423 = vadd.f32 %v4326, %v4422
        %v4424 = vpop.f32.mrb[0].mxu0
        %v4425 = vpop.f32.mrb[0].mxu0
        %v4426 = vadd.f32 %v4329, %v4425
        %v4427 = vpop.f32.mrb[0].mxu0
        %4428 = vdwg.mxu0
        %s4429 = scalar_lea.vmem %s4, 384
        %v4430 = vld [vmem:[%s4429] sm:$0xf]
        %v4431 = vld [vmem:[%s4429 + $0x4] sm:$0xf]
        %v4432 = vld [vmem:[%s4429 + $0x8] sm:$0xf]
        %v4433 = vld [vmem:[%s4429 + $0xc] sm:$0xf]
        %v4434 = vld [vmem:[%s4429 + $0x10] sm:$0xf]
        %v4435 = vld [vmem:[%s4429 + $0x14] sm:$0xf]
        %v4436 = vld [vmem:[%s4429 + $0x18] sm:$0xf]
        %v4437 = vld [vmem:[%s4429 + $0x1c] sm:$0xf]
        %v4438 = vld [vmem:[%s4429 + $0x20] sm:$0xf]
        %v4439 = vld [vmem:[%s4429 + $0x24] sm:$0xf]
        %v4440 = vld [vmem:[%s4429 + $0x28] sm:$0xf]
        %v4441 = vld [vmem:[%s4429 + $0x2c] sm:$0xf]
        %v4442 = vld [vmem:[%s4429 + $0x30] sm:$0xf]
        %v4443 = vld [vmem:[%s4429 + $0x34] sm:$0xf]
        %v4444 = vld [vmem:[%s4429 + $0x38] sm:$0xf]
        %v4445 = vld [vmem:[%s4429 + $0x3c] sm:$0xf]
        %v4446 = vld [vmem:[%s4429 + $0x40] sm:$0xf]
        %v4447 = vld [vmem:[%s4429 + $0x44] sm:$0xf]
        %v4448 = vld [vmem:[%s4429 + $0x48] sm:$0xf]
        %v4449 = vld [vmem:[%s4429 + $0x4c] sm:$0xf]
        %v4450 = vld [vmem:[%s4429 + $0x50] sm:$0xf]
        %v4451 = vld [vmem:[%s4429 + $0x54] sm:$0xf]
        %v4452 = vld [vmem:[%s4429 + $0x58] sm:$0xf]
        %v4453 = vld [vmem:[%s4429 + $0x5c] sm:$0xf]
        %v4454 = vld [vmem:[%s4429 + $0x60] sm:$0xf]
        %v4455 = vld [vmem:[%s4429 + $0x64] sm:$0xf]
        %v4456 = vld [vmem:[%s4429 + $0x68] sm:$0xf]
        %v4457 = vld [vmem:[%s4429 + $0x6c] sm:$0xf]
        %v4458 = vld [vmem:[%s4429 + $0x70] sm:$0xf]
        %v4459 = vld [vmem:[%s4429 + $0x74] sm:$0xf]
        %v4460 = vld [vmem:[%s4429 + $0x78] sm:$0xf]
        %v4461 = vld [vmem:[%s4429 + $0x7c] sm:$0xf]
        %v4462 = vld [vmem:[%s4429 + $0x80] sm:$0xf]
        %v4463 = vld [vmem:[%s4429 + $0x84] sm:$0xf]
        %v4464 = vld [vmem:[%s4429 + $0x88] sm:$0xf]
        %v4465 = vld [vmem:[%s4429 + $0x8c] sm:$0xf]
        %v4466 = vld [vmem:[%s4429 + $0x90] sm:$0xf]
        %v4467 = vld [vmem:[%s4429 + $0x94] sm:$0xf]
        %v4468 = vld [vmem:[%s4429 + $0x98] sm:$0xf]
        %v4469 = vld [vmem:[%s4429 + $0x9c] sm:$0xf]
        %v4470 = vld [vmem:[%s4429 + $0xa0] sm:$0xf]
        %v4471 = vld [vmem:[%s4429 + $0xa4] sm:$0xf]
        %v4472 = vld [vmem:[%s4429 + $0xa8] sm:$0xf]
        %v4473 = vld [vmem:[%s4429 + $0xac] sm:$0xf]
        %v4474 = vld [vmem:[%s4429 + $0xb0] sm:$0xf]
        %v4475 = vld [vmem:[%s4429 + $0xb4] sm:$0xf]
        %v4476 = vld [vmem:[%s4429 + $0xb8] sm:$0xf]
        %v4477 = vld [vmem:[%s4429 + $0xbc] sm:$0xf]
        %s4478 = scalar_lea.vmem [#allocation2], 16
        %v4479 = vld [vmem:[%s4478] sm:$0xf]
        %v4480 = vld [vmem:[%s4478 + $0x8] sm:$0xf]
        %v4481 = vld [vmem:[%s4478 + $0x10] sm:$0xf]
        %v4482 = vld [vmem:[%s4478 + $0x18] sm:$0xf]
        %v4483 = vld [vmem:[%s4478 + $0x20] sm:$0xf]
        %v4484 = vld [vmem:[%s4478 + $0x28] sm:$0xf]
        %v4485 = vld [vmem:[%s4478 + $0x30] sm:$0xf]
        %v4486 = vld [vmem:[%s4478 + $0x38] sm:$0xf]
        %v4487 = vld [vmem:[%s4478 + $0x50] sm:$0xf]
        %v4488 = vld [vmem:[%s4478 + $0x58] sm:$0xf]
        %v4489 = vld [vmem:[%s4478 + $0x60] sm:$0xf]
        %v4490 = vld [vmem:[%s4478 + $0x68] sm:$0xf]
        %v4491 = vld [vmem:[%s4478 + $0x70] sm:$0xf]
        %v4492 = vld [vmem:[%s4478 + $0x78] sm:$0xf]
        %v4493 = vld [vmem:[%s4478 + $0x80] sm:$0xf]
        %v4494 = vld [vmem:[%s4478 + $0x88] sm:$0xf]
        %v4495 = vld [vmem:[%s4478] sm:$0x1f]
        %v4496 = vld [vmem:[%s4478 + $0x8] sm:$0x1f]
        %v4497 = vld [vmem:[%s4478 + $0x10] sm:$0x1f]
        %v4498 = vld [vmem:[%s4478 + $0x18] sm:$0x1f]
        %v4499 = vld [vmem:[%s4478 + $0x20] sm:$0x1f]
        %v4500 = vld [vmem:[%s4478 + $0x28] sm:$0x1f]
        %v4501 = vld [vmem:[%s4478 + $0x30] sm:$0x1f]
        %v4502 = vld [vmem:[%s4478 + $0x38] sm:$0x1f]
        %v4503 = vld [vmem:[%s4478 + $0x50] sm:$0x1f]
        %v4504 = vld [vmem:[%s4478 + $0x58] sm:$0x1f]
        %v4505 = vld [vmem:[%s4478 + $0x60] sm:$0x1f]
        %v4506 = vld [vmem:[%s4478 + $0x68] sm:$0x1f]
        %v4507 = vld [vmem:[%s4478 + $0x70] sm:$0x1f]
        %v4508 = vld [vmem:[%s4478 + $0x78] sm:$0x1f]
        %v4509 = vld [vmem:[%s4478 + $0x80] sm:$0x1f]
        %v4510 = vld [vmem:[%s4478 + $0x88] sm:$0x1f]
        %v4511 = vld [vmem:[%s4478] sm:$0x1e]
        %v4512 = vld [vmem:[%s4478 + $0x8] sm:$0x1e]
        %v4513 = vld [vmem:[%s4478 + $0x10] sm:$0x1e]
        %v4514 = vld [vmem:[%s4478 + $0x18] sm:$0x1e]
        %v4515 = vld [vmem:[%s4478 + $0x20] sm:$0x1e]
        %v4516 = vld [vmem:[%s4478 + $0x28] sm:$0x1e]
        %v4517 = vld [vmem:[%s4478 + $0x30] sm:$0x1e]
        %v4518 = vld [vmem:[%s4478 + $0x38] sm:$0x1e]
        %v4519 = vld [vmem:[%s4478 + $0x50] sm:$0x1e]
        %v4520 = vld [vmem:[%s4478 + $0x58] sm:$0x1e]
        %v4521 = vld [vmem:[%s4478 + $0x60] sm:$0x1e]
        %v4522 = vld [vmem:[%s4478 + $0x68] sm:$0x1e]
        %v4523 = vld [vmem:[%s4478 + $0x70] sm:$0x1e]
        %v4524 = vld [vmem:[%s4478 + $0x78] sm:$0x1e]
        %v4525 = vld [vmem:[%s4478 + $0x80] sm:$0x1e]
        %v4526 = vld [vmem:[%s4478 + $0x88] sm:$0x1e]
        %v4528 = vshrl.u32 %v4495, 16
        %v4530 = vshll.u32 %v4495, 16
        %v4532 = vrot.slane %v4530, 1
        %v4533 = vor.u32 %v4528, %v4532
        %v4535 = vshrl.u32 %v4496, 16
        %v4537 = vshll.u32 %v4496, 16
        %v4539 = vrot.slane %v4537, 1
        %v4540 = vor.u32 %v4535, %v4539
        %v4542 = vshrl.u32 %v4497, 16
        %v4544 = vshll.u32 %v4497, 16
        %v4546 = vrot.slane %v4544, 1
        %v4547 = vor.u32 %v4542, %v4546
        %v4549 = vshrl.u32 %v4498, 16
        %v4551 = vshll.u32 %v4498, 16
        %v4553 = vrot.slane %v4551, 1
        %v4554 = vor.u32 %v4549, %v4553
        %v4556 = vshrl.u32 %v4499, 16
        %v4558 = vshll.u32 %v4499, 16
        %v4560 = vrot.slane %v4558, 1
        %v4561 = vor.u32 %v4556, %v4560
        %v4563 = vshrl.u32 %v4500, 16
        %v4565 = vshll.u32 %v4500, 16
        %v4567 = vrot.slane %v4565, 1
        %v4568 = vor.u32 %v4563, %v4567
        %v4570 = vshrl.u32 %v4501, 16
        %v4572 = vshll.u32 %v4501, 16
        %v4574 = vrot.slane %v4572, 1
        %v4575 = vor.u32 %v4570, %v4574
        %v4577 = vshrl.u32 %v4502, 16
        %v4579 = vshll.u32 %v4502, 16
        %v4581 = vrot.slane %v4579, 1
        %v4582 = vor.u32 %v4577, %v4581
        %v4584 = vshrl.u32 %v4503, 16
        %v4586 = vshll.u32 %v4503, 16
        %v4588 = vrot.slane %v4586, 1
        %v4589 = vor.u32 %v4584, %v4588
        %v4591 = vshrl.u32 %v4504, 16
        %v4593 = vshll.u32 %v4504, 16
        %v4595 = vrot.slane %v4593, 1
        %v4596 = vor.u32 %v4591, %v4595
        %v4598 = vshrl.u32 %v4505, 16
        %v4600 = vshll.u32 %v4505, 16
        %v4602 = vrot.slane %v4600, 1
        %v4603 = vor.u32 %v4598, %v4602
        %v4605 = vshrl.u32 %v4506, 16
        %v4607 = vshll.u32 %v4506, 16
        %v4609 = vrot.slane %v4607, 1
        %v4610 = vor.u32 %v4605, %v4609
        %v4612 = vshrl.u32 %v4507, 16
        %v4614 = vshll.u32 %v4507, 16
        %v4616 = vrot.slane %v4614, 1
        %v4617 = vor.u32 %v4612, %v4616
        %v4619 = vshrl.u32 %v4508, 16
        %v4621 = vshll.u32 %v4508, 16
        %v4623 = vrot.slane %v4621, 1
        %v4624 = vor.u32 %v4619, %v4623
        %v4626 = vshrl.u32 %v4509, 16
        %v4628 = vshll.u32 %v4509, 16
        %v4630 = vrot.slane %v4628, 1
        %v4631 = vor.u32 %v4626, %v4630
        %v4633 = vshrl.u32 %v4510, 16
        %v4635 = vshll.u32 %v4510, 16
        %v4637 = vrot.slane %v4635, 1
        %v4638 = vor.u32 %v4633, %v4637
        %v4655 = vrot.slane %v4511, 1
        %v4656 = vrot.slane %v4512, 1
        %v4657 = vrot.slane %v4513, 1
        %v4658 = vrot.slane %v4514, 1
        %v4659 = vrot.slane %v4515, 1
        %v4660 = vrot.slane %v4516, 1
        %v4661 = vrot.slane %v4517, 1
        %v4662 = vrot.slane %v4518, 1
        %v4663 = vrot.slane %v4519, 1
        %v4664 = vrot.slane %v4520, 1
        %v4665 = vrot.slane %v4521, 1
        %v4666 = vrot.slane %v4522, 1
        %v4667 = vrot.slane %v4523, 1
        %v4668 = vrot.slane %v4524, 1
        %v4669 = vrot.slane %v4525, 1
        %v4670 = vrot.slane %v4526, 1
        %v4687 = vunpack.c.l.b16 %v4479
        %v4688 = vunpack.c.l.b16 %v4533
        %v4689 = vunpack.c.l.b16 %v4655
        %v4690 = vunpack.c.l.b16 %v4480
        %v4691 = vunpack.c.l.b16 %v4540
        %v4692 = vunpack.c.l.b16 %v4656
        %v4693 = vunpack.c.l.b16 %v4481
        %v4694 = vunpack.c.l.b16 %v4547
        %v4695 = vunpack.c.l.b16 %v4657
        %v4696 = vunpack.c.l.b16 %v4482
        %v4697 = vunpack.c.l.b16 %v4554
        %v4698 = vunpack.c.l.b16 %v4658
        %v4699 = vunpack.c.l.b16 %v4483
        %v4700 = vunpack.c.l.b16 %v4561
        %v4701 = vunpack.c.l.b16 %v4659
        %v4702 = vunpack.c.l.b16 %v4484
        %v4703 = vunpack.c.l.b16 %v4568
        %v4704 = vunpack.c.l.b16 %v4660
        %v4705 = vunpack.c.l.b16 %v4485
        %v4706 = vunpack.c.l.b16 %v4575
        %v4707 = vunpack.c.l.b16 %v4661
        %v4708 = vunpack.c.l.b16 %v4486
        %v4709 = vunpack.c.l.b16 %v4582
        %v4710 = vunpack.c.l.b16 %v4662
        %v4711 = vunpack.c.l.b16 %v4487
        %v4712 = vunpack.c.l.b16 %v4589
        %v4713 = vunpack.c.l.b16 %v4663
        %v4714 = vunpack.c.l.b16 %v4488
        %v4715 = vunpack.c.l.b16 %v4596
        %v4716 = vunpack.c.l.b16 %v4664
        %v4717 = vunpack.c.l.b16 %v4489
        %v4718 = vunpack.c.l.b16 %v4603
        %v4719 = vunpack.c.l.b16 %v4665
        %v4720 = vunpack.c.l.b16 %v4490
        %v4721 = vunpack.c.l.b16 %v4610
        %v4722 = vunpack.c.l.b16 %v4666
        %v4723 = vunpack.c.l.b16 %v4491
        %v4724 = vunpack.c.l.b16 %v4617
        %v4725 = vunpack.c.l.b16 %v4667
        %v4726 = vunpack.c.l.b16 %v4492
        %v4727 = vunpack.c.l.b16 %v4624
        %v4728 = vunpack.c.l.b16 %v4668
        %v4729 = vunpack.c.l.b16 %v4493
        %v4730 = vunpack.c.l.b16 %v4631
        %v4731 = vunpack.c.l.b16 %v4669
        %v4732 = vunpack.c.l.b16 %v4494
        %v4733 = vunpack.c.l.b16 %v4638
        %v4734 = vunpack.c.l.b16 %v4670
        %v4735 = vpack.c.b16 %v4690, %v4687
        %v4736 = vpack.c.b16 %v4691, %v4688
        %v4737 = vpack.c.b16 %v4692, %v4689
        %v4738 = vpack.c.b16 %v4696, %v4693
        %v4739 = vpack.c.b16 %v4697, %v4694
        %v4740 = vpack.c.b16 %v4698, %v4695
        %v4741 = vpack.c.b16 %v4702, %v4699
        %v4742 = vpack.c.b16 %v4703, %v4700
        %v4743 = vpack.c.b16 %v4704, %v4701
        %v4744 = vpack.c.b16 %v4708, %v4705
        %v4745 = vpack.c.b16 %v4709, %v4706
        %v4746 = vpack.c.b16 %v4710, %v4707
        %v4747 = vpack.c.b16 %v4714, %v4711
        %v4748 = vpack.c.b16 %v4715, %v4712
        %v4749 = vpack.c.b16 %v4716, %v4713
        %v4750 = vpack.c.b16 %v4720, %v4717
        %v4751 = vpack.c.b16 %v4721, %v4718
        %v4752 = vpack.c.b16 %v4722, %v4719
        %v4753 = vpack.c.b16 %v4726, %v4723
        %v4754 = vpack.c.b16 %v4727, %v4724
        %v4755 = vpack.c.b16 %v4728, %v4725
        %v4756 = vpack.c.b16 %v4732, %v4729
        %v4757 = vpack.c.b16 %v4733, %v4730
        %v4758 = vpack.c.b16 %v4734, %v4731
        %v4831 = vunpack.c.l.b16 %v4430
        %v4832 = vunpack.c.l.b16 %v4431
        %v4833 = vunpack.c.l.b16 %v4432
        %v4834 = vunpack.c.l.b16 %v4433
        %v4835 = vunpack.c.l.b16 %v4434
        %v4836 = vunpack.c.l.b16 %v4435
        %v4837 = vunpack.c.l.b16 %v4436
        %v4838 = vunpack.c.l.b16 %v4437
        %v4839 = vunpack.c.l.b16 %v4438
        %v4840 = vunpack.c.l.b16 %v4439
        %v4841 = vunpack.c.l.b16 %v4440
        %v4842 = vunpack.c.l.b16 %v4441
        %v4843 = vunpack.c.l.b16 %v4442
        %v4844 = vunpack.c.l.b16 %v4443
        %v4845 = vunpack.c.l.b16 %v4444
        %v4846 = vunpack.c.l.b16 %v4445
        %v4847 = vunpack.c.l.b16 %v4446
        %v4848 = vunpack.c.l.b16 %v4447
        %v4849 = vunpack.c.l.b16 %v4448
        %v4850 = vunpack.c.l.b16 %v4449
        %v4851 = vunpack.c.l.b16 %v4450
        %v4852 = vunpack.c.l.b16 %v4451
        %v4853 = vunpack.c.l.b16 %v4452
        %v4854 = vunpack.c.l.b16 %v4453
        %v4855 = vunpack.c.l.b16 %v4454
        %v4856 = vunpack.c.l.b16 %v4455
        %v4857 = vunpack.c.l.b16 %v4456
        %v4858 = vunpack.c.l.b16 %v4457
        %v4859 = vunpack.c.l.b16 %v4458
        %v4860 = vunpack.c.l.b16 %v4459
        %v4861 = vunpack.c.l.b16 %v4460
        %v4862 = vunpack.c.l.b16 %v4461
        %v4863 = vunpack.c.l.b16 %v4462
        %v4864 = vunpack.c.l.b16 %v4463
        %v4865 = vunpack.c.l.b16 %v4464
        %v4866 = vunpack.c.l.b16 %v4465
        %v4867 = vunpack.c.l.b16 %v4466
        %v4868 = vunpack.c.l.b16 %v4467
        %v4869 = vunpack.c.l.b16 %v4468
        %v4870 = vunpack.c.l.b16 %v4469
        %v4871 = vunpack.c.l.b16 %v4470
        %v4872 = vunpack.c.l.b16 %v4471
        %v4873 = vunpack.c.l.b16 %v4472
        %v4874 = vunpack.c.l.b16 %v4473
        %v4875 = vunpack.c.l.b16 %v4474
        %v4876 = vunpack.c.l.b16 %v4475
        %v4877 = vunpack.c.l.b16 %v4476
        %v4878 = vunpack.c.l.b16 %v4477
        %v4879 = vpack.c.b16 %v4832, %v4831
        %v4880 = vpack.c.b16 %v4834, %v4833
        %v4881 = vpack.c.b16 %v4836, %v4835
        %v4882 = vpack.c.b16 %v4838, %v4837
        %v4883 = vpack.c.b16 %v4840, %v4839
        %v4884 = vpack.c.b16 %v4842, %v4841
        %v4885 = vpack.c.b16 %v4844, %v4843
        %v4886 = vpack.c.b16 %v4846, %v4845
        %v4887 = vpack.c.b16 %v4848, %v4847
        %v4888 = vpack.c.b16 %v4850, %v4849
        %v4889 = vpack.c.b16 %v4852, %v4851
        %v4890 = vpack.c.b16 %v4854, %v4853
        %v4891 = vpack.c.b16 %v4856, %v4855
        %v4892 = vpack.c.b16 %v4858, %v4857
        %v4893 = vpack.c.b16 %v4860, %v4859
        %v4894 = vpack.c.b16 %v4862, %v4861
        %v4895 = vpack.c.b16 %v4864, %v4863
        %v4896 = vpack.c.b16 %v4866, %v4865
        %v4897 = vpack.c.b16 %v4868, %v4867
        %v4898 = vpack.c.b16 %v4870, %v4869
        %v4899 = vpack.c.b16 %v4872, %v4871
        %v4900 = vpack.c.b16 %v4874, %v4873
        %v4901 = vpack.c.b16 %v4876, %v4875
        %v4902 = vpack.c.b16 %v4878, %v4877
        %4927 = vmatprep.subr.bf16.mxu0 0
        %4928 = vmatpush1.bf16.msra.mxu0 %v4879
        %4929 = vmatprep.subr.bf16.mxu0 0
        %4930 = vmatpush1.bf16.msra.mxu0 %v4880
        %4931 = vmatprep.subr.bf16.mxu0 0
        %4932 = vmatpush1.bf16.msra.mxu0 %v4881
        %4933 = vmatprep.subr.bf16.mxu0 0
        %4934 = vmatpush1.bf16.msra.mxu0 %v4882
        %4935 = vmatprep.subr.bf16.mxu0 0
        %4936 = vmatpush1.bf16.msra.mxu0 %v4883
        %4937 = vmatprep.subr.bf16.mxu0 0
        %4938 = vmatpush1.bf16.msra.mxu0 %v4884
        %4939 = vmatprep.subr.bf16.mxu0 0
        %4940 = vmatpush1.bf16.msra.mxu0 %v4885
        %4941 = vmatprep.subr.bf16.mxu0 0
        %4942 = vmatpush1.bf16.msra.mxu0 %v4886
        %4943 = vmatprep.subr.bf16.mxu0 0
        %4944 = vmatpush1.bf16.msra.mxu0 %v4887
        %4945 = vmatprep.subr.bf16.mxu0 0
        %4946 = vmatpush1.bf16.msra.mxu0 %v4888
        %4947 = vmatprep.subr.bf16.mxu0 0
        %4948 = vmatpush1.bf16.msra.mxu0 %v4889
        %4949 = vmatprep.subr.bf16.mxu0 0
        %4950 = vmatpush1.bf16.msra.mxu0 %v4890
        %4951 = vmatprep.subr.bf16.mxu0 0
        %4952 = vmatpush1.bf16.msra.mxu0 %v4891
        %4953 = vmatprep.subr.bf16.mxu0 0
        %4954 = vmatpush1.bf16.msra.mxu0 %v4892
        %4955 = vmatprep.subr.bf16.mxu0 0
        %4956 = vmatpush1.bf16.msra.mxu0 %v4893
        %4957 = vmatprep.subr.bf16.mxu0 0
        %4958 = vmatpush1.bf16.msra.mxu0 %v4894
        %4959 = vmatprep.mubr.bf16.mxu0 %v4736
        %4960 = vmatmul.mubr.bf16.gmra.mrb[0].mxu0 %v4735
        %v4961 = vpop.f32.mrb[0].mxu0
        %v4962 = vadd.f32 0.0, %v4961
        %v4963 = vpop.f32.mrb[0].mxu0
        %v4964 = vpop.f32.mrb[0].mxu0
        %v4965 = vadd.f32 0.0, %v4964
        %v4966 = vpop.f32.mrb[0].mxu0
        %4967 = vmatprep.mubr.bf16.mxu0 %v4739
        %4968 = vmatmul.mubr.bf16.gmra.mrb[0].mxu0 %v4738
        %v4969 = vpop.f32.mrb[0].mxu0
        %v4970 = vadd.f32 0.0, %v4969
        %v4971 = vpop.f32.mrb[0].mxu0
        %v4972 = vpop.f32.mrb[0].mxu0
        %v4973 = vadd.f32 0.0, %v4972
        %v4974 = vpop.f32.mrb[0].mxu0
        %4975 = vmatprep.mubr.bf16.mxu0 %v4742
        %4976 = vmatmul.mubr.bf16.gmra.mrb[0].mxu0 %v4741
        %v4977 = vpop.f32.mrb[0].mxu0
        %v4978 = vadd.f32 0.0, %v4977
        %v4979 = vpop.f32.mrb[0].mxu0
        %v4980 = vpop.f32.mrb[0].mxu0
        %v4981 = vadd.f32 0.0, %v4980
        %v4982 = vpop.f32.mrb[0].mxu0
        %4983 = vmatprep.mubr.bf16.mxu0 %v4745
        %4984 = vmatmul.mubr.bf16.gmra.mrb[0].mxu0 %v4744
        %v4985 = vpop.f32.mrb[0].mxu0
        %v4986 = vadd.f32 0.0, %v4985
        %v4987 = vpop.f32.mrb[0].mxu0
        %v4988 = vpop.f32.mrb[0].mxu0
        %v4989 = vadd.f32 0.0, %v4988
        %v4990 = vpop.f32.mrb[0].mxu0
        %4991 = vmatprep.mubr.bf16.mxu0 %v4748
        %4992 = vmatmul.mubr.bf16.gmra.mrb[0].mxu0 %v4747
        %v4993 = vpop.f32.mrb[0].mxu0
        %v4994 = vadd.f32 0.0, %v4993
        %v4995 = vpop.f32.mrb[0].mxu0
        %v4996 = vpop.f32.mrb[0].mxu0
        %v4997 = vadd.f32 0.0, %v4996
        %v4998 = vpop.f32.mrb[0].mxu0
        %4999 = vmatprep.mubr.bf16.mxu0 %v4751
        %5000 = vmatmul.mubr.bf16.gmra.mrb[0].mxu0 %v4750
        %v5001 = vpop.f32.mrb[0].mxu0
        %v5002 = vadd.f32 0.0, %v5001
        %v5003 = vpop.f32.mrb[0].mxu0
        %v5004 = vpop.f32.mrb[0].mxu0
        %v5005 = vadd.f32 0.0, %v5004
        %v5006 = vpop.f32.mrb[0].mxu0
        %5007 = vmatprep.mubr.bf16.mxu0 %v4754
        %5008 = vmatmul.mubr.bf16.gmra.mrb[0].mxu0 %v4753
        %v5009 = vpop.f32.mrb[0].mxu0
        %v5010 = vadd.f32 0.0, %v5009
        %v5011 = vpop.f32.mrb[0].mxu0
        %v5012 = vpop.f32.mrb[0].mxu0
        %v5013 = vadd.f32 0.0, %v5012
        %v5014 = vpop.f32.mrb[0].mxu0
        %5015 = vmatprep.mubr.bf16.mxu0 %v4757
        %5016 = vmatmul.mubr.bf16.gmra.mrb[0].mxu0 %v4756
        %v5017 = vpop.f32.mrb[0].mxu0
        %v5018 = vadd.f32 0.0, %v5017
        %v5019 = vpop.f32.mrb[0].mxu0
        %v5020 = vpop.f32.mrb[0].mxu0
        %v5021 = vadd.f32 0.0, %v5020
        %v5022 = vpop.f32.mrb[0].mxu0
        %5023 = vdwg.mxu0
        %5024 = vmatprep.subr.bf16.mxu0 0
        %5025 = vmatpush1.bf16.msra.mxu0 %v4895
        %5026 = vmatprep.subr.bf16.mxu0 0
        %5027 = vmatpush1.bf16.msra.mxu0 %v4896
        %5028 = vmatprep.subr.bf16.mxu0 0
        %5029 = vmatpush1.bf16.msra.mxu0 %v4897
        %5030 = vmatprep.subr.bf16.mxu0 0
        %5031 = vmatpush1.bf16.msra.mxu0 %v4898
        %5032 = vmatprep.subr.bf16.mxu0 0
        %5033 = vmatpush1.bf16.msra.mxu0 %v4899
        %5034 = vmatprep.subr.bf16.mxu0 0
        %5035 = vmatpush1.bf16.msra.mxu0 %v4900
        %5036 = vmatprep.subr.bf16.mxu0 0
        %5037 = vmatpush1.bf16.msra.mxu0 %v4901
        %5038 = vmatprep.subr.bf16.mxu0 0
        %5039 = vmatpush1.bf16.msra.mxu0 %v4902
        %5040 = vmatprep.subr.bf16.mxu0 0
        %5041 = vmatpush1.bf16.msra.mxu0 0
        %5042 = vmatprep.subr.bf16.mxu0 0
        %5043 = vmatpush1.bf16.msra.mxu0 0
        %5044 = vmatprep.subr.bf16.mxu0 0
        %5045 = vmatpush1.bf16.msra.mxu0 0
        %5046 = vmatprep.subr.bf16.mxu0 0
        %5047 = vmatpush1.bf16.msra.mxu0 0
        %5048 = vmatprep.subr.bf16.mxu0 0
        %5049 = vmatpush1.bf16.msra.mxu0 0
        %5050 = vmatprep.subr.bf16.mxu0 0
        %5051 = vmatpush1.bf16.msra.mxu0 0
        %5052 = vmatprep.subr.bf16.mxu0 0
        %5053 = vmatpush1.bf16.msra.mxu0 0
        %5054 = vmatprep.subr.bf16.mxu0 0
        %5055 = vmatpush1.bf16.msra.mxu0 0
        %5056 = vmatprep.mubr.bf16.mxu0 0
        %5057 = vmatmul.mubr.bf16.gmra.mrb[0].mxu0 %v4737
        %v5058 = vpop.f32.mrb[0].mxu0
        %v5059 = vadd.f32 %v4962, %v5058
        %v5060 = vpop.f32.mrb[0].mxu0
        %v5061 = vpop.f32.mrb[0].mxu0
        %v5062 = vadd.f32 %v4965, %v5061
        %v5063 = vpop.f32.mrb[0].mxu0
        %5064 = vmatprep.mubr.bf16.mxu0 0
        %5065 = vmatmul.mubr.bf16.gmra.mrb[0].mxu0 %v4740
        %v5066 = vpop.f32.mrb[0].mxu0
        %v5067 = vadd.f32 %v4970, %v5066
        %v5068 = vpop.f32.mrb[0].mxu0
        %v5069 = vpop.f32.mrb[0].mxu0
        %v5070 = vadd.f32 %v4973, %v5069
        %v5071 = vpop.f32.mrb[0].mxu0
        %5072 = vmatprep.mubr.bf16.mxu0 0
        %5073 = vmatmul.mubr.bf16.gmra.mrb[0].mxu0 %v4743
        %v5074 = vpop.f32.mrb[0].mxu0
        %v5075 = vadd.f32 %v4978, %v5074
        %v5076 = vpop.f32.mrb[0].mxu0
        %v5077 = vpop.f32.mrb[0].mxu0
        %v5078 = vadd.f32 %v4981, %v5077
        %v5079 = vpop.f32.mrb[0].mxu0
        %5080 = vmatprep.mubr.bf16.mxu0 0
        %5081 = vmatmul.mubr.bf16.gmra.mrb[0].mxu0 %v4746
        %v5082 = vpop.f32.mrb[0].mxu0
        %v5083 = vadd.f32 %v4986, %v5082
        %v5084 = vpop.f32.mrb[0].mxu0
        %v5085 = vpop.f32.mrb[0].mxu0
        %v5086 = vadd.f32 %v4989, %v5085
        %v5087 = vpop.f32.mrb[0].mxu0
        %5088 = vmatprep.mubr.bf16.mxu0 0
        %5089 = vmatmul.mubr.bf16.gmra.mrb[0].mxu0 %v4749
        %v5090 = vpop.f32.mrb[0].mxu0
        %v5091 = vadd.f32 %v4994, %v5090
        %v5092 = vpop.f32.mrb[0].mxu0
        %v5093 = vpop.f32.mrb[0].mxu0
        %v5094 = vadd.f32 %v4997, %v5093
        %v5095 = vpop.f32.mrb[0].mxu0
        %5096 = vmatprep.mubr.bf16.mxu0 0
        %5097 = vmatmul.mubr.bf16.gmra.mrb[0].mxu0 %v4752
        %v5098 = vpop.f32.mrb[0].mxu0
        %v5099 = vadd.f32 %v5002, %v5098
        %v5100 = vpop.f32.mrb[0].mxu0
        %v5101 = vpop.f32.mrb[0].mxu0
        %v5102 = vadd.f32 %v5005, %v5101
        %v5103 = vpop.f32.mrb[0].mxu0
        %5104 = vmatprep.mubr.bf16.mxu0 0
        %5105 = vmatmul.mubr.bf16.gmra.mrb[0].mxu0 %v4755
        %v5106 = vpop.f32.mrb[0].mxu0
        %v5107 = vadd.f32 %v5010, %v5106
        %v5108 = vpop.f32.mrb[0].mxu0
        %v5109 = vpop.f32.mrb[0].mxu0
        %v5110 = vadd.f32 %v5013, %v5109
        %v5111 = vpop.f32.mrb[0].mxu0
        %5112 = vmatprep.mubr.bf16.mxu0 0
        %5113 = vmatmul.mubr.bf16.gmra.mrb[0].mxu0 %v4758
        %v5114 = vpop.f32.mrb[0].mxu0
        %v5115 = vadd.f32 %v5018, %v5114
        %v5116 = vpop.f32.mrb[0].mxu0
        %v5117 = vpop.f32.mrb[0].mxu0
        %v5118 = vadd.f32 %v5021, %v5117
        %v5119 = vpop.f32.mrb[0].mxu0
        %5120 = vdwg.mxu0
        %v5121 = vadd.f32 %v4367, %v5059
        %v5122 = vadd.f32 %v4370, %v5062
        %v5123 = vadd.f32 %v4375, %v5067
        %v5124 = vadd.f32 %v4378, %v5070
        %v5125 = vadd.f32 %v4383, %v5075
        %v5126 = vadd.f32 %v4386, %v5078
        %v5127 = vadd.f32 %v4391, %v5083
        %v5128 = vadd.f32 %v4394, %v5086
        %v5129 = vadd.f32 %v4399, %v5091
        %v5130 = vadd.f32 %v4402, %v5094
        %v5131 = vadd.f32 %v4407, %v5099
        %v5132 = vadd.f32 %v4410, %v5102
        %v5133 = vadd.f32 %v4415, %v5107
        %v5134 = vadd.f32 %v4418, %v5110
        %v5135 = vadd.f32 %v4423, %v5115
        %v5136 = vadd.f32 %v4426, %v5118
        %v5137 = vld [vmem:[%s5] sm:$0x1]
        %v5139 = vlaneseq
        %v5140 = vshrl.u32 %v5139, 7
        %v5141 = vsub.s32 0, %v5140
        %v5142 = vrot.slane %v5137, %v5141
        %v5144 = vmul.f32 %v5121, %v5142
        %v5145 = vmul.f32 %v5122, %v5142
        %v5146 = vmul.f32 %v5123, %v5142
        %v5147 = vmul.f32 %v5124, %v5142
        %v5148 = vmul.f32 %v5125, %v5142
        %v5149 = vmul.f32 %v5126, %v5142
        %v5150 = vmul.f32 %v5127, %v5142
        %v5151 = vmul.f32 %v5128, %v5142
        %v5152 = vmul.f32 %v5129, %v5142
        %v5153 = vmul.f32 %v5130, %v5142
        %v5154 = vmul.f32 %v5131, %v5142
        %v5155 = vmul.f32 %v5132, %v5142
        %v5156 = vmul.f32 %v5133, %v5142
        %v5157 = vmul.f32 %v5134, %v5142
        %v5158 = vmul.f32 %v5135, %v5142
        %v5159 = vmul.f32 %v5136, %v5142
        %v5160 = vld [vmem:[%s6] sm:$0x1]
        %v5162 = vlaneseq
        %v5163 = vshrl.u32 %v5162, 7
        %v5164 = vsub.s32 0, %v5163
        %v5165 = vrot.slane %v5160, %v5164
        %v5167 = vadd.f32 %v5144, %v5165
        %v5168 = vadd.f32 %v5145, %v5165
        %v5169 = vadd.f32 %v5146, %v5165
        %v5170 = vadd.f32 %v5147, %v5165
        %v5171 = vadd.f32 %v5148, %v5165
        %v5172 = vadd.f32 %v5149, %v5165
        %v5173 = vadd.f32 %v5150, %v5165
        %v5174 = vadd.f32 %v5151, %v5165
        %v5175 = vadd.f32 %v5152, %v5165
        %v5176 = vadd.f32 %v5153, %v5165
        %v5177 = vadd.f32 %v5154, %v5165
        %v5178 = vadd.f32 %v5155, %v5165
        %v5179 = vadd.f32 %v5156, %v5165
        %v5180 = vadd.f32 %v5157, %v5165
        %v5181 = vadd.f32 %v5158, %v5165
        %v5182 = vadd.f32 %v5159, %v5165
        %v5183 = vld [vmem:[%s1161] sm:$0xf]
        %v5184 = vld [vmem:[%s1161 + $0x8] sm:$0xf]
        %v5185 = vld [vmem:[%s1161 + $0x10] sm:$0xf]
        %v5186 = vld [vmem:[%s1161 + $0x18] sm:$0xf]
        %v5187 = vld [vmem:[%s1161 + $0x20] sm:$0xf]
        %v5188 = vld [vmem:[%s1161 + $0x28] sm:$0xf]
        %v5189 = vld [vmem:[%s1161 + $0x30] sm:$0xf]
        %v5190 = vld [vmem:[%s1161 + $0x38] sm:$0xf]
        %v5191 = vld [vmem:[%s1161 + $0x120] sm:$0xf]
        %v5192 = vld [vmem:[%s1161 + $0x128] sm:$0xf]
        %v5193 = vld [vmem:[%s1161 + $0x130] sm:$0xf]
        %v5194 = vld [vmem:[%s1161 + $0x138] sm:$0xf]
        %v5195 = vld [vmem:[%s1161 + $0x140] sm:$0xf]
        %v5196 = vld [vmem:[%s1161 + $0x148] sm:$0xf]
        %v5197 = vld [vmem:[%s1161 + $0x150] sm:$0xf]
        %v5198 = vld [vmem:[%s1161 + $0x158] sm:$0xf]
        %v5199 = vld [vmem:[%s7] sm:$0x3]
        %v5216 = vunpack.c.l.b16 %v5183
        %v5217 = vunpack.c.l.b16 %v5184
        %v5218 = vunpack.c.l.b16 %v5185
        %v5219 = vunpack.c.l.b16 %v5186
        %v5220 = vunpack.c.l.b16 %v5187
        %v5221 = vunpack.c.l.b16 %v5188
        %v5222 = vunpack.c.l.b16 %v5189
        %v5223 = vunpack.c.l.b16 %v5190
        %v5224 = vunpack.c.l.b16 %v5191
        %v5225 = vunpack.c.l.b16 %v5192
        %v5226 = vunpack.c.l.b16 %v5193
        %v5227 = vunpack.c.l.b16 %v5194
        %v5228 = vunpack.c.l.b16 %v5195
        %v5229 = vunpack.c.l.b16 %v5196
        %v5230 = vunpack.c.l.b16 %v5197
        %v5231 = vunpack.c.l.b16 %v5198
        %v5232 = vpack.c.b16 %v5217, %v5216
        %v5233 = vpack.c.b16 %v5219, %v5218
        %v5234 = vpack.c.b16 %v5221, %v5220
        %v5235 = vpack.c.b16 %v5223, %v5222
        %v5236 = vpack.c.b16 %v5225, %v5224
        %v5237 = vpack.c.b16 %v5227, %v5226
        %v5238 = vpack.c.b16 %v5229, %v5228
        %v5239 = vpack.c.b16 %v5231, %v5230
        %v5241 = vsel %vm460, %v5232, 0
        %v5244 = vsel %vm460, %v5233, 0
        %v5247 = vsel %vm460, %v5234, 0
        %v5250 = vsel %vm460, %v5235, 0
        %v5253 = vsel %vm460, %v5236, 0
        %v5256 = vsel %vm460, %v5237, 0
        %v5259 = vsel %vm460, %v5238, 0
        %v5262 = vsel %vm460, %v5239, 0
        %v5265 = vsel %vm485, %v5199, 0
        %5267 = vmatprep.subr.bf16.mxu0 0
        %5268 = vmatpush1.bf16.msra.mxu0 %v5265
        %5269 = vmatprep.subr.bf16.mxu0 0
        %5270 = vmatpush1.bf16.msra.mxu0 0
        %5271 = vmatprep.subr.bf16.mxu0 0
        %5272 = vmatpush1.bf16.msra.mxu0 0
        %5273 = vmatprep.subr.bf16.mxu0 0
        %5274 = vmatpush1.bf16.msra.mxu0 0
        %5275 = vmatprep.subr.bf16.mxu0 0
        %5276 = vmatpush1.bf16.msra.mxu0 0
        %5277 = vmatprep.subr.bf16.mxu0 0
        %5278 = vmatpush1.bf16.msra.mxu0 0
        %5279 = vmatprep.subr.bf16.mxu0 0
        %5280 = vmatpush1.bf16.msra.mxu0 0
        %5281 = vmatprep.subr.bf16.mxu0 0
        %5282 = vmatpush1.bf16.msra.mxu0 0
        %5283 = vmatprep.subr.bf16.mxu0 0
        %5284 = vmatpush1.bf16.msra.mxu0 0
        %5285 = vmatprep.subr.bf16.mxu0 0
        %5286 = vmatpush1.bf16.msra.mxu0 0
        %5287 = vmatprep.subr.bf16.mxu0 0
        %5288 = vmatpush1.bf16.msra.mxu0 0
        %5289 = vmatprep.subr.bf16.mxu0 0
        %5290 = vmatpush1.bf16.msra.mxu0 0
        %5291 = vmatprep.subr.bf16.mxu0 0
        %5292 = vmatpush1.bf16.msra.mxu0 0
        %5293 = vmatprep.subr.bf16.mxu0 0
        %5294 = vmatpush1.bf16.msra.mxu0 0
        %5295 = vmatprep.subr.bf16.mxu0 0
        %5296 = vmatpush1.bf16.msra.mxu0 0
        %5297 = vmatprep.subr.bf16.mxu0 0
        %5298 = vmatpush1.bf16.msra.mxu0 0
        %5299 = vmatprep.mubr.bf16.mxu0 0
        %5300 = vmatmul.mubr.bf16.gmra.mrb[0].mxu0 %v5241
        %v5301 = vpop.f32.mrb[0].mxu0
        %v5302 = vadd.f32 0.0, %v5301
        %v5303 = vpop.f32.mrb[0].mxu0
        %v5304 = vpop.f32.mrb[0].mxu0
        %v5305 = vadd.f32 0.0, %v5304
        %v5306 = vpop.f32.mrb[0].mxu0
        %5307 = vmatprep.mubr.bf16.mxu0 0
        %5308 = vmatmul.mubr.bf16.gmra.mrb[0].mxu0 %v5244
        %v5309 = vpop.f32.mrb[0].mxu0
        %v5310 = vadd.f32 0.0, %v5309
        %v5311 = vpop.f32.mrb[0].mxu0
        %v5312 = vpop.f32.mrb[0].mxu0
        %v5313 = vadd.f32 0.0, %v5312
        %v5314 = vpop.f32.mrb[0].mxu0
        %5315 = vmatprep.mubr.bf16.mxu0 0
        %5316 = vmatmul.mubr.bf16.gmra.mrb[0].mxu0 %v5247
        %v5317 = vpop.f32.mrb[0].mxu0
        %v5318 = vadd.f32 0.0, %v5317
        %v5319 = vpop.f32.mrb[0].mxu0
        %v5320 = vpop.f32.mrb[0].mxu0
        %v5321 = vadd.f32 0.0, %v5320
        %v5322 = vpop.f32.mrb[0].mxu0
        %5323 = vmatprep.mubr.bf16.mxu0 0
        %5324 = vmatmul.mubr.bf16.gmra.mrb[0].mxu0 %v5250
        %v5325 = vpop.f32.mrb[0].mxu0
        %v5326 = vadd.f32 0.0, %v5325
        %v5327 = vpop.f32.mrb[0].mxu0
        %v5328 = vpop.f32.mrb[0].mxu0
        %v5329 = vadd.f32 0.0, %v5328
        %v5330 = vpop.f32.mrb[0].mxu0
        %5331 = vmatprep.mubr.bf16.mxu0 0
        %5332 = vmatmul.mubr.bf16.gmra.mrb[0].mxu0 %v5253
        %v5333 = vpop.f32.mrb[0].mxu0
        %v5334 = vadd.f32 0.0, %v5333
        %v5335 = vpop.f32.mrb[0].mxu0
        %v5336 = vpop.f32.mrb[0].mxu0
        %v5337 = vadd.f32 0.0, %v5336
        %v5338 = vpop.f32.mrb[0].mxu0
        %5339 = vmatprep.mubr.bf16.mxu0 0
        %5340 = vmatmul.mubr.bf16.gmra.mrb[0].mxu0 %v5256
        %v5341 = vpop.f32.mrb[0].mxu0
        %v5342 = vadd.f32 0.0, %v5341
        %v5343 = vpop.f32.mrb[0].mxu0
        %v5344 = vpop.f32.mrb[0].mxu0
        %v5345 = vadd.f32 0.0, %v5344
        %v5346 = vpop.f32.mrb[0].mxu0
        %5347 = vmatprep.mubr.bf16.mxu0 0
        %5348 = vmatmul.mubr.bf16.gmra.mrb[0].mxu0 %v5259
        %v5349 = vpop.f32.mrb[0].mxu0
        %v5350 = vadd.f32 0.0, %v5349
        %v5351 = vpop.f32.mrb[0].mxu0
        %v5352 = vpop.f32.mrb[0].mxu0
        %v5353 = vadd.f32 0.0, %v5352
        %v5354 = vpop.f32.mrb[0].mxu0
        %5355 = vmatprep.mubr.bf16.mxu0 0
        %5356 = vmatmul.mubr.bf16.gmra.mrb[0].mxu0 %v5262
        %v5357 = vpop.f32.mrb[0].mxu0
        %v5358 = vadd.f32 0.0, %v5357
        %v5359 = vpop.f32.mrb[0].mxu0
        %v5360 = vpop.f32.mrb[0].mxu0
        %v5361 = vadd.f32 0.0, %v5360
        %v5362 = vpop.f32.mrb[0].mxu0
        %5363 = vdwg.mxu0
        %v5364 = vld [vmem:[%s8] sm:$0x1]
        %v5366 = vlaneseq
        %v5367 = vshrl.u32 %v5366, 7
        %v5368 = vsub.s32 0, %v5367
        %v5369 = vrot.slane %v5364, %v5368
        %v5371 = vmul.f32 %v5302, %v5369
        %v5372 = vmul.f32 %v5305, %v5369
        %v5373 = vmul.f32 %v5310, %v5369
        %v5374 = vmul.f32 %v5313, %v5369
        %v5375 = vmul.f32 %v5318, %v5369
        %v5376 = vmul.f32 %v5321, %v5369
        %v5377 = vmul.f32 %v5326, %v5369
        %v5378 = vmul.f32 %v5329, %v5369
        %v5379 = vmul.f32 %v5334, %v5369
        %v5380 = vmul.f32 %v5337, %v5369
        %v5381 = vmul.f32 %v5342, %v5369
        %v5382 = vmul.f32 %v5345, %v5369
        %v5383 = vmul.f32 %v5350, %v5369
        %v5384 = vmul.f32 %v5353, %v5369
        %v5385 = vmul.f32 %v5358, %v5369
        %v5386 = vmul.f32 %v5361, %v5369
        %v5387 = vld [vmem:[%s9] sm:$0x1]
        %v5389 = vlaneseq
        %v5390 = vshrl.u32 %v5389, 7
        %v5391 = vsub.s32 0, %v5390
        %v5392 = vrot.slane %v5387, %v5391
        %v5394 = vadd.f32 %v5371, %v5392
        %v5395 = vadd.f32 %v5372, %v5392
        %v5396 = vadd.f32 %v5373, %v5392
        %v5397 = vadd.f32 %v5374, %v5392
        %v5398 = vadd.f32 %v5375, %v5392
        %v5399 = vadd.f32 %v5376, %v5392
        %v5400 = vadd.f32 %v5377, %v5392
        %v5401 = vadd.f32 %v5378, %v5392
        %v5402 = vadd.f32 %v5379, %v5392
        %v5403 = vadd.f32 %v5380, %v5392
        %v5404 = vadd.f32 %v5381, %v5392
        %v5405 = vadd.f32 %v5382, %v5392
        %v5406 = vadd.f32 %v5383, %v5392
        %v5407 = vadd.f32 %v5384, %v5392
        %v5408 = vadd.f32 %v5385, %v5392
        %v5409 = vadd.f32 %v5386, %v5392
        %v5410 = vadd.f32 %v5167, %v5394
        %v5411 = vadd.f32 %v5168, %v5395
        %v5412 = vadd.f32 %v5169, %v5396
        %v5413 = vadd.f32 %v5170, %v5397
        %v5414 = vadd.f32 %v5171, %v5398
        %v5415 = vadd.f32 %v5172, %v5399
        %v5416 = vadd.f32 %v5173, %v5400
        %v5417 = vadd.f32 %v5174, %v5401
        %v5418 = vadd.f32 %v5175, %v5402
        %v5419 = vadd.f32 %v5176, %v5403
        %v5420 = vadd.f32 %v5177, %v5404
        %v5421 = vadd.f32 %v5178, %v5405
        %v5422 = vadd.f32 %v5179, %v5406
        %v5423 = vadd.f32 %v5180, %v5407
        %v5424 = vadd.f32 %v5181, %v5408
        %v5425 = vadd.f32 %v5182, %v5409
        %v5426 = vmax.f32 %v5410, 0.0
        %v5427 = vmax.f32 %v5411, 0.0
        %v5428 = vmax.f32 %v5412, 0.0
        %v5429 = vmax.f32 %v5413, 0.0
        %v5430 = vmax.f32 %v5414, 0.0
        %v5431 = vmax.f32 %v5415, 0.0
        %v5432 = vmax.f32 %v5416, 0.0
        %v5433 = vmax.f32 %v5417, 0.0
        %v5434 = vmax.f32 %v5418, 0.0
        %v5435 = vmax.f32 %v5419, 0.0
        %v5436 = vmax.f32 %v5420, 0.0
        %v5437 = vmax.f32 %v5421, 0.0
        %v5438 = vmax.f32 %v5422, 0.0
        %v5439 = vmax.f32 %v5423, 0.0
        %v5440 = vmax.f32 %v5424, 0.0
        %v5441 = vmax.f32 %v5425, 0.0
        %v5442 = vpack.c.bf16 %v5426, %v5426
        %v5443 = vpack.c.bf16 %v5427, %v5427
        %v5444 = vpack.c.bf16 %v5428, %v5428
        %v5445 = vpack.c.bf16 %v5429, %v5429
        %v5446 = vpack.c.bf16 %v5430, %v5430
        %v5447 = vpack.c.bf16 %v5431, %v5431
        %v5448 = vpack.c.bf16 %v5432, %v5432
        %v5449 = vpack.c.bf16 %v5433, %v5433
        %v5450 = vpack.c.bf16 %v5434, %v5434
        %v5451 = vpack.c.bf16 %v5435, %v5435
        %v5452 = vpack.c.bf16 %v5436, %v5436
        %v5453 = vpack.c.bf16 %v5437, %v5437
        %v5454 = vpack.c.bf16 %v5438, %v5438
        %v5455 = vpack.c.bf16 %v5439, %v5439
        %v5456 = vpack.c.bf16 %v5440, %v5440
        %v5457 = vpack.c.bf16 %v5441, %v5441
        %5458 = vst [vmem:[%s355] sm:$0xf] %v5442
        %5459 = vst [vmem:[%s355 + $0x4] sm:$0xf] %v5443
        %5460 = vst [vmem:[%s355 + $0x8] sm:$0xf] %v5444
        %5461 = vst [vmem:[%s355 + $0xc] sm:$0xf] %v5445
        %5462 = vst [vmem:[%s355 + $0x10] sm:$0xf] %v5446
        %5463 = vst [vmem:[%s355 + $0x14] sm:$0xf] %v5447
        %5464 = vst [vmem:[%s355 + $0x18] sm:$0xf] %v5448
        %5465 = vst [vmem:[%s355 + $0x1c] sm:$0xf] %v5449
        %5466 = vst [vmem:[%s355 + $0x20] sm:$0xf] %v5450
        %5467 = vst [vmem:[%s355 + $0x24] sm:$0xf] %v5451
        %5468 = vst [vmem:[%s355 + $0x28] sm:$0xf] %v5452
        %5469 = vst [vmem:[%s355 + $0x2c] sm:$0xf] %v5453
        %5470 = vst [vmem:[%s355 + $0x30] sm:$0xf] %v5454
        %5471 = vst [vmem:[%s355 + $0x34] sm:$0xf] %v5455
        %5472 = vst [vmem:[%s355 + $0x38] sm:$0xf] %v5456
        %5473 = vst [vmem:[%s355 + $0x3c] sm:$0xf] %v5457
        %s5474 = sand.u32 %s247, 1
        %s5475 = scalar_lea.sflag [#allocation4], %s5474
        %s5476 = sand.u32 %s247, 1
        %s5477 = smul.addr %s5476, 64
        %s5478 = scalar_lea.vmem [#allocation3], %s5477
        // Predicated region
        $region61: #{tpu_custom_call.1} parent=59 // pred_check
          %p5479 = pneg %p257
        $region62: #{tpu_custom_call.1} parent=59 // pred_check_branch
          %5481 = sbr.rel (%p5479) target = $region64
        $region63: #{tpu_custom_call.1} parent=59 // pred_region
          %s5482 = smul.u32 2, %s24
          %s5484 = ssub.s32 1024, 1024
          %5485 = vsyncadd %s5475, %s5484
          %s5486 = smul.addr %s5482, 8
          %s5487 = smul.addr %s5486, 64
          %s5488 = scalar_lea.hbm %s10, %s5487
          %s5489 = sshll.u32 %s5478, 4
          %s5490 = int_to_ptr.vmem [resolvable:$true] %s5489
          %5495 = dma.vmem_to_hbm [thread:$0]  %s5490, 1024, %s5488, %s5475, 64, 64, 4
        $region64: #{tpu_custom_call.1} parent=59 // pred_fallthru
          _
      $region60: #{tpu_custom_call.1} parent=5 // pred_fallthru
        _
      %p5496 = scmp.le.s32.totalorder 2, %s19
      // Predicated region
      $region65: #{tpu_custom_call.1} parent=5 // pred_check
        %p5497 = pneg %p5496
      $region66: #{tpu_custom_call.1} parent=5 // pred_check_branch
        %5499 = sbr.rel (%p5497) target = $region68
      $region67: #{tpu_custom_call.1} parent=5 // pred_region
        %s5500 = ssub.s32 %s19, 2
        // Predicated region
        $region69: #{tpu_custom_call.1} parent=67 // pred_check
          %p5501 = pneg %p263
        $region70: #{tpu_custom_call.1} parent=67 // pred_check_branch
          %5503 = sbr.rel (%p5501) target = $region72
        $region71: #{tpu_custom_call.1} parent=67 // pred_region
          %s5504 = sand.u32 %s248, 1
          %s5505 = scalar_lea.sflag [#allocation4], %s5504
          %s5506 = sand.u32 %s248, 1
          %s5507 = smul.addr %s5506, 64
          %s5508 = scalar_lea.vmem [#allocation3], %s5507
          %5509 = dma.done %s5505, 1024
        $region72: #{tpu_custom_call.1} parent=67 // pred_fallthru
          _
      $region68: #{tpu_custom_call.1} parent=5 // pred_fallthru
        _
    $region6: #{tpu_custom_call.1} parent=1 // loop_footer
      %s23 = sadd.s32 1, %s19
    $region7: #{tpu_custom_call.1} parent=1 // loop_footer_branch
      %18 = sbr.rel target = $region3
    $region8: #{tpu_custom_call.1} parent=1 // loop_exit
      _
    %5510 = vsyncpa [#allocation4], 1
    %s5511 = scalar_lea.sflag [#allocation4], 1
    %5512 = vsyncpa %s5511, 1

</llo_original>
